<compile_context>
chip_gen: v7x
topology: tpu7x:2x2x1
jax: 0.10.0
libtpu: 0.0.40
codegen_flags: <defaults>
</compile_context>

<pallas_src>
import jax
import jax.numpy as jnp
from jax.experimental import pallas as pl
from jax.experimental.pallas import tpu as pltpu

CIN = 40        # conv1 in_channels (mel features)
CINP = 128      # lane-padded conv input channels
CCONV = 64      # conv1 out_channels
T = 16          # time steps into the model
TP = T // 2     # time steps after MaxPool1d(2)
H = 128         # LSTM hidden size
NCLS = 10       # classifier outputs
LANE = 128      # lane-padded FC output width

BB = 8          # sequences per grid step (fills the f32 sublane tile)
NB = 2          # grid steps over batch ("parallel" -> second TC on v7x)
B = NB * BB     # total sequences per call


def cnn_bilstm_kernel(x_ref, wcat_ref, bconv_ref, wihf_ref, wihb_ref, whh_ref,
                      bfw_ref, bbw_ref, wfc_ref, bfc_ref, o_ref, xg_sc):
    f32 = jnp.float32
    bf16 = jnp.bfloat16

    # x: time-major rows (row = t*BB + b), lanes 0..CIN-1 valid, rest zero-padded.
    x = x_ref[0]                                           # (T*BB, CINP) f32

    # ---- Conv1d(k=3, padding=1) as ONE lane-aligned im2col matmul ----------
    # Time shift by one frame == shift by BB (=8) rows: sublane-tile-aligned concat
    # with a zero block; no masks needed (batch lives in the minor row index).
    zblk = jnp.zeros((BB, CINP), f32)
    x_prev = jnp.concatenate([zblk, x[:-BB]], axis=0)      # frame t -> x[t-1] (t=0 -> 0)
    x_next = jnp.concatenate([x[BB:], zblk], axis=0)       # frame t -> x[t+1] (t=T-1 -> 0)
    col = jnp.concatenate([x_prev, x, x_next], axis=1)     # (T*BB, 3*CINP), 128-lane aligned
    y = jnp.dot(col.astype(bf16), wcat_ref[...],
                preferred_element_type=f32) + bconv_ref[...]
    y = jnp.maximum(y, 0.0)                                # ReLU, (T*BB, CCONV) f32

    # ---- MaxPool1d(2) over time: aligned slice pair + elementwise max ------
    y4 = y.reshape(TP, 2 * BB, CCONV)                      # layout-preserving (16-row groups)
    pooled = jnp.maximum(y4[:, :BB, :], y4[:, BB:, :]).reshape(TP * BB, CCONV)

    # ---- forward-direction input projection, staged once in VMEM scratch ---
    xg_sc[...] = (jnp.dot(pooled.astype(bf16), wihf_ref[...],
                          preferred_element_type=f32) + bfw_ref[...])   # (TP*BB, 4H)

    # ---- backward-direction projection: ONLY the last pooled frame ---------
    last = pooled[(TP - 1) * BB:, :].astype(bf16)          # (BB, CCONV), aligned slice
    gb = jnp.dot(last, wihb_ref[...], preferred_element_type=f32) + bbw_ref[...]

    # gate layout after wrapper repack: [i, f, o | g] per direction
    def gates(g):                                          # g: (BB, 4H) f32
        s = jax.nn.sigmoid(g[:, 0:3 * H])                  # single EUP slab for i,f,o
        return s[:, 0:H], s[:, H:2 * H], s[:, 2 * H:3 * H], jnp.tanh(g[:, 3 * H:])

    # ---- forward LSTM: full recurrence, batch on sublanes, unrolled (TP=8) -
    h = jnp.zeros((BB, H), f32)
    c = jnp.zeros((BB, H), f32)
    for t in range(TP):
        g = xg_sc[t * BB:(t + 1) * BB, :] + jnp.dot(
            h.astype(bf16), whh_ref[...], preferred_element_type=f32)
        i, f, o, gg = gates(g)
        c = f * c + i * gg
        h = o * jnp.tanh(c)
    h_fwd = h                                              # (BB, H)

    # ---- backward LSTM: exact single step from the zero state --------------
    ib, _, ob, ggb = gates(gb)                             # f*c0 == 0, h0 @ W_hh == 0
    h_bwd = ob * jnp.tanh(ib * ggb)                        # (BB, H)

    # ---- final Linear(2H -> NCLS), lane-padded to 128, single full store ---
    feat = jnp.concatenate([h_fwd, h_bwd], axis=1).astype(bf16)   # (BB, 2H)
    o_ref[...] = (jnp.dot(feat, wfc_ref[...], preferred_element_type=f32)
                  + bfc_ref[...])                          # (BB, 128)


def prepare_params(params):
    """Host-side repack of PyTorch-layout parameters into kernel layout (bf16 weights)."""
    conv_w, conv_b, w_ih, w_hh, b_ih, b_hh, fc_w, fc_b = params
    f32, bf16 = jnp.float32, jnp.bfloat16
    # conv taps (CCONV, CIN, 3) -> (3*CINP, CCONV); each tap's rows lane-padded to 128
    wcat = jnp.zeros((3 * CINP, CCONV), f32)
    for k in range(3):
        wcat = wcat.at[k * CINP:k * CINP + CIN, :].set(conv_w[:, :, k].T.astype(f32))
    bconv = conv_b.reshape(1, CCONV).astype(f32)
    # LSTM gate repack: PyTorch [i, f, g, o] -> [i, f, o, g] (sigmoid gates contiguous)
    perm = jnp.concatenate([jnp.arange(0, 2 * H),
                            jnp.arange(3 * H, 4 * H),
                            jnp.arange(2 * H, 3 * H)])

    def repack_dir(d):
        wih = w_ih[d].T[:, perm].astype(bf16)              # (CCONV, 4H)
        b = (b_ih[d] + b_hh[d])[perm].reshape(1, 4 * H).astype(f32)
        return wih, b

    wih_f, b_f = repack_dir(0)
    wih_b, b_b = repack_dir(1)
    whh_f = w_hh[0].T[:, perm].astype(bf16)                # (H, 4H) fwd only
    # FC weight/bias transposed and zero-padded to 128 output lanes
    wfc = jnp.zeros((2 * H, LANE), f32).at[:, :NCLS].set(fc_w.T.astype(f32)).astype(bf16)
    bfc = jnp.zeros((1, LANE), f32).at[:, :NCLS].set(fc_b.astype(f32))
    return wcat.astype(bf16), bconv, wih_f, wih_b, whh_f, b_f, b_b, wfc, bfc


def cnn_bilstm_pallas(x, params):
    wcat, bconv, wih_f, wih_b, whh_f, b_f, b_b, wfc, bfc = prepare_params(params)
    # (B, T, CIN) -> (NB, BB, T, CIN) -> (NB, T, BB, CIN) -> (NB, T*BB, CINP) time-major
    x3 = (x.astype(jnp.float32)
           .reshape(NB, BB, T, CIN)
           .transpose(0, 2, 1, 3)
           .reshape(NB, T * BB, CIN))
    x3 = jnp.pad(x3, ((0, 0), (0, 0), (0, CINP - CIN)))
    out = pl.pallas_call(
        cnn_bilstm_kernel,
        out_shape=jax.ShapeDtypeStruct((B, LANE), jnp.float32),
        grid_spec=pltpu.PrefetchScalarGridSpec(
            num_scalar_prefetch=0,
            grid=(NB,),                                               # batch blocks
            in_specs=[
                pl.BlockSpec((1, T * BB, CINP), lambda g: (g, 0, 0)),  # x, time-major, lane-padded
                pl.BlockSpec((3 * CINP, CCONV), lambda g: (0, 0)),     # fused conv taps (padded K)
                pl.BlockSpec((1, CCONV), lambda g: (0, 0)),            # conv bias
                pl.BlockSpec((CCONV, 4 * H), lambda g: (0, 0)),        # W_ih forward, repacked
                pl.BlockSpec((CCONV, 4 * H), lambda g: (0, 0)),        # W_ih backward, repacked
                pl.BlockSpec((H, 4 * H), lambda g: (0, 0)),            # W_hh forward, repacked
                pl.BlockSpec((1, 4 * H), lambda g: (0, 0)),            # combined fwd biases
                pl.BlockSpec((1, 4 * H), lambda g: (0, 0)),            # combined bwd biases
                pl.BlockSpec((2 * H, LANE), lambda g: (0, 0)),         # fc weight^T, lane-padded
                pl.BlockSpec((1, LANE), lambda g: (0, 0)),             # fc bias, lane-padded
            ],
            out_specs=pl.BlockSpec((BB, LANE), lambda g: (g, 0)),
            scratch_shapes=[pltpu.VMEM((TP * BB, 4 * H), jnp.float32)],  # staged fwd gate inputs
        ),
        compiler_params=pltpu.CompilerParams(
            dimension_semantics=("parallel",)),
    )(x3, wcat, bconv, wih_f, wih_b, whh_f, b_f, b_b, wfc, bfc)
    return out[:, :NCLS]


def reference(x, params):
    """Pure-JAX f32 reference with PyTorch layouts, gate order and a full BiLSTM."""
    conv_w, conv_b, w_ih, w_hh, b_ih, b_hh, fc_w, fc_b = params
    xp = jnp.pad(x, ((0, 0), (1, 1), (0, 0)))              # (B, T+2, CIN)
    y = sum(jnp.einsum('btc,oc->bto', xp[:, k:k + T], conv_w[:, :, k])
            for k in range(3)) + conv_b
    y = jnp.maximum(y, 0.0)
    pooled = jnp.max(y.reshape(B, TP, 2, CCONV), axis=2)   # (B, TP, CCONV)

    def run_dir(seq, d):
        def step(carry, xt):
            h, c = carry
            g = xt @ w_ih[d].T + h @ w_hh[d].T + b_ih[d] + b_hh[d]
            i = jax.nn.sigmoid(g[:, 0:H])
            f = jax.nn.sigmoid(g[:, H:2 * H])
            gg = jnp.tanh(g[:, 2 * H:3 * H])
            o = jax.nn.sigmoid(g[:, 3 * H:4 * H])
            c = f * c + i * gg
            h = o * jnp.tanh(c)
            return (h, c), h
        h0 = jnp.zeros((B, H), jnp.float32)
        c0 = jnp.zeros((B, H), jnp.float32)
        _, hs = jax.lax.scan(step, (h0, c0), jnp.swapaxes(seq, 0, 1))
        return jnp.swapaxes(hs, 0, 1)                      # (B, TP, H)

    h_f = run_dir(pooled, 0)
    h_b = run_dir(pooled[:, ::-1], 1)[:, ::-1]
    lstm_out = jnp.concatenate([h_f, h_b], axis=-1)        # (B, TP, 2H)
    return lstm_out[:, -1, :] @ fc_w.T + fc_b


if __name__ == "__main__":
    key = jax.random.PRNGKey(0)
    ks = jax.random.split(key, 9)
    # Deterministic synthetic parameters in native PyTorch layouts.
    params = (
        0.1 * jax.random.normal(ks[0], (CCONV, CIN, 3), jnp.float32),    # conv1.weight
        0.1 * jax.random.normal(ks[1], (CCONV,), jnp.float32),           # conv1.bias
        0.1 * jax.random.normal(ks[2], (2, 4 * H, CCONV), jnp.float32),  # lstm W_ih (fwd, bwd)
        0.1 * jax.random.normal(ks[3], (2, 4 * H, H), jnp.float32),      # lstm W_hh (fwd, bwd)
        0.1 * jax.random.normal(ks[4], (2, 4 * H), jnp.float32),         # lstm b_ih
        0.1 * jax.random.normal(ks[5], (2, 4 * H), jnp.float32),         # lstm b_hh
        0.1 * jax.random.normal(ks[6], (NCLS, 2 * H), jnp.float32),      # fc.weight
        0.1 * jax.random.normal(ks[7], (NCLS,), jnp.float32),            # fc.bias
    )
    x = jax.random.normal(ks[8], (B, T, CIN), jnp.float32)

    out = jax.block_until_ready(cnn_bilstm_pallas(x, params))
    ref = jax.block_until_ready(reference(x, params))
    assert out.shape == (B, NCLS)
    # Tolerance covers bf16 MXU operands in the kernel vs the f32 reference.
    max_err = float(jnp.max(jnp.abs(out - ref)))
    if max_err > 5e-2:
        raise AssertionError(f"Pallas kernel mismatch vs reference, max abs err = {max_err}")
    print("KERNEL_OK")
</pallas_src>

<mosaic_0001>
module attributes {stable_mosaic.version = 11 : i64} {
  func.func @cnn_bilstm_kernel(%arg0: i32, %arg1: memref<1x128x128xf32, #tpu.memory_space<vmem>>, %arg2: memref<384x64xbf16, #tpu.memory_space<vmem>>, %arg3: memref<1x64xf32, #tpu.memory_space<vmem>>, %arg4: memref<64x512xbf16, #tpu.memory_space<vmem>>, %arg5: memref<64x512xbf16, #tpu.memory_space<vmem>>, %arg6: memref<128x512xbf16, #tpu.memory_space<vmem>>, %arg7: memref<1x512xf32, #tpu.memory_space<vmem>>, %arg8: memref<1x512xf32, #tpu.memory_space<vmem>>, %arg9: memref<256x128xbf16, #tpu.memory_space<vmem>>, %arg10: memref<1x128xf32, #tpu.memory_space<vmem>>, %arg11: memref<8x128xf32, #tpu.memory_space<vmem>>, %arg12: memref<64x512xf32, #tpu.memory_space<vmem>>) attributes {dimension_semantics = [#tpu.dimension_semantics<parallel>], iteration_bounds = array<i64: 2>, scalar_prefetch = 0 : i64, scratch_operands = 1 : i64, tpu.core_type = #tpu.core_type<tc>, window_params = [{transform_indices = @transform_0, window_bounds = array<i64: 1, 128, 128>}, {pipeline_mode = #tpu.pipeline_mode<synchronous>, transform_indices = @transform_1, window_bounds = array<i64: 384, 64>}, {pipeline_mode = #tpu.pipeline_mode<synchronous>, transform_indices = @transform_2, window_bounds = array<i64: 1, 64>}, {pipeline_mode = #tpu.pipeline_mode<synchronous>, transform_indices = @transform_3, window_bounds = array<i64: 64, 512>}, {pipeline_mode = #tpu.pipeline_mode<synchronous>, transform_indices = @transform_4, window_bounds = array<i64: 64, 512>}, {pipeline_mode = #tpu.pipeline_mode<synchronous>, transform_indices = @transform_5, window_bounds = array<i64: 128, 512>}, {pipeline_mode = #tpu.pipeline_mode<synchronous>, transform_indices = @transform_6, window_bounds = array<i64: 1, 512>}, {pipeline_mode = #tpu.pipeline_mode<synchronous>, transform_indices = @transform_7, window_bounds = array<i64: 1, 512>}, {pipeline_mode = #tpu.pipeline_mode<synchronous>, transform_indices = @transform_8, window_bounds = array<i64: 256, 128>}, {pipeline_mode = #tpu.pipeline_mode<synchronous>, transform_indices = @transform_9, window_bounds = array<i64: 1, 128>}, {transform_indices = @transform_10, window_bounds = array<i64: 8, 128>}]} {
    %c0 = arith.constant 0 : index
    %c0_0 = arith.constant 0 : index
    %c0_1 = arith.constant 0 : index
    %0 = vector.load %arg1[%c0, %c0_0, %c0_1] : memref<1x128x128xf32, #tpu.memory_space<vmem>>, vector<1x128x128xf32>
    %1 = vector.shape_cast %0 : vector<1x128x128xf32> to vector<128x128xf32>
    %cst = arith.constant 0.000000e+00 : f32
    %2 = vector.broadcast %cst : f32 to vector<8x128xf32>
    %3 = vector.extract_strided_slice %1 {offsets = [0, 0], sizes = [120, 128], strides = [1, 1]} : vector<128x128xf32> to vector<120x128xf32>
    %4 = tpu.concatenate %2, %3 in 0 : vector<8x128xf32>, vector<120x128xf32> -> vector<128x128xf32>
    %5 = vector.extract_strided_slice %1 {offsets = [8, 0], sizes = [120, 128], strides = [1, 1]} : vector<128x128xf32> to vector<120x128xf32>
    %6 = tpu.concatenate %5, %2 in 0 : vector<120x128xf32>, vector<8x128xf32> -> vector<128x128xf32>
    %7 = tpu.concatenate %4, %1, %6 in 1 : vector<128x128xf32>, vector<128x128xf32>, vector<128x128xf32> -> vector<128x384xf32>
    %8 = arith.truncf %7 : vector<128x384xf32> to vector<128x384xbf16>
    %c0_2 = arith.constant 0 : index
    %c0_3 = arith.constant 0 : index
    %9 = vector.load %arg2[%c0_2, %c0_3] : memref<384x64xbf16, #tpu.memory_space<vmem>>, vector<384x64xbf16>
    %cst_4 = arith.constant dense<0.000000e+00> : vector<128x64xf32>
    %10 = tpu.matmul %8, %9, %cst_4 {dimension_numbers = #tpu.dot_dimension_numbers<[1], [0], [0], [1], [0, 0, 1, 1], [], []>} : vector<128x384xbf16>, vector<384x64xbf16>, vector<128x64xf32> -> vector<128x64xf32>
    %c0_5 = arith.constant 0 : index
    %c0_6 = arith.constant 0 : index
    %11 = vector.load %arg3[%c0_5, %c0_6] : memref<1x64xf32, #tpu.memory_space<vmem>>, vector<1x64xf32>
    %12 = vector.broadcast %11 : vector<1x64xf32> to vector<128x64xf32>
    %13 = arith.addf %10, %12 : vector<128x64xf32>
    %cst_7 = arith.constant 0.000000e+00 : f32
    %14 = vector.broadcast %cst_7 : f32 to vector<128x64xf32>
    %15 = arith.maximumf %13, %14 : vector<128x64xf32>
    %16 = vector.shape_cast %15 : vector<128x64xf32> to vector<8x16x64xf32>
    %17 = vector.extract_strided_slice %16 {offsets = [0, 0, 0], sizes = [8, 8, 64], strides = [1, 1, 1]} : vector<8x16x64xf32> to vector<8x8x64xf32>
    %18 = vector.extract_strided_slice %16 {offsets = [0, 8, 0], sizes = [8, 8, 64], strides = [1, 1, 1]} : vector<8x16x64xf32> to vector<8x8x64xf32>
    %19 = arith.maximumf %17, %18 : vector<8x8x64xf32>
    %20 = vector.shape_cast %19 : vector<8x8x64xf32> to vector<64x64xf32>
    %21 = arith.truncf %20 : vector<64x64xf32> to vector<64x64xbf16>
    %c0_8 = arith.constant 0 : index
    %c0_9 = arith.constant 0 : index
    %22 = vector.load %arg4[%c0_8, %c0_9] : memref<64x512xbf16, #tpu.memory_space<vmem>>, vector<64x512xbf16>
    %cst_10 = arith.constant dense<0.000000e+00> : vector<64x512xf32>
    %23 = tpu.matmul %21, %22, %cst_10 {dimension_numbers = #tpu.dot_dimension_numbers<[1], [0], [0], [1], [0, 0, 1, 1], [], []>} : vector<64x64xbf16>, vector<64x512xbf16>, vector<64x512xf32> -> vector<64x512xf32>
    %c0_11 = arith.constant 0 : index
    %c0_12 = arith.constant 0 : index
    %24 = vector.load %arg7[%c0_11, %c0_12] : memref<1x512xf32, #tpu.memory_space<vmem>>, vector<1x512xf32>
    %25 = vector.broadcast %24 : vector<1x512xf32> to vector<64x512xf32>
    %26 = arith.addf %23, %25 : vector<64x512xf32>
    %c0_13 = arith.constant 0 : index
    %c0_14 = arith.constant 0 : index
    %27 = vector.load %arg12[%c0_13, %c0_14] : memref<64x512xf32, #tpu.memory_space<vmem>>, vector<64x512xf32>
    tpu.vector_store %arg12[%c0_13, %c0_14], %26 {strides = array<i32>} : memref<64x512xf32, #tpu.memory_space<vmem>>, vector<64x512xf32>,
    %28 = vector.extract_strided_slice %20 {offsets = [56, 0], sizes = [8, 64], strides = [1, 1]} : vector<64x64xf32> to vector<8x64xf32>
    %29 = arith.truncf %28 : vector<8x64xf32> to vector<8x64xbf16>
    %c0_15 = arith.constant 0 : index
    %c0_16 = arith.constant 0 : index
    %30 = vector.load %arg5[%c0_15, %c0_16] : memref<64x512xbf16, #tpu.memory_space<vmem>>, vector<64x512xbf16>
    %cst_17 = arith.constant dense<0.000000e+00> : vector<8x512xf32>
    %31 = tpu.matmul %29, %30, %cst_17 {dimension_numbers = #tpu.dot_dimension_numbers<[1], [0], [0], [1], [0, 0, 1, 1], [], []>} : vector<8x64xbf16>, vector<64x512xbf16>, vector<8x512xf32> -> vector<8x512xf32>
    %c0_18 = arith.constant 0 : index
    %c0_19 = arith.constant 0 : index
    %32 = vector.load %arg8[%c0_18, %c0_19] : memref<1x512xf32, #tpu.memory_space<vmem>>, vector<1x512xf32>
    %33 = vector.broadcast %32 : vector<1x512xf32> to vector<8x512xf32>
    %34 = arith.addf %31, %33 : vector<8x512xf32>
    %cst_20 = arith.constant 0.000000e+00 : f32
    %35 = vector.broadcast %cst_20 : f32 to vector<8x128xf32>
    %cst_21 = arith.constant 0.000000e+00 : f32
    %36 = vector.broadcast %cst_21 : f32 to vector<8x128xf32>
    %c0_22 = arith.constant 0 : index
    %c0_23 = arith.constant 0 : index
    %37 = vector.load %arg12[%c0_22, %c0_23] : memref<64x512xf32, #tpu.memory_space<vmem>>, vector<8x512xf32>
    %38 = arith.truncf %35 : vector<8x128xf32> to vector<8x128xbf16>
    %c0_24 = arith.constant 0 : index
    %c0_25 = arith.constant 0 : index
    %39 = vector.load %arg6[%c0_24, %c0_25] : memref<128x512xbf16, #tpu.memory_space<vmem>>, vector<128x512xbf16>
    %cst_26 = arith.constant dense<0.000000e+00> : vector<8x512xf32>
    %40 = tpu.matmul %38, %39, %cst_26 {dimension_numbers = #tpu.dot_dimension_numbers<[1], [0], [0], [1], [0, 0, 1, 1], [], []>} : vector<8x128xbf16>, vector<128x512xbf16>, vector<8x512xf32> -> vector<8x512xf32>
    %41 = arith.addf %37, %40 : vector<8x512xf32>
    %42 = vector.extract_strided_slice %41 {offsets = [0, 0], sizes = [8, 384], strides = [1, 1]} : vector<8x512xf32> to vector<8x384xf32>
    %43 = arith.negf %42 : vector<8x384xf32>
    %44 = math.exp %43 : vector<8x384xf32>
    %cst_27 = arith.constant 1.000000e+00 : f32
    %45 = vector.broadcast %cst_27 : f32 to vector<8x384xf32>
    %46 = arith.addf %45, %44 : vector<8x384xf32>
    %47 = arith.divf %45, %46 : vector<8x384xf32>
    %48 = vector.extract_strided_slice %47 {offsets = [0, 0], sizes = [8, 128], strides = [1, 1]} : vector<8x384xf32> to vector<8x128xf32>
    %49 = vector.extract_strided_slice %47 {offsets = [0, 128], sizes = [8, 128], strides = [1, 1]} : vector<8x384xf32> to vector<8x128xf32>
    %50 = vector.extract_strided_slice %47 {offsets = [0, 256], sizes = [8, 128], strides = [1, 1]} : vector<8x384xf32> to vector<8x128xf32>
    %51 = vector.extract_strided_slice %41 {offsets = [0, 384], sizes = [8, 128], strides = [1, 1]} : vector<8x512xf32> to vector<8x128xf32>
    %52 = math.tanh %51 : vector<8x128xf32>
    %53 = arith.mulf %49, %36 : vector<8x128xf32>
    %54 = arith.mulf %48, %52 : vector<8x128xf32>
    %55 = arith.addf %53, %54 : vector<8x128xf32>
    %56 = math.tanh %55 : vector<8x128xf32>
    %57 = arith.mulf %50, %56 : vector<8x128xf32>
    %c8 = arith.constant 8 : index
    %c0_28 = arith.constant 0 : index
    %58 = vector.load %arg12[%c8, %c0_28] : memref<64x512xf32, #tpu.memory_space<vmem>>, vector<8x512xf32>
    %59 = arith.truncf %57 : vector<8x128xf32> to vector<8x128xbf16>
    %c0_29 = arith.constant 0 : index
    %c0_30 = arith.constant 0 : index
    %60 = vector.load %arg6[%c0_29, %c0_30] : memref<128x512xbf16, #tpu.memory_space<vmem>>, vector<128x512xbf16>
    %cst_31 = arith.constant dense<0.000000e+00> : vector<8x512xf32>
    %61 = tpu.matmul %59, %60, %cst_31 {dimension_numbers = #tpu.dot_dimension_numbers<[1], [0], [0], [1], [0, 0, 1, 1], [], []>} : vector<8x128xbf16>, vector<128x512xbf16>, vector<8x512xf32> -> vector<8x512xf32>
    %62 = arith.addf %58, %61 : vector<8x512xf32>
    %63 = vector.extract_strided_slice %62 {offsets = [0, 0], sizes = [8, 384], strides = [1, 1]} : vector<8x512xf32> to vector<8x384xf32>
    %64 = arith.negf %63 : vector<8x384xf32>
    %65 = math.exp %64 : vector<8x384xf32>
    %cst_32 = arith.constant 1.000000e+00 : f32
    %66 = vector.broadcast %cst_32 : f32 to vector<8x384xf32>
    %67 = arith.addf %66, %65 : vector<8x384xf32>
    %68 = arith.divf %66, %67 : vector<8x384xf32>
    %69 = vector.extract_strided_slice %68 {offsets = [0, 0], sizes = [8, 128], strides = [1, 1]} : vector<8x384xf32> to vector<8x128xf32>
    %70 = vector.extract_strided_slice %68 {offsets = [0, 128], sizes = [8, 128], strides = [1, 1]} : vector<8x384xf32> to vector<8x128xf32>
    %71 = vector.extract_strided_slice %68 {offsets = [0, 256], sizes = [8, 128], strides = [1, 1]} : vector<8x384xf32> to vector<8x128xf32>
    %72 = vector.extract_strided_slice %62 {offsets = [0, 384], sizes = [8, 128], strides = [1, 1]} : vector<8x512xf32> to vector<8x128xf32>
    %73 = math.tanh %72 : vector<8x128xf32>
    %74 = arith.mulf %70, %55 : vector<8x128xf32>
    %75 = arith.mulf %69, %73 : vector<8x128xf32>
    %76 = arith.addf %74, %75 : vector<8x128xf32>
    %77 = math.tanh %76 : vector<8x128xf32>
    %78 = arith.mulf %71, %77 : vector<8x128xf32>
    %c16 = arith.constant 16 : index
    %c0_33 = arith.constant 0 : index
    %79 = vector.load %arg12[%c16, %c0_33] : memref<64x512xf32, #tpu.memory_space<vmem>>, vector<8x512xf32>
    %80 = arith.truncf %78 : vector<8x128xf32> to vector<8x128xbf16>
    %c0_34 = arith.constant 0 : index
    %c0_35 = arith.constant 0 : index
    %81 = vector.load %arg6[%c0_34, %c0_35] : memref<128x512xbf16, #tpu.memory_space<vmem>>, vector<128x512xbf16>
    %cst_36 = arith.constant dense<0.000000e+00> : vector<8x512xf32>
    %82 = tpu.matmul %80, %81, %cst_36 {dimension_numbers = #tpu.dot_dimension_numbers<[1], [0], [0], [1], [0, 0, 1, 1], [], []>} : vector<8x128xbf16>, vector<128x512xbf16>, vector<8x512xf32> -> vector<8x512xf32>
    %83 = arith.addf %79, %82 : vector<8x512xf32>
    %84 = vector.extract_strided_slice %83 {offsets = [0, 0], sizes = [8, 384], strides = [1, 1]} : vector<8x512xf32> to vector<8x384xf32>
    %85 = arith.negf %84 : vector<8x384xf32>
    %86 = math.exp %85 : vector<8x384xf32>
    %cst_37 = arith.constant 1.000000e+00 : f32
    %87 = vector.broadcast %cst_37 : f32 to vector<8x384xf32>
    %88 = arith.addf %87, %86 : vector<8x384xf32>
    %89 = arith.divf %87, %88 : vector<8x384xf32>
    %90 = vector.extract_strided_slice %89 {offsets = [0, 0], sizes = [8, 128], strides = [1, 1]} : vector<8x384xf32> to vector<8x128xf32>
    %91 = vector.extract_strided_slice %89 {offsets = [0, 128], sizes = [8, 128], strides = [1, 1]} : vector<8x384xf32> to vector<8x128xf32>
    %92 = vector.extract_strided_slice %89 {offsets = [0, 256], sizes = [8, 128], strides = [1, 1]} : vector<8x384xf32> to vector<8x128xf32>
    %93 = vector.extract_strided_slice %83 {offsets = [0, 384], sizes = [8, 128], strides = [1, 1]} : vector<8x512xf32> to vector<8x128xf32>
    %94 = math.tanh %93 : vector<8x128xf32>
    %95 = arith.mulf %91, %76 : vector<8x128xf32>
    %96 = arith.mulf %90, %94 : vector<8x128xf32>
    %97 = arith.addf %95, %96 : vector<8x128xf32>
    %98 = math.tanh %97 : vector<8x128xf32>
    %99 = arith.mulf %92, %98 : vector<8x128xf32>
    %c24 = arith.constant 24 : index
    %c0_38 = arith.constant 0 : index
    %100 = vector.load %arg12[%c24, %c0_38] : memref<64x512xf32, #tpu.memory_space<vmem>>, vector<8x512xf32>
    %101 = arith.truncf %99 : vector<8x128xf32> to vector<8x128xbf16>
    %c0_39 = arith.constant 0 : index
    %c0_40 = arith.constant 0 : index
    %102 = vector.load %arg6[%c0_39, %c0_40] : memref<128x512xbf16, #tpu.memory_space<vmem>>, vector<128x512xbf16>
    %cst_41 = arith.constant dense<0.000000e+00> : vector<8x512xf32>
    %103 = tpu.matmul %101, %102, %cst_41 {dimension_numbers = #tpu.dot_dimension_numbers<[1], [0], [0], [1], [0, 0, 1, 1], [], []>} : vector<8x128xbf16>, vector<128x512xbf16>, vector<8x512xf32> -> vector<8x512xf32>
    %104 = arith.addf %100, %103 : vector<8x512xf32>
    %105 = vector.extract_strided_slice %104 {offsets = [0, 0], sizes = [8, 384], strides = [1, 1]} : vector<8x512xf32> to vector<8x384xf32>
    %106 = arith.negf %105 : vector<8x384xf32>
    %107 = math.exp %106 : vector<8x384xf32>
    %cst_42 = arith.constant 1.000000e+00 : f32
    %108 = vector.broadcast %cst_42 : f32 to vector<8x384xf32>
    %109 = arith.addf %108, %107 : vector<8x384xf32>
    %110 = arith.divf %108, %109 : vector<8x384xf32>
    %111 = vector.extract_strided_slice %110 {offsets = [0, 0], sizes = [8, 128], strides = [1, 1]} : vector<8x384xf32> to vector<8x128xf32>
    %112 = vector.extract_strided_slice %110 {offsets = [0, 128], sizes = [8, 128], strides = [1, 1]} : vector<8x384xf32> to vector<8x128xf32>
    %113 = vector.extract_strided_slice %110 {offsets = [0, 256], sizes = [8, 128], strides = [1, 1]} : vector<8x384xf32> to vector<8x128xf32>
    %114 = vector.extract_strided_slice %104 {offsets = [0, 384], sizes = [8, 128], strides = [1, 1]} : vector<8x512xf32> to vector<8x128xf32>
    %115 = math.tanh %114 : vector<8x128xf32>
    %116 = arith.mulf %112, %97 : vector<8x128xf32>
    %117 = arith.mulf %111, %115 : vector<8x128xf32>
    %118 = arith.addf %116, %117 : vector<8x128xf32>
    %119 = math.tanh %118 : vector<8x128xf32>
    %120 = arith.mulf %113, %119 : vector<8x128xf32>
    %c32 = arith.constant 32 : index
    %c0_43 = arith.constant 0 : index
    %121 = vector.load %arg12[%c32, %c0_43] : memref<64x512xf32, #tpu.memory_space<vmem>>, vector<8x512xf32>
    %122 = arith.truncf %120 : vector<8x128xf32> to vector<8x128xbf16>
    %c0_44 = arith.constant 0 : index
    %c0_45 = arith.constant 0 : index
    %123 = vector.load %arg6[%c0_44, %c0_45] : memref<128x512xbf16, #tpu.memory_space<vmem>>, vector<128x512xbf16>
    %cst_46 = arith.constant dense<0.000000e+00> : vector<8x512xf32>
    %124 = tpu.matmul %122, %123, %cst_46 {dimension_numbers = #tpu.dot_dimension_numbers<[1], [0], [0], [1], [0, 0, 1, 1], [], []>} : vector<8x128xbf16>, vector<128x512xbf16>, vector<8x512xf32> -> vector<8x512xf32>
    %125 = arith.addf %121, %124 : vector<8x512xf32>
    %126 = vector.extract_strided_slice %125 {offsets = [0, 0], sizes = [8, 384], strides = [1, 1]} : vector<8x512xf32> to vector<8x384xf32>
    %127 = arith.negf %126 : vector<8x384xf32>
    %128 = math.exp %127 : vector<8x384xf32>
    %cst_47 = arith.constant 1.000000e+00 : f32
    %129 = vector.broadcast %cst_47 : f32 to vector<8x384xf32>
    %130 = arith.addf %129, %128 : vector<8x384xf32>
    %131 = arith.divf %129, %130 : vector<8x384xf32>
    %132 = vector.extract_strided_slice %131 {offsets = [0, 0], sizes = [8, 128], strides = [1, 1]} : vector<8x384xf32> to vector<8x128xf32>
    %133 = vector.extract_strided_slice %131 {offsets = [0, 128], sizes = [8, 128], strides = [1, 1]} : vector<8x384xf32> to vector<8x128xf32>
    %134 = vector.extract_strided_slice %131 {offsets = [0, 256], sizes = [8, 128], strides = [1, 1]} : vector<8x384xf32> to vector<8x128xf32>
    %135 = vector.extract_strided_slice %125 {offsets = [0, 384], sizes = [8, 128], strides = [1, 1]} : vector<8x512xf32> to vector<8x128xf32>
    %136 = math.tanh %135 : vector<8x128xf32>
    %137 = arith.mulf %133, %118 : vector<8x128xf32>
    %138 = arith.mulf %132, %136 : vector<8x128xf32>
    %139 = arith.addf %137, %138 : vector<8x128xf32>
    %140 = math.tanh %139 : vector<8x128xf32>
    %141 = arith.mulf %134, %140 : vector<8x128xf32>
    %c40 = arith.constant 40 : index
    %c0_48 = arith.constant 0 : index
    %142 = vector.load %arg12[%c40, %c0_48] : memref<64x512xf32, #tpu.memory_space<vmem>>, vector<8x512xf32>
    %143 = arith.truncf %141 : vector<8x128xf32> to vector<8x128xbf16>
    %c0_49 = arith.constant 0 : index
    %c0_50 = arith.constant 0 : index
    %144 = vector.load %arg6[%c0_49, %c0_50] : memref<128x512xbf16, #tpu.memory_space<vmem>>, vector<128x512xbf16>
    %cst_51 = arith.constant dense<0.000000e+00> : vector<8x512xf32>
    %145 = tpu.matmul %143, %144, %cst_51 {dimension_numbers = #tpu.dot_dimension_numbers<[1], [0], [0], [1], [0, 0, 1, 1], [], []>} : vector<8x128xbf16>, vector<128x512xbf16>, vector<8x512xf32> -> vector<8x512xf32>
    %146 = arith.addf %142, %145 : vector<8x512xf32>
    %147 = vector.extract_strided_slice %146 {offsets = [0, 0], sizes = [8, 384], strides = [1, 1]} : vector<8x512xf32> to vector<8x384xf32>
    %148 = arith.negf %147 : vector<8x384xf32>
    %149 = math.exp %148 : vector<8x384xf32>
    %cst_52 = arith.constant 1.000000e+00 : f32
    %150 = vector.broadcast %cst_52 : f32 to vector<8x384xf32>
    %151 = arith.addf %150, %149 : vector<8x384xf32>
    %152 = arith.divf %150, %151 : vector<8x384xf32>
    %153 = vector.extract_strided_slice %152 {offsets = [0, 0], sizes = [8, 128], strides = [1, 1]} : vector<8x384xf32> to vector<8x128xf32>
    %154 = vector.extract_strided_slice %152 {offsets = [0, 128], sizes = [8, 128], strides = [1, 1]} : vector<8x384xf32> to vector<8x128xf32>
    %155 = vector.extract_strided_slice %152 {offsets = [0, 256], sizes = [8, 128], strides = [1, 1]} : vector<8x384xf32> to vector<8x128xf32>
    %156 = vector.extract_strided_slice %146 {offsets = [0, 384], sizes = [8, 128], strides = [1, 1]} : vector<8x512xf32> to vector<8x128xf32>
    %157 = math.tanh %156 : vector<8x128xf32>
    %158 = arith.mulf %154, %139 : vector<8x128xf32>
    %159 = arith.mulf %153, %157 : vector<8x128xf32>
    %160 = arith.addf %158, %159 : vector<8x128xf32>
    %161 = math.tanh %160 : vector<8x128xf32>
    %162 = arith.mulf %155, %161 : vector<8x128xf32>
    %c48 = arith.constant 48 : index
    %c0_53 = arith.constant 0 : index
    %163 = vector.load %arg12[%c48, %c0_53] : memref<64x512xf32, #tpu.memory_space<vmem>>, vector<8x512xf32>
    %164 = arith.truncf %162 : vector<8x128xf32> to vector<8x128xbf16>
    %c0_54 = arith.constant 0 : index
    %c0_55 = arith.constant 0 : index
    %165 = vector.load %arg6[%c0_54, %c0_55] : memref<128x512xbf16, #tpu.memory_space<vmem>>, vector<128x512xbf16>
    %cst_56 = arith.constant dense<0.000000e+00> : vector<8x512xf32>
    %166 = tpu.matmul %164, %165, %cst_56 {dimension_numbers = #tpu.dot_dimension_numbers<[1], [0], [0], [1], [0, 0, 1, 1], [], []>} : vector<8x128xbf16>, vector<128x512xbf16>, vector<8x512xf32> -> vector<8x512xf32>
    %167 = arith.addf %163, %166 : vector<8x512xf32>
    %168 = vector.extract_strided_slice %167 {offsets = [0, 0], sizes = [8, 384], strides = [1, 1]} : vector<8x512xf32> to vector<8x384xf32>
    %169 = arith.negf %168 : vector<8x384xf32>
    %170 = math.exp %169 : vector<8x384xf32>
    %cst_57 = arith.constant 1.000000e+00 : f32
    %171 = vector.broadcast %cst_57 : f32 to vector<8x384xf32>
    %172 = arith.addf %171, %170 : vector<8x384xf32>
    %173 = arith.divf %171, %172 : vector<8x384xf32>
    %174 = vector.extract_strided_slice %173 {offsets = [0, 0], sizes = [8, 128], strides = [1, 1]} : vector<8x384xf32> to vector<8x128xf32>
    %175 = vector.extract_strided_slice %173 {offsets = [0, 128], sizes = [8, 128], strides = [1, 1]} : vector<8x384xf32> to vector<8x128xf32>
    %176 = vector.extract_strided_slice %173 {offsets = [0, 256], sizes = [8, 128], strides = [1, 1]} : vector<8x384xf32> to vector<8x128xf32>
    %177 = vector.extract_strided_slice %167 {offsets = [0, 384], sizes = [8, 128], strides = [1, 1]} : vector<8x512xf32> to vector<8x128xf32>
    %178 = math.tanh %177 : vector<8x128xf32>
    %179 = arith.mulf %175, %160 : vector<8x128xf32>
    %180 = arith.mulf %174, %178 : vector<8x128xf32>
    %181 = arith.addf %179, %180 : vector<8x128xf32>
    %182 = math.tanh %181 : vector<8x128xf32>
    %183 = arith.mulf %176, %182 : vector<8x128xf32>
    %c56 = arith.constant 56 : index
    %c0_58 = arith.constant 0 : index
    %184 = vector.load %arg12[%c56, %c0_58] : memref<64x512xf32, #tpu.memory_space<vmem>>, vector<8x512xf32>
    %185 = arith.truncf %183 : vector<8x128xf32> to vector<8x128xbf16>
    %c0_59 = arith.constant 0 : index
    %c0_60 = arith.constant 0 : index
    %186 = vector.load %arg6[%c0_59, %c0_60] : memref<128x512xbf16, #tpu.memory_space<vmem>>, vector<128x512xbf16>
    %cst_61 = arith.constant dense<0.000000e+00> : vector<8x512xf32>
    %187 = tpu.matmul %185, %186, %cst_61 {dimension_numbers = #tpu.dot_dimension_numbers<[1], [0], [0], [1], [0, 0, 1, 1], [], []>} : vector<8x128xbf16>, vector<128x512xbf16>, vector<8x512xf32> -> vector<8x512xf32>
    %188 = arith.addf %184, %187 : vector<8x512xf32>
    %189 = vector.extract_strided_slice %188 {offsets = [0, 0], sizes = [8, 384], strides = [1, 1]} : vector<8x512xf32> to vector<8x384xf32>
    %190 = arith.negf %189 : vector<8x384xf32>
    %191 = math.exp %190 : vector<8x384xf32>
    %cst_62 = arith.constant 1.000000e+00 : f32
    %192 = vector.broadcast %cst_62 : f32 to vector<8x384xf32>
    %193 = arith.addf %192, %191 : vector<8x384xf32>
    %194 = arith.divf %192, %193 : vector<8x384xf32>
    %195 = vector.extract_strided_slice %194 {offsets = [0, 0], sizes = [8, 128], strides = [1, 1]} : vector<8x384xf32> to vector<8x128xf32>
    %196 = vector.extract_strided_slice %194 {offsets = [0, 128], sizes = [8, 128], strides = [1, 1]} : vector<8x384xf32> to vector<8x128xf32>
    %197 = vector.extract_strided_slice %194 {offsets = [0, 256], sizes = [8, 128], strides = [1, 1]} : vector<8x384xf32> to vector<8x128xf32>
    %198 = vector.extract_strided_slice %188 {offsets = [0, 384], sizes = [8, 128], strides = [1, 1]} : vector<8x512xf32> to vector<8x128xf32>
    %199 = math.tanh %198 : vector<8x128xf32>
    %200 = arith.mulf %196, %181 : vector<8x128xf32>
    %201 = arith.mulf %195, %199 : vector<8x128xf32>
    %202 = arith.addf %200, %201 : vector<8x128xf32>
    %203 = math.tanh %202 : vector<8x128xf32>
    %204 = arith.mulf %197, %203 : vector<8x128xf32>
    %205 = vector.extract_strided_slice %34 {offsets = [0, 0], sizes = [8, 384], strides = [1, 1]} : vector<8x512xf32> to vector<8x384xf32>
    %206 = arith.negf %205 : vector<8x384xf32>
    %207 = math.exp %206 : vector<8x384xf32>
    %cst_63 = arith.constant 1.000000e+00 : f32
    %208 = vector.broadcast %cst_63 : f32 to vector<8x384xf32>
    %209 = arith.addf %208, %207 : vector<8x384xf32>
    %210 = arith.divf %208, %209 : vector<8x384xf32>
    %211 = vector.extract_strided_slice %210 {offsets = [0, 0], sizes = [8, 128], strides = [1, 1]} : vector<8x384xf32> to vector<8x128xf32>
    %212 = vector.extract_strided_slice %210 {offsets = [0, 256], sizes = [8, 128], strides = [1, 1]} : vector<8x384xf32> to vector<8x128xf32>
    %213 = vector.extract_strided_slice %34 {offsets = [0, 384], sizes = [8, 128], strides = [1, 1]} : vector<8x512xf32> to vector<8x128xf32>
    %214 = math.tanh %213 : vector<8x128xf32>
    %215 = arith.mulf %211, %214 : vector<8x128xf32>
    %216 = math.tanh %215 : vector<8x128xf32>
    %217 = arith.mulf %212, %216 : vector<8x128xf32>
    %218 = tpu.concatenate %204, %217 in 1 : vector<8x128xf32>, vector<8x128xf32> -> vector<8x256xf32>
    %219 = arith.truncf %218 : vector<8x256xf32> to vector<8x256xbf16>
    %c0_64 = arith.constant 0 : index
    %c0_65 = arith.constant 0 : index
    %220 = vector.load %arg9[%c0_64, %c0_65] : memref<256x128xbf16, #tpu.memory_space<vmem>>, vector<256x128xbf16>
    %cst_66 = arith.constant dense<0.000000e+00> : vector<8x128xf32>
    %221 = tpu.matmul %219, %220, %cst_66 {dimension_numbers = #tpu.dot_dimension_numbers<[1], [0], [0], [1], [0, 0, 1, 1], [], []>} : vector<8x256xbf16>, vector<256x128xbf16>, vector<8x128xf32> -> vector<8x128xf32>
    %c0_67 = arith.constant 0 : index
    %c0_68 = arith.constant 0 : index
    %222 = vector.load %arg10[%c0_67, %c0_68] : memref<1x128xf32, #tpu.memory_space<vmem>>, vector<1x128xf32>
    %223 = vector.broadcast %222 : vector<1x128xf32> to vector<8x128xf32>
    %224 = arith.addf %221, %223 : vector<8x128xf32>
    %c0_69 = arith.constant 0 : index
    %c0_70 = arith.constant 0 : index
    %225 = vector.load %arg11[%c0_69, %c0_70] : memref<8x128xf32, #tpu.memory_space<vmem>>, vector<8x128xf32>
    tpu.vector_store %arg11[%c0_69, %c0_70], %224 {strides = array<i32>} : memref<8x128xf32, #tpu.memory_space<vmem>>, vector<8x128xf32>,
    return
  }
  func.func @transform_0(%arg0: i32) -> (i32, i32, i32) {
    %c0_i32 = arith.constant 0 : i32
    %c0_i32_0 = arith.constant 0 : i32
    %c0_i32_1 = arith.constant 0 : i32
    return %arg0, %c0_i32, %c0_i32_0 : i32, i32, i32
  }
  func.func @transform_1(%arg0: i32) -> (i32, i32) {
    %c0_i32 = arith.constant 0 : i32
    %c0_i32_0 = arith.constant 0 : i32
    %c0_i32_1 = arith.constant 0 : i32
    return %c0_i32, %c0_i32_0 : i32, i32
  }
  func.func @transform_2(%arg0: i32) -> (i32, i32) {
    %c0_i32 = arith.constant 0 : i32
    %c0_i32_0 = arith.constant 0 : i32
    %c0_i32_1 = arith.constant 0 : i32
    return %c0_i32, %c0_i32_0 : i32, i32
  }
  func.func @transform_3(%arg0: i32) -> (i32, i32) {
    %c0_i32 = arith.constant 0 : i32
    %c0_i32_0 = arith.constant 0 : i32
    %c0_i32_1 = arith.constant 0 : i32
    return %c0_i32, %c0_i32_0 : i32, i32
  }
  func.func @transform_4(%arg0: i32) -> (i32, i32) {
    %c0_i32 = arith.constant 0 : i32
    %c0_i32_0 = arith.constant 0 : i32
    %c0_i32_1 = arith.constant 0 : i32
    return %c0_i32, %c0_i32_0 : i32, i32
  }
  func.func @transform_5(%arg0: i32) -> (i32, i32) {
    %c0_i32 = arith.constant 0 : i32
    %c0_i32_0 = arith.constant 0 : i32
    %c0_i32_1 = arith.constant 0 : i32
    return %c0_i32, %c0_i32_0 : i32, i32
  }
  func.func @transform_6(%arg0: i32) -> (i32, i32) {
    %c0_i32 = arith.constant 0 : i32
    %c0_i32_0 = arith.constant 0 : i32
    %c0_i32_1 = arith.constant 0 : i32
    return %c0_i32, %c0_i32_0 : i32, i32
  }
  func.func @transform_7(%arg0: i32) -> (i32, i32) {
    %c0_i32 = arith.constant 0 : i32
    %c0_i32_0 = arith.constant 0 : i32
    %c0_i32_1 = arith.constant 0 : i32
    return %c0_i32, %c0_i32_0 : i32, i32
  }
  func.func @transform_8(%arg0: i32) -> (i32, i32) {
    %c0_i32 = arith.constant 0 : i32
    %c0_i32_0 = arith.constant 0 : i32
    %c0_i32_1 = arith.constant 0 : i32
    return %c0_i32, %c0_i32_0 : i32, i32
  }
  func.func @transform_9(%arg0: i32) -> (i32, i32) {
    %c0_i32 = arith.constant 0 : i32
    %c0_i32_0 = arith.constant 0 : i32
    %c0_i32_1 = arith.constant 0 : i32
    return %c0_i32, %c0_i32_0 : i32, i32
  }
  func.func @transform_10(%arg0: i32) -> (i32, i32) {
    %c0_i32 = arith.constant 0 : i32
    %c0_i32_0 = arith.constant 0 : i32
    return %arg0, %c0_i32 : i32, i32
  }
}

</mosaic_0001>

<llo_original>
// kernel: tpu_custom_call.1
$region0: #{tpu_custom_call.1}
  #allocation0 [shape = 'u32[]', space=smem, size = 0x4, offset = 0x4, fixed_abs, tag = 'smem constant byte address 0x4 - core index']
  #allocation1 [shape = 'u32[144,128]{1,0:T(1,128)}', space=vmem, size = 0x12000, scoped, tag = 'internal scratch']
  #allocation2 [shape = 'f32[64,512]{1,0:T(8,128)}', space=vmem, size = 0x20000, scoped, tag = 'scratch operand']
  %s0 = inlined_call_operand.vmem [shape: f32[2,128,128], index: 0, kind: input, shape index: {}]
  %s1 = inlined_call_operand.vmem [shape: bf16[384,64], index: 1, kind: input, shape index: {}]
  %s2 = inlined_call_operand.vmem [shape: f32[1,64], index: 2, kind: input, shape index: {}]
  %s3 = inlined_call_operand.hbm [shape: bf16[64,512], index: 3, kind: input, shape index: {}]
  %s4 = inlined_call_operand.hbm [shape: bf16[64,512], index: 4, kind: input, shape index: {}]
  %s5 = inlined_call_operand.hbm [shape: bf16[128,512], index: 5, kind: input, shape index: {}]
  %s6 = inlined_call_operand.vmem [shape: f32[1,512], index: 6, kind: input, shape index: {}]
  %s7 = inlined_call_operand.vmem [shape: f32[1,512], index: 7, kind: input, shape index: {}]
  %s8 = inlined_call_operand.hbm [shape: bf16[256,128], index: 8, kind: input, shape index: {}]
  %s9 = inlined_call_operand.vmem [shape: f32[1,128], index: 9, kind: input, shape index: {}]
  %s10 = inlined_call_operand.hbm [shape: f32[16,128], index: 10, kind: output, shape index: {}]
  %s11 = sld [smem:[#allocation0]]
  $region89: #{tpu_custom_call.1} parent=0
    _
  %s13 = ssub.s32 1, %s11
  %s14 = scalar_select 0, %s13, %s11
  $region1: #{tpu_custom_call.1} parent=0
    #allocation3 [shape = 'u8[65536]{0}', space=vmem, size = 0x10000, scoped, tag = 'input window, operand 3, single buffered']
    #allocation4 [shape = 's32[2]{0}', space=sflag, size = 0x8, scoped, tag = 'scoped memory for tpu_custom_call.1']
    #allocation5 [shape = 's32[2]{0}', space=sflag, size = 0x8, scoped, tag = 'scoped memory for tpu_custom_call.1']
    #allocation6 [shape = 'u8[65536]{0}', space=vmem, size = 0x10000, scoped, tag = 'input window, operand 4, single buffered']
    #allocation7 [shape = 's32[1]{0}', space=sflag, size = 0x4, scoped, tag = 'scoped memory for tpu_custom_call.1']
    #allocation8 [shape = 'u8[131072]{0}', space=vmem, size = 0x20000, scoped, tag = 'input window, operand 5, single buffered']
    #allocation9 [shape = 'u8[65536]{0}', space=vmem, size = 0x10000, scoped, tag = 'input window, operand 8, single buffered']
    #allocation10 [shape = 's32[1]{0}', space=sflag, size = 0x4, scoped, tag = 'scoped memory for tpu_custom_call.1']
    #allocation11 [shape = 'u8[8192]{0}', space=vmem, size = 0x2000, scoped, tag = 'output window, operand 0']
    %15 = vsyncpa [#allocation4], 0
    %16 = vsyncpa [#allocation7], 0
    %17 = vsyncpa [#allocation10], 0
    %18 = vsyncpa [#allocation5], 0
    %s19 = scalar_lea.sflag [#allocation5], 1
    %20 = vsyncpa %s19, 0
    loop: start=0, step=1, limit=4
    $region2: #{tpu_custom_call.1} parent=1 // loop_pre_header
      _
    $region3: #{tpu_custom_call.1} parent=1 // loop_header
      %s22 = sphi 0, %s26
      %p23 = scmp.ge.s32.totalorder %s22, 4
      %s32 = sphi 0, %s34
      %s35 = sphi 0, %s32
      %s36 = sphi 0, %s35
      %s52 = sphi 0, %s36
      %s56 = sphi 0, %s56
      %s58 = sphi 0, %s56
      %s59 = sphi 0, %s58
      %s73 = sphi 0, %s59
      %s77 = sphi 0, %s77
      %s79 = sphi 0, %s77
      %s80 = sphi 0, %s79
      %s94 = sphi 0, %s80
      %s98 = sphi 0, %s98
      %s100 = sphi 0, %s98
      %s101 = sphi 0, %s100
      %s115 = sphi 0, %s101
      %s119 = sphi 0, %s119
      %s121 = sphi 0, %s119
      %s122 = sphi 0, %s121
      %s136 = sphi 0, %s122
      %s140 = sphi 0, %s140
      %s142 = sphi 0, %s140
      %s143 = sphi 0, %s142
      %s157 = sphi 0, %s143
      %s161 = sphi 0, %s161
      %s163 = sphi 0, %s161
      %s164 = sphi 0, %s163
      %s178 = sphi 0, %s164
      %s182 = sphi 0, %s182
      %s184 = sphi 0, %s182
      %s185 = sphi 0, %s184
      %s199 = sphi 0, %s185
      %s203 = sphi 0, %s203
      %s205 = sphi 0, %s203
      %s206 = sphi 0, %s205
      %s220 = sphi 0, %s206
      %s224 = sphi 0, %s224
      %s226 = sphi 0, %s224
      %s227 = sphi 0, %s226
      %s241 = sphi 0, %s227
      %s247 = sphi 0, %s249
      %s250 = sphi 0, %s247
      %s251 = sphi 0, %s250
      %s267 = sphi 0, %s251
    $region4: #{tpu_custom_call.1} parent=1 // loop_header_branch
      %25 = sbr.rel (%p23) target = $region8
    $region5: #{tpu_custom_call.1} parent=1 // loop_body
      %s27 = ssub.s32 %s22, 1
      %s28 = ssub.s32 %s22, 2
      %s29 = sadd.s32 %s22, 1
      %s30 = ssub.s32 %s22, %s29
      %p31 = scmp.eq.s32.totalorder %s30, 0
      %s33 = sadd.s32 %s32, 1
      %s34 = scalar_select %p31, %s32, %s33
      %p37 = pneg %p31
      %p38 = scmp.eq.s32.totalorder %s22, 1
      %p39 = por %p37, %p38
      %p40 = scmp.ne.s32.totalorder %s32, %s35
      %p41 = scmp.eq.s32.totalorder %s22, 0
      %p42 = por %p40, %p41
      %p43 = scmp.ne.s32.totalorder %s32, %s35
      %p44 = scmp.eq.s32.totalorder %s27, 1
      %p45 = por %p43, %p44
      %p46 = scmp.ne.s32.totalorder %s35, %s36
      %p47 = scmp.eq.s32.totalorder %s27, 0
      %p48 = por %p46, %p47
      %p49 = scmp.ne.s32.totalorder %s35, %s36
      %p50 = scmp.eq.s32.totalorder %s28, 1
      %p51 = por %p49, %p50
      %p53 = scmp.ne.s32.totalorder %s36, %s52
      %p54 = scmp.eq.s32.totalorder %s28, 0
      %p55 = por %p53, %p54
      %s57 = sadd.s32 %s56, 1
      %p60 = scmp.eq.s32.totalorder %s22, 1
      %p61 = scmp.ne.s32.totalorder %s56, %s58
      %p62 = scmp.eq.s32.totalorder %s22, 0
      %p63 = por %p61, %p62
      %p64 = scmp.ne.s32.totalorder %s56, %s58
      %p65 = scmp.eq.s32.totalorder %s27, 1
      %p66 = por %p64, %p65
      %p67 = scmp.ne.s32.totalorder %s58, %s59
      %p68 = scmp.eq.s32.totalorder %s27, 0
      %p69 = por %p67, %p68
      %p70 = scmp.ne.s32.totalorder %s58, %s59
      %p71 = scmp.eq.s32.totalorder %s28, 1
      %p72 = por %p70, %p71
      %p74 = scmp.ne.s32.totalorder %s59, %s73
      %p75 = scmp.eq.s32.totalorder %s28, 0
      %p76 = por %p74, %p75
      %s78 = sadd.s32 %s77, 1
      %p81 = scmp.eq.s32.totalorder %s22, 1
      %p82 = scmp.ne.s32.totalorder %s77, %s79
      %p83 = scmp.eq.s32.totalorder %s22, 0
      %p84 = por %p82, %p83
      %p85 = scmp.ne.s32.totalorder %s77, %s79
      %p86 = scmp.eq.s32.totalorder %s27, 1
      %p87 = por %p85, %p86
      %p88 = scmp.ne.s32.totalorder %s79, %s80
      %p89 = scmp.eq.s32.totalorder %s27, 0
      %p90 = por %p88, %p89
      %p91 = scmp.ne.s32.totalorder %s79, %s80
      %p92 = scmp.eq.s32.totalorder %s28, 1
      %p93 = por %p91, %p92
      %p95 = scmp.ne.s32.totalorder %s80, %s94
      %p96 = scmp.eq.s32.totalorder %s28, 0
      %p97 = por %p95, %p96
      %s99 = sadd.s32 %s98, 1
      %p102 = scmp.eq.s32.totalorder %s22, 1
      %p103 = scmp.ne.s32.totalorder %s98, %s100
      %p104 = scmp.eq.s32.totalorder %s22, 0
      %p105 = por %p103, %p104
      %p106 = scmp.ne.s32.totalorder %s98, %s100
      %p107 = scmp.eq.s32.totalorder %s27, 1
      %p108 = por %p106, %p107
      %p109 = scmp.ne.s32.totalorder %s100, %s101
      %p110 = scmp.eq.s32.totalorder %s27, 0
      %p111 = por %p109, %p110
      %p112 = scmp.ne.s32.totalorder %s100, %s101
      %p113 = scmp.eq.s32.totalorder %s28, 1
      %p114 = por %p112, %p113
      %p116 = scmp.ne.s32.totalorder %s101, %s115
      %p117 = scmp.eq.s32.totalorder %s28, 0
      %p118 = por %p116, %p117
      %s120 = sadd.s32 %s119, 1
      %p123 = scmp.eq.s32.totalorder %s22, 1
      %p124 = scmp.ne.s32.totalorder %s119, %s121
      %p125 = scmp.eq.s32.totalorder %s22, 0
      %p126 = por %p124, %p125
      %p127 = scmp.ne.s32.totalorder %s119, %s121
      %p128 = scmp.eq.s32.totalorder %s27, 1
      %p129 = por %p127, %p128
      %p130 = scmp.ne.s32.totalorder %s121, %s122
      %p131 = scmp.eq.s32.totalorder %s27, 0
      %p132 = por %p130, %p131
      %p133 = scmp.ne.s32.totalorder %s121, %s122
      %p134 = scmp.eq.s32.totalorder %s28, 1
      %p135 = por %p133, %p134
      %p137 = scmp.ne.s32.totalorder %s122, %s136
      %p138 = scmp.eq.s32.totalorder %s28, 0
      %p139 = por %p137, %p138
      %s141 = sadd.s32 %s140, 1
      %p144 = scmp.eq.s32.totalorder %s22, 1
      %p145 = scmp.ne.s32.totalorder %s140, %s142
      %p146 = scmp.eq.s32.totalorder %s22, 0
      %p147 = por %p145, %p146
      %p148 = scmp.ne.s32.totalorder %s140, %s142
      %p149 = scmp.eq.s32.totalorder %s27, 1
      %p150 = por %p148, %p149
      %p151 = scmp.ne.s32.totalorder %s142, %s143
      %p152 = scmp.eq.s32.totalorder %s27, 0
      %p153 = por %p151, %p152
      %p154 = scmp.ne.s32.totalorder %s142, %s143
      %p155 = scmp.eq.s32.totalorder %s28, 1
      %p156 = por %p154, %p155
      %p158 = scmp.ne.s32.totalorder %s143, %s157
      %p159 = scmp.eq.s32.totalorder %s28, 0
      %p160 = por %p158, %p159
      %s162 = sadd.s32 %s161, 1
      %p165 = scmp.eq.s32.totalorder %s22, 1
      %p166 = scmp.ne.s32.totalorder %s161, %s163
      %p167 = scmp.eq.s32.totalorder %s22, 0
      %p168 = por %p166, %p167
      %p169 = scmp.ne.s32.totalorder %s161, %s163
      %p170 = scmp.eq.s32.totalorder %s27, 1
      %p171 = por %p169, %p170
      %p172 = scmp.ne.s32.totalorder %s163, %s164
      %p173 = scmp.eq.s32.totalorder %s27, 0
      %p174 = por %p172, %p173
      %p175 = scmp.ne.s32.totalorder %s163, %s164
      %p176 = scmp.eq.s32.totalorder %s28, 1
      %p177 = por %p175, %p176
      %p179 = scmp.ne.s32.totalorder %s164, %s178
      %p180 = scmp.eq.s32.totalorder %s28, 0
      %p181 = por %p179, %p180
      %s183 = sadd.s32 %s182, 1
      %p186 = scmp.eq.s32.totalorder %s22, 1
      %p187 = scmp.ne.s32.totalorder %s182, %s184
      %p188 = scmp.eq.s32.totalorder %s22, 0
      %p189 = por %p187, %p188
      %p190 = scmp.ne.s32.totalorder %s182, %s184
      %p191 = scmp.eq.s32.totalorder %s27, 1
      %p192 = por %p190, %p191
      %p193 = scmp.ne.s32.totalorder %s184, %s185
      %p194 = scmp.eq.s32.totalorder %s27, 0
      %p195 = por %p193, %p194
      %p196 = scmp.ne.s32.totalorder %s184, %s185
      %p197 = scmp.eq.s32.totalorder %s28, 1
      %p198 = por %p196, %p197
      %p200 = scmp.ne.s32.totalorder %s185, %s199
      %p201 = scmp.eq.s32.totalorder %s28, 0
      %p202 = por %p200, %p201
      %s204 = sadd.s32 %s203, 1
      %p207 = scmp.eq.s32.totalorder %s22, 1
      %p208 = scmp.ne.s32.totalorder %s203, %s205
      %p209 = scmp.eq.s32.totalorder %s22, 0
      %p210 = por %p208, %p209
      %p211 = scmp.ne.s32.totalorder %s203, %s205
      %p212 = scmp.eq.s32.totalorder %s27, 1
      %p213 = por %p211, %p212
      %p214 = scmp.ne.s32.totalorder %s205, %s206
      %p215 = scmp.eq.s32.totalorder %s27, 0
      %p216 = por %p214, %p215
      %p217 = scmp.ne.s32.totalorder %s205, %s206
      %p218 = scmp.eq.s32.totalorder %s28, 1
      %p219 = por %p217, %p218
      %p221 = scmp.ne.s32.totalorder %s206, %s220
      %p222 = scmp.eq.s32.totalorder %s28, 0
      %p223 = por %p221, %p222
      %s225 = sadd.s32 %s224, 1
      %p228 = scmp.eq.s32.totalorder %s22, 1
      %p229 = scmp.ne.s32.totalorder %s224, %s226
      %p230 = scmp.eq.s32.totalorder %s22, 0
      %p231 = por %p229, %p230
      %p232 = scmp.ne.s32.totalorder %s224, %s226
      %p233 = scmp.eq.s32.totalorder %s27, 1
      %p234 = por %p232, %p233
      %p235 = scmp.ne.s32.totalorder %s226, %s227
      %p236 = scmp.eq.s32.totalorder %s27, 0
      %p237 = por %p235, %p236
      %p238 = scmp.ne.s32.totalorder %s226, %s227
      %p239 = scmp.eq.s32.totalorder %s28, 1
      %p240 = por %p238, %p239
      %p242 = scmp.ne.s32.totalorder %s227, %s241
      %p243 = scmp.eq.s32.totalorder %s28, 0
      %p244 = por %p242, %p243
      %s245 = ssub.s32 %s22, %s29
      %p246 = scmp.eq.s32.totalorder %s245, 0
      %s248 = sadd.s32 %s247, 1
      %s249 = scalar_select %p246, %s247, %s248
      %p252 = pneg %p246
      %p253 = scmp.eq.s32.totalorder %s22, 1
      %p254 = por %p252, %p253
      %p255 = scmp.ne.s32.totalorder %s247, %s250
      %p256 = scmp.eq.s32.totalorder %s22, 0
      %p257 = por %p255, %p256
      %p258 = scmp.ne.s32.totalorder %s247, %s250
      %p259 = scmp.eq.s32.totalorder %s27, 1
      %p260 = por %p258, %p259
      %p261 = scmp.ne.s32.totalorder %s250, %s251
      %p262 = scmp.eq.s32.totalorder %s27, 0
      %p263 = por %p261, %p262
      %p264 = scmp.ne.s32.totalorder %s250, %s251
      %p265 = scmp.eq.s32.totalorder %s28, 1
      %p266 = por %p264, %p265
      %p268 = scmp.ne.s32.totalorder %s251, %s267
      %p269 = scmp.eq.s32.totalorder %s28, 0
      %p270 = por %p268, %p269
      %p271 = scmp.le.s32.totalorder 1, %s22
      %p272 = scmp.lt.s32.totalorder %s22, 3
      %p273 = pnand %p271, %p272
      %p274 = pneg %p273
      // Predicated region
      $region9: #{tpu_custom_call.1} parent=5 // pred_check
        _
      $region10: #{tpu_custom_call.1} parent=5 // pred_check_branch
        %276 = sbr.rel (%p273) target = $region12
      $region11: #{tpu_custom_call.1} parent=5 // pred_region
        %s277 = ssub.s32 %s22, 1
        // Predicated region
        $region13: #{tpu_custom_call.1} parent=11 // pred_check
          %p278 = pneg %p69
        $region14: #{tpu_custom_call.1} parent=11 // pred_check_branch
          %280 = sbr.rel (%p278) target = $region16
        $region15: #{tpu_custom_call.1} parent=11 // pred_region
          _
        $region16: #{tpu_custom_call.1} parent=11 // pred_fallthru
          _
        // Predicated region
        $region17: #{tpu_custom_call.1} parent=11 // pred_check
          %p281 = pneg %p90
        $region18: #{tpu_custom_call.1} parent=11 // pred_check_branch
          %283 = sbr.rel (%p281) target = $region20
        $region19: #{tpu_custom_call.1} parent=11 // pred_region
          _
        $region20: #{tpu_custom_call.1} parent=11 // pred_fallthru
          _
        // Predicated region
        $region21: #{tpu_custom_call.1} parent=11 // pred_check
          %p284 = pneg %p111
        $region22: #{tpu_custom_call.1} parent=11 // pred_check_branch
          %286 = sbr.rel (%p284) target = $region24
        $region23: #{tpu_custom_call.1} parent=11 // pred_region
          %s288 = ssub.s32 2048, 2048
          %289 = vsyncadd [#allocation4], %s288
          %s290 = sshll.u32 [#allocation3], 4
          %s291 = int_to_ptr.vmem [resolvable:$true] %s290
          %296 = dma.hbm_to_vmem [thread:$0]  %s3, 2048, %s291, [#allocation4], 256, 256, 16
        $region24: #{tpu_custom_call.1} parent=11 // pred_fallthru
          _
        // Predicated region
        $region25: #{tpu_custom_call.1} parent=11 // pred_check
          %p297 = pneg %p132
        $region26: #{tpu_custom_call.1} parent=11 // pred_check_branch
          %299 = sbr.rel (%p297) target = $region28
        $region27: #{tpu_custom_call.1} parent=11 // pred_region
          %s301 = ssub.s32 2048, 2048
          %302 = vsyncadd [#allocation7], %s301
          %s303 = sshll.u32 [#allocation6], 4
          %s304 = int_to_ptr.vmem [resolvable:$true] %s303
          %309 = dma.hbm_to_vmem [thread:$0]  %s4, 2048, %s304, [#allocation7], 256, 256, 16
        $region28: #{tpu_custom_call.1} parent=11 // pred_fallthru
          _
        // Predicated region
        $region29: #{tpu_custom_call.1} parent=11 // pred_check
          %p310 = pneg %p153
        $region30: #{tpu_custom_call.1} parent=11 // pred_check_branch
          %312 = sbr.rel (%p310) target = $region32
        $region31: #{tpu_custom_call.1} parent=11 // pred_region
          %s314 = ssub.s32 4096, 4096
          %315 = vsyncadd [#allocation7], %s314
          %s316 = sshll.u32 [#allocation8], 4
          %s317 = int_to_ptr.vmem [resolvable:$true] %s316
          %322 = dma.hbm_to_vmem [thread:$0]  %s5, 4096, %s317, [#allocation7], 256, 256, 16
        $region32: #{tpu_custom_call.1} parent=11 // pred_fallthru
          _
        // Predicated region
        $region33: #{tpu_custom_call.1} parent=11 // pred_check
          %p323 = pneg %p174
        $region34: #{tpu_custom_call.1} parent=11 // pred_check_branch
          %325 = sbr.rel (%p323) target = $region36
        $region35: #{tpu_custom_call.1} parent=11 // pred_region
          _
        $region36: #{tpu_custom_call.1} parent=11 // pred_fallthru
          _
        // Predicated region
        $region37: #{tpu_custom_call.1} parent=11 // pred_check
          %p326 = pneg %p195
        $region38: #{tpu_custom_call.1} parent=11 // pred_check_branch
          %328 = sbr.rel (%p326) target = $region40
        $region39: #{tpu_custom_call.1} parent=11 // pred_region
          _
        $region40: #{tpu_custom_call.1} parent=11 // pred_fallthru
          _
        // Predicated region
        $region41: #{tpu_custom_call.1} parent=11 // pred_check
          %p329 = pneg %p216
        $region42: #{tpu_custom_call.1} parent=11 // pred_check_branch
          %331 = sbr.rel (%p329) target = $region44
        $region43: #{tpu_custom_call.1} parent=11 // pred_region
          %s333 = ssub.s32 2048, 2048
          %334 = vsyncadd [#allocation10], %s333
          %s335 = sshll.u32 [#allocation9], 4
          %s336 = int_to_ptr.vmem [resolvable:$true] %s335
          %341 = dma.hbm_to_vmem [thread:$0]  %s8, 2048, %s336, [#allocation10], 64, 64, 4
        $region44: #{tpu_custom_call.1} parent=11 // pred_fallthru
          _
        // Predicated region
        $region45: #{tpu_custom_call.1} parent=11 // pred_check
          %p342 = pneg %p237
        $region46: #{tpu_custom_call.1} parent=11 // pred_check_branch
          %344 = sbr.rel (%p342) target = $region48
        $region47: #{tpu_custom_call.1} parent=11 // pred_region
          _
        $region48: #{tpu_custom_call.1} parent=11 // pred_fallthru
          _
      $region12: #{tpu_custom_call.1} parent=5 // pred_fallthru
        _
      %p345 = scmp.lt.s32.totalorder %s22, 2
      // Predicated region
      $region49: #{tpu_custom_call.1} parent=5 // pred_check
        %p346 = pneg %p345
      $region50: #{tpu_custom_call.1} parent=5 // pred_check_branch
        %348 = sbr.rel (%p346) target = $region52
      $region51: #{tpu_custom_call.1} parent=5 // pred_region
        // Predicated region
        $region53: #{tpu_custom_call.1} parent=51 // pred_check
          %p349 = pneg %p42
        $region54: #{tpu_custom_call.1} parent=51 // pred_check_branch
          %351 = sbr.rel (%p349) target = $region56
        $region55: #{tpu_custom_call.1} parent=51 // pred_region
          %p352 = scmp.lt.s32.totalorder %s22, 1
          %s353 = scalar_select %p352, %s22, 1
          %s354 = smul.addr %s353, 16
          %s355 = smul.addr %s354, 8
          %s356 = scalar_lea.vmem %s0, %s355
        $region56: #{tpu_custom_call.1} parent=51 // pred_fallthru
          _
      $region52: #{tpu_custom_call.1} parent=5 // pred_fallthru
        _
      %p357 = scmp.le.s32.totalorder 1, %s22
      %p358 = scmp.lt.s32.totalorder %s22, 3
      %p359 = pnand %p357, %p358
      %p360 = pneg %p359
      // Predicated region
      $region57: #{tpu_custom_call.1} parent=5 // pred_check
        _
      $region58: #{tpu_custom_call.1} parent=5 // pred_check_branch
        %362 = sbr.rel (%p359) target = $region60
      $region59: #{tpu_custom_call.1} parent=5 // pred_region
        %s363 = ssub.s32 %s22, 1
        // Predicated region
        $region61: #{tpu_custom_call.1} parent=59 // pred_check
          %p364 = pneg %p111
        $region62: #{tpu_custom_call.1} parent=59 // pred_check_branch
          %366 = sbr.rel (%p364) target = $region64
        $region63: #{tpu_custom_call.1} parent=59 // pred_region
          %367 = dma.done [#allocation4], 2048
        $region64: #{tpu_custom_call.1} parent=59 // pred_fallthru
          _
        // Predicated region
        $region65: #{tpu_custom_call.1} parent=59 // pred_check
          %p368 = pneg %p132
        $region66: #{tpu_custom_call.1} parent=59 // pred_check_branch
          %370 = sbr.rel (%p368) target = $region68
        $region67: #{tpu_custom_call.1} parent=59 // pred_region
          %371 = dma.done [#allocation7], 2048
        $region68: #{tpu_custom_call.1} parent=59 // pred_fallthru
          _
        // Predicated region
        $region69: #{tpu_custom_call.1} parent=59 // pred_check
          %p372 = pneg %p153
        $region70: #{tpu_custom_call.1} parent=59 // pred_check_branch
          %374 = sbr.rel (%p372) target = $region72
        $region71: #{tpu_custom_call.1} parent=59 // pred_region
          %375 = dma.done [#allocation7], 4096
        $region72: #{tpu_custom_call.1} parent=59 // pred_fallthru
          _
        // Predicated region
        $region73: #{tpu_custom_call.1} parent=59 // pred_check
          %p376 = pneg %p216
        $region74: #{tpu_custom_call.1} parent=59 // pred_check_branch
          %378 = sbr.rel (%p376) target = $region76
        $region75: #{tpu_custom_call.1} parent=59 // pred_region
          %379 = dma.done [#allocation10], 2048
        $region76: #{tpu_custom_call.1} parent=59 // pred_fallthru
          _
        %p380 = scmp.lt.s32.totalorder %s27, 1
        %s381 = scalar_select %p380, %s27, 1
        %s382 = smul.addr %s381, 16
        %s383 = smul.addr %s382, 8
        %s384 = scalar_lea.vmem %s0, %s383
        %p385 = pneg %p48
        %p386 = pneg %p45
        %p387 = pneg %p69
        %p388 = pneg %p66
        %p389 = pneg %p90
        %p390 = pneg %p87
        %p391 = pneg %p111
        %p392 = pneg %p108
        %p393 = pneg %p132
        %p394 = pneg %p129
        %p395 = pneg %p153
        %p396 = pneg %p150
        %p397 = pneg %p174
        %p398 = pneg %p171
        %p399 = pneg %p195
        %p400 = pneg %p192
        %p401 = pneg %p216
        %p402 = pneg %p213
        %p403 = pneg %p237
        %p404 = pneg %p234
        %p405 = pneg %p263
        %p406 = pneg %p260
        %s407 = sand.u32 %s250, 1
        %s408 = scalar_lea.sflag [#allocation5], %s407
        %s409 = sand.u32 %s250, 1
        %s410 = smul.addr %s409, 8
        %s411 = scalar_lea.vmem [#allocation11], %s410
        %p412 = scmp.lt.s32.totalorder %s27, 1
        %s413 = scalar_select %p412, %s27, 1
        %s414 = smul.addr %s413, 16
        %s415 = smul.addr %s414, 8
        %s416 = scalar_lea.vmem %s0, %s415
        %v418 = vld [vmem:[%s416] sm:$0xff]
        %v419 = vld [vmem:[%s416 + $0x8] sm:$0xff]
        %v420 = vld [vmem:[%s416 + $0x10] sm:$0xff]
        %v421 = vld [vmem:[%s416 + $0x18] sm:$0xff]
        %v422 = vld [vmem:[%s416 + $0x20] sm:$0xff]
        %v423 = vld [vmem:[%s416 + $0x28] sm:$0xff]
        %v424 = vld [vmem:[%s416 + $0x30] sm:$0xff]
        %v425 = vld [vmem:[%s416 + $0x38] sm:$0xff]
        %v426 = vld [vmem:[%s416 + $0x40] sm:$0xff]
        %v427 = vld [vmem:[%s416 + $0x48] sm:$0xff]
        %v428 = vld [vmem:[%s416 + $0x50] sm:$0xff]
        %v429 = vld [vmem:[%s416 + $0x58] sm:$0xff]
        %v430 = vld [vmem:[%s416 + $0x60] sm:$0xff]
        %v431 = vld [vmem:[%s416 + $0x68] sm:$0xff]
        %v432 = vld [vmem:[%s416 + $0x70] sm:$0xff]
        %v433 = vld [vmem:[%s416 + $0x78] sm:$0xff]
        %v434 = vpack.c.bf16 %v418, 0.0
        %v435 = vpack.c.bf16 %v419, %v418
        %v436 = vpack.c.bf16 %v420, %v419
        %v437 = vpack.c.bf16 %v421, %v420
        %v438 = vpack.c.bf16 %v422, %v421
        %v439 = vpack.c.bf16 %v423, %v422
        %v440 = vpack.c.bf16 %v424, %v423
        %v441 = vpack.c.bf16 %v425, %v424
        %v442 = vpack.c.bf16 %v426, %v425
        %v443 = vpack.c.bf16 %v427, %v426
        %v444 = vpack.c.bf16 %v428, %v427
        %v445 = vpack.c.bf16 %v429, %v428
        %v446 = vpack.c.bf16 %v430, %v429
        %v447 = vpack.c.bf16 %v431, %v430
        %v448 = vpack.c.bf16 %v432, %v431
        %v449 = vpack.c.bf16 %v433, %v432
        %v450 = vpack.c.bf16 0.0, %v433
        %v451 = vld [vmem:[%s1] sm:$0xf]
        %v452 = vld [vmem:[%s1 + $0x4] sm:$0xf]
        %v453 = vld [vmem:[%s1 + $0x8] sm:$0xf]
        %v454 = vld [vmem:[%s1 + $0xc] sm:$0xf]
        %v455 = vld [vmem:[%s1 + $0x10] sm:$0xf]
        %v456 = vld [vmem:[%s1 + $0x14] sm:$0xf]
        %v457 = vld [vmem:[%s1 + $0x18] sm:$0xf]
        %v458 = vld [vmem:[%s1 + $0x1c] sm:$0xf]
        %v459 = vld [vmem:[%s1 + $0x20] sm:$0xf]
        %v460 = vld [vmem:[%s1 + $0x24] sm:$0xf]
        %v461 = vld [vmem:[%s1 + $0x28] sm:$0xf]
        %v462 = vld [vmem:[%s1 + $0x2c] sm:$0xf]
        %v463 = vld [vmem:[%s1 + $0x30] sm:$0xf]
        %v464 = vld [vmem:[%s1 + $0x34] sm:$0xf]
        %v465 = vld [vmem:[%s1 + $0x38] sm:$0xf]
        %v466 = vld [vmem:[%s1 + $0x3c] sm:$0xf]
        %v467 = vld [vmem:[%s1 + $0x40] sm:$0xf]
        %v468 = vld [vmem:[%s1 + $0x44] sm:$0xf]
        %v469 = vld [vmem:[%s1 + $0x48] sm:$0xf]
        %v470 = vld [vmem:[%s1 + $0x4c] sm:$0xf]
        %v471 = vld [vmem:[%s1 + $0x50] sm:$0xf]
        %v472 = vld [vmem:[%s1 + $0x54] sm:$0xf]
        %v473 = vld [vmem:[%s1 + $0x58] sm:$0xf]
        %v474 = vld [vmem:[%s1 + $0x5c] sm:$0xf]
        %v475 = vld [vmem:[%s1 + $0x60] sm:$0xf]
        %v476 = vld [vmem:[%s1 + $0x64] sm:$0xf]
        %v477 = vld [vmem:[%s1 + $0x68] sm:$0xf]
        %v478 = vld [vmem:[%s1 + $0x6c] sm:$0xf]
        %v479 = vld [vmem:[%s1 + $0x70] sm:$0xf]
        %v480 = vld [vmem:[%s1 + $0x74] sm:$0xf]
        %v481 = vld [vmem:[%s1 + $0x78] sm:$0xf]
        %v482 = vld [vmem:[%s1 + $0x7c] sm:$0xf]
        %v483 = vld [vmem:[%s1 + $0x80] sm:$0xf]
        %v484 = vld [vmem:[%s1 + $0x84] sm:$0xf]
        %v485 = vld [vmem:[%s1 + $0x88] sm:$0xf]
        %v486 = vld [vmem:[%s1 + $0x8c] sm:$0xf]
        %v487 = vld [vmem:[%s1 + $0x90] sm:$0xf]
        %v488 = vld [vmem:[%s1 + $0x94] sm:$0xf]
        %v489 = vld [vmem:[%s1 + $0x98] sm:$0xf]
        %v490 = vld [vmem:[%s1 + $0x9c] sm:$0xf]
        %v491 = vld [vmem:[%s1 + $0xa0] sm:$0xf]
        %v492 = vld [vmem:[%s1 + $0xa4] sm:$0xf]
        %v493 = vld [vmem:[%s1 + $0xa8] sm:$0xf]
        %v494 = vld [vmem:[%s1 + $0xac] sm:$0xf]
        %v495 = vld [vmem:[%s1 + $0xb0] sm:$0xf]
        %v496 = vld [vmem:[%s1 + $0xb4] sm:$0xf]
        %v497 = vld [vmem:[%s1 + $0xb8] sm:$0xf]
        %v498 = vld [vmem:[%s1 + $0xbc] sm:$0xf]
        %v499 = vld [vmem:[%s2] sm:$0x1]
        %v501 = vlaneseq
        %v502 = vshrl.u32 %v501, 7
        %v503 = vsub.s32 0, %v502
        %v504 = vrot.slane %v499, %v503
        %v554 = vunpack.c.l.b16 %v451
        %v555 = vunpack.c.l.b16 %v452
        %v556 = vunpack.c.l.b16 %v453
        %v557 = vunpack.c.l.b16 %v454
        %v558 = vunpack.c.l.b16 %v455
        %v559 = vunpack.c.l.b16 %v456
        %v560 = vunpack.c.l.b16 %v457
        %v561 = vunpack.c.l.b16 %v458
        %v562 = vunpack.c.l.b16 %v459
        %v563 = vunpack.c.l.b16 %v460
        %v564 = vunpack.c.l.b16 %v461
        %v565 = vunpack.c.l.b16 %v462
        %v566 = vunpack.c.l.b16 %v463
        %v567 = vunpack.c.l.b16 %v464
        %v568 = vunpack.c.l.b16 %v465
        %v569 = vunpack.c.l.b16 %v466
        %v570 = vunpack.c.l.b16 %v467
        %v571 = vunpack.c.l.b16 %v468
        %v572 = vunpack.c.l.b16 %v469
        %v573 = vunpack.c.l.b16 %v470
        %v574 = vunpack.c.l.b16 %v471
        %v575 = vunpack.c.l.b16 %v472
        %v576 = vunpack.c.l.b16 %v473
        %v577 = vunpack.c.l.b16 %v474
        %v578 = vunpack.c.l.b16 %v475
        %v579 = vunpack.c.l.b16 %v476
        %v580 = vunpack.c.l.b16 %v477
        %v581 = vunpack.c.l.b16 %v478
        %v582 = vunpack.c.l.b16 %v479
        %v583 = vunpack.c.l.b16 %v480
        %v584 = vunpack.c.l.b16 %v481
        %v585 = vunpack.c.l.b16 %v482
        %v586 = vunpack.c.l.b16 %v483
        %v587 = vunpack.c.l.b16 %v484
        %v588 = vunpack.c.l.b16 %v485
        %v589 = vunpack.c.l.b16 %v486
        %v590 = vunpack.c.l.b16 %v487
        %v591 = vunpack.c.l.b16 %v488
        %v592 = vunpack.c.l.b16 %v489
        %v593 = vunpack.c.l.b16 %v490
        %v594 = vunpack.c.l.b16 %v491
        %v595 = vunpack.c.l.b16 %v492
        %v596 = vunpack.c.l.b16 %v493
        %v597 = vunpack.c.l.b16 %v494
        %v598 = vunpack.c.l.b16 %v495
        %v599 = vunpack.c.l.b16 %v496
        %v600 = vunpack.c.l.b16 %v497
        %v601 = vunpack.c.l.b16 %v498
        %v602 = vpack.c.b16 %v555, %v554
        %v603 = vpack.c.b16 %v557, %v556
        %v604 = vpack.c.b16 %v559, %v558
        %v605 = vpack.c.b16 %v561, %v560
        %v606 = vpack.c.b16 %v563, %v562
        %v607 = vpack.c.b16 %v565, %v564
        %v608 = vpack.c.b16 %v567, %v566
        %v609 = vpack.c.b16 %v569, %v568
        %v610 = vpack.c.b16 %v571, %v570
        %v611 = vpack.c.b16 %v573, %v572
        %v612 = vpack.c.b16 %v575, %v574
        %v613 = vpack.c.b16 %v577, %v576
        %v614 = vpack.c.b16 %v579, %v578
        %v615 = vpack.c.b16 %v581, %v580
        %v616 = vpack.c.b16 %v583, %v582
        %v617 = vpack.c.b16 %v585, %v584
        %v618 = vpack.c.b16 %v587, %v586
        %v619 = vpack.c.b16 %v589, %v588
        %v620 = vpack.c.b16 %v591, %v590
        %v621 = vpack.c.b16 %v593, %v592
        %v622 = vpack.c.b16 %v595, %v594
        %v623 = vpack.c.b16 %v597, %v596
        %v624 = vpack.c.b16 %v599, %v598
        %v625 = vpack.c.b16 %v601, %v600
        %650 = vmatprep.subr.bf16.mxu0 0
        %651 = vmatpush1.bf16.msra.mxu0 %v602
        %652 = vmatprep.subr.bf16.mxu0 0
        %653 = vmatpush1.bf16.msra.mxu0 %v603
        %654 = vmatprep.subr.bf16.mxu0 0
        %655 = vmatpush1.bf16.msra.mxu0 %v604
        %656 = vmatprep.subr.bf16.mxu0 0
        %657 = vmatpush1.bf16.msra.mxu0 %v605
        %658 = vmatprep.subr.bf16.mxu0 0
        %659 = vmatpush1.bf16.msra.mxu0 %v606
        %660 = vmatprep.subr.bf16.mxu0 0
        %661 = vmatpush1.bf16.msra.mxu0 %v607
        %662 = vmatprep.subr.bf16.mxu0 0
        %663 = vmatpush1.bf16.msra.mxu0 %v608
        %664 = vmatprep.subr.bf16.mxu0 0
        %665 = vmatpush1.bf16.msra.mxu0 %v609
        %666 = vmatprep.subr.bf16.mxu0 0
        %667 = vmatpush1.bf16.msra.mxu0 %v610
        %668 = vmatprep.subr.bf16.mxu0 0
        %669 = vmatpush1.bf16.msra.mxu0 %v611
        %670 = vmatprep.subr.bf16.mxu0 0
        %671 = vmatpush1.bf16.msra.mxu0 %v612
        %672 = vmatprep.subr.bf16.mxu0 0
        %673 = vmatpush1.bf16.msra.mxu0 %v613
        %674 = vmatprep.subr.bf16.mxu0 0
        %675 = vmatpush1.bf16.msra.mxu0 %v614
        %676 = vmatprep.subr.bf16.mxu0 0
        %677 = vmatpush1.bf16.msra.mxu0 %v615
        %678 = vmatprep.subr.bf16.mxu0 0
        %679 = vmatpush1.bf16.msra.mxu0 %v616
        %680 = vmatprep.subr.bf16.mxu0 0
        %681 = vmatpush1.bf16.msra.mxu0 %v617
        %682 = vmatprep.mubr.bf16.mxu0 %v435
        %683 = vmatmul.mubr.bf16.gmra.mrb[0].mxu0 %v434
        %v684 = vpop.f32.mrb[0].mxu0
        %v685 = vadd.f32 %v504, %v684
        %v686 = vpop.f32.mrb[0].mxu0
        %v687 = vpop.f32.mrb[0].mxu0
        %v688 = vadd.f32 %v504, %v687
        %v689 = vpop.f32.mrb[0].mxu0
        %690 = vmatprep.mubr.bf16.mxu0 %v437
        %691 = vmatmul.mubr.bf16.gmra.mrb[0].mxu0 %v436
        %v692 = vpop.f32.mrb[0].mxu0
        %v693 = vadd.f32 %v504, %v692
        %v694 = vpop.f32.mrb[0].mxu0
        %v695 = vpop.f32.mrb[0].mxu0
        %v696 = vadd.f32 %v504, %v695
        %v697 = vpop.f32.mrb[0].mxu0
        %698 = vmatprep.mubr.bf16.mxu0 %v439
        %699 = vmatmul.mubr.bf16.gmra.mrb[0].mxu0 %v438
        %v700 = vpop.f32.mrb[0].mxu0
        %v701 = vadd.f32 %v504, %v700
        %v702 = vpop.f32.mrb[0].mxu0
        %v703 = vpop.f32.mrb[0].mxu0
        %v704 = vadd.f32 %v504, %v703
        %v705 = vpop.f32.mrb[0].mxu0
        %706 = vmatprep.mubr.bf16.mxu0 %v441
        %707 = vmatmul.mubr.bf16.gmra.mrb[0].mxu0 %v440
        %v708 = vpop.f32.mrb[0].mxu0
        %v709 = vadd.f32 %v504, %v708
        %v710 = vpop.f32.mrb[0].mxu0
        %v711 = vpop.f32.mrb[0].mxu0
        %v712 = vadd.f32 %v504, %v711
        %v713 = vpop.f32.mrb[0].mxu0
        %714 = vmatprep.mubr.bf16.mxu0 %v443
        %715 = vmatmul.mubr.bf16.gmra.mrb[0].mxu0 %v442
        %v716 = vpop.f32.mrb[0].mxu0
        %v717 = vadd.f32 %v504, %v716
        %v718 = vpop.f32.mrb[0].mxu0
        %v719 = vpop.f32.mrb[0].mxu0
        %v720 = vadd.f32 %v504, %v719
        %v721 = vpop.f32.mrb[0].mxu0
        %722 = vmatprep.mubr.bf16.mxu0 %v445
        %723 = vmatmul.mubr.bf16.gmra.mrb[0].mxu0 %v444
        %v724 = vpop.f32.mrb[0].mxu0
        %v725 = vadd.f32 %v504, %v724
        %v726 = vpop.f32.mrb[0].mxu0
        %v727 = vpop.f32.mrb[0].mxu0
        %v728 = vadd.f32 %v504, %v727
        %v729 = vpop.f32.mrb[0].mxu0
        %730 = vmatprep.mubr.bf16.mxu0 %v447
        %731 = vmatmul.mubr.bf16.gmra.mrb[0].mxu0 %v446
        %v732 = vpop.f32.mrb[0].mxu0
        %v733 = vadd.f32 %v504, %v732
        %v734 = vpop.f32.mrb[0].mxu0
        %v735 = vpop.f32.mrb[0].mxu0
        %v736 = vadd.f32 %v504, %v735
        %v737 = vpop.f32.mrb[0].mxu0
        %738 = vmatprep.mubr.bf16.mxu0 %v449
        %739 = vmatmul.mubr.bf16.gmra.mrb[0].mxu0 %v448
        %v740 = vpop.f32.mrb[0].mxu0
        %v741 = vadd.f32 %v504, %v740
        %v742 = vpop.f32.mrb[0].mxu0
        %v743 = vpop.f32.mrb[0].mxu0
        %v744 = vadd.f32 %v504, %v743
        %v745 = vpop.f32.mrb[0].mxu0
        %746 = vdwg.mxu0
        %747 = vmatprep.subr.bf16.mxu0 0
        %748 = vmatpush1.bf16.msra.mxu0 %v618
        %749 = vmatprep.subr.bf16.mxu0 0
        %750 = vmatpush1.bf16.msra.mxu0 %v619
        %751 = vmatprep.subr.bf16.mxu0 0
        %752 = vmatpush1.bf16.msra.mxu0 %v620
        %753 = vmatprep.subr.bf16.mxu0 0
        %754 = vmatpush1.bf16.msra.mxu0 %v621
        %755 = vmatprep.subr.bf16.mxu0 0
        %756 = vmatpush1.bf16.msra.mxu0 %v622
        %757 = vmatprep.subr.bf16.mxu0 0
        %758 = vmatpush1.bf16.msra.mxu0 %v623
        %759 = vmatprep.subr.bf16.mxu0 0
        %760 = vmatpush1.bf16.msra.mxu0 %v624
        %761 = vmatprep.subr.bf16.mxu0 0
        %762 = vmatpush1.bf16.msra.mxu0 %v625
        %763 = vmatprep.subr.bf16.mxu0 0
        %764 = vmatpush1.bf16.msra.mxu0 0
        %765 = vmatprep.subr.bf16.mxu0 0
        %766 = vmatpush1.bf16.msra.mxu0 0
        %767 = vmatprep.subr.bf16.mxu0 0
        %768 = vmatpush1.bf16.msra.mxu0 0
        %769 = vmatprep.subr.bf16.mxu0 0
        %770 = vmatpush1.bf16.msra.mxu0 0
        %771 = vmatprep.subr.bf16.mxu0 0
        %772 = vmatpush1.bf16.msra.mxu0 0
        %773 = vmatprep.subr.bf16.mxu0 0
        %774 = vmatpush1.bf16.msra.mxu0 0
        %775 = vmatprep.subr.bf16.mxu0 0
        %776 = vmatpush1.bf16.msra.mxu0 0
        %777 = vmatprep.subr.bf16.mxu0 0
        %778 = vmatpush1.bf16.msra.mxu0 0
        %779 = vmatprep.mubr.bf16.mxu0 0
        %780 = vmatmul.mubr.bf16.gmra.mrb[0].mxu0 %v436
        %v781 = vpop.f32.mrb[0].mxu0
        %v782 = vadd.f32 %v685, %v781
        %v783 = vpop.f32.mrb[0].mxu0
        %v784 = vpop.f32.mrb[0].mxu0
        %v785 = vadd.f32 %v688, %v784
        %v786 = vpop.f32.mrb[0].mxu0
        %787 = vmatprep.mubr.bf16.mxu0 0
        %788 = vmatmul.mubr.bf16.gmra.mrb[0].mxu0 %v438
        %v789 = vpop.f32.mrb[0].mxu0
        %v790 = vadd.f32 %v693, %v789
        %v791 = vpop.f32.mrb[0].mxu0
        %v792 = vpop.f32.mrb[0].mxu0
        %v793 = vadd.f32 %v696, %v792
        %v794 = vpop.f32.mrb[0].mxu0
        %795 = vmatprep.mubr.bf16.mxu0 0
        %796 = vmatmul.mubr.bf16.gmra.mrb[0].mxu0 %v440
        %v797 = vpop.f32.mrb[0].mxu0
        %v798 = vadd.f32 %v701, %v797
        %v799 = vpop.f32.mrb[0].mxu0
        %v800 = vpop.f32.mrb[0].mxu0
        %v801 = vadd.f32 %v704, %v800
        %v802 = vpop.f32.mrb[0].mxu0
        %803 = vmatprep.mubr.bf16.mxu0 0
        %804 = vmatmul.mubr.bf16.gmra.mrb[0].mxu0 %v442
        %v805 = vpop.f32.mrb[0].mxu0
        %v806 = vadd.f32 %v709, %v805
        %v807 = vpop.f32.mrb[0].mxu0
        %v808 = vpop.f32.mrb[0].mxu0
        %v809 = vadd.f32 %v712, %v808
        %v810 = vpop.f32.mrb[0].mxu0
        %811 = vmatprep.mubr.bf16.mxu0 0
        %812 = vmatmul.mubr.bf16.gmra.mrb[0].mxu0 %v444
        %v813 = vpop.f32.mrb[0].mxu0
        %v814 = vadd.f32 %v717, %v813
        %v815 = vpop.f32.mrb[0].mxu0
        %v816 = vpop.f32.mrb[0].mxu0
        %v817 = vadd.f32 %v720, %v816
        %v818 = vpop.f32.mrb[0].mxu0
        %819 = vmatprep.mubr.bf16.mxu0 0
        %820 = vmatmul.mubr.bf16.gmra.mrb[0].mxu0 %v446
        %v821 = vpop.f32.mrb[0].mxu0
        %v822 = vadd.f32 %v725, %v821
        %v823 = vpop.f32.mrb[0].mxu0
        %v824 = vpop.f32.mrb[0].mxu0
        %v825 = vadd.f32 %v728, %v824
        %v826 = vpop.f32.mrb[0].mxu0
        %827 = vmatprep.mubr.bf16.mxu0 0
        %828 = vmatmul.mubr.bf16.gmra.mrb[0].mxu0 %v448
        %v829 = vpop.f32.mrb[0].mxu0
        %v830 = vadd.f32 %v733, %v829
        %v831 = vpop.f32.mrb[0].mxu0
        %v832 = vpop.f32.mrb[0].mxu0
        %v833 = vadd.f32 %v736, %v832
        %v834 = vpop.f32.mrb[0].mxu0
        %835 = vmatprep.mubr.bf16.mxu0 0
        %836 = vmatmul.mubr.bf16.gmra.mrb[0].mxu0 %v450
        %v837 = vpop.f32.mrb[0].mxu0
        %v838 = vadd.f32 %v741, %v837
        %v839 = vpop.f32.mrb[0].mxu0
        %v840 = vpop.f32.mrb[0].mxu0
        %v841 = vadd.f32 %v744, %v840
        %v842 = vpop.f32.mrb[0].mxu0
        %843 = vdwg.mxu0
        %v844 = vmax.f32 %v782, 0.0
        %v845 = vmax.f32 %v785, 0.0
        %v846 = vmax.f32 %v790, 0.0
        %v847 = vmax.f32 %v793, 0.0
        %v848 = vmax.f32 %v798, 0.0
        %v849 = vmax.f32 %v801, 0.0
        %v850 = vmax.f32 %v806, 0.0
        %v851 = vmax.f32 %v809, 0.0
        %v852 = vmax.f32 %v814, 0.0
        %v853 = vmax.f32 %v817, 0.0
        %v854 = vmax.f32 %v822, 0.0
        %v855 = vmax.f32 %v825, 0.0
        %v856 = vmax.f32 %v830, 0.0
        %v857 = vmax.f32 %v833, 0.0
        %v858 = vmax.f32 %v838, 0.0
        %v859 = vmax.f32 %v841, 0.0
        %v860 = vmax.f32 %v844, %v845
        %v861 = vmax.f32 %v846, %v847
        %v862 = vmax.f32 %v848, %v849
        %v863 = vmax.f32 %v850, %v851
        %v864 = vmax.f32 %v852, %v853
        %v865 = vmax.f32 %v854, %v855
        %v866 = vmax.f32 %v856, %v857
        %v867 = vmax.f32 %v858, %v859
        %v868 = vpack.c.bf16 %v861, %v860
        %v869 = vpack.c.bf16 %v863, %v862
        %v870 = vpack.c.bf16 %v865, %v864
        %v871 = vpack.c.bf16 %v867, %v866
        %v872 = vld [vmem:[#allocation3] sm:$0xff]
        %v873 = vld [vmem:[#allocation3 + $0x8] sm:$0xff]
        %v874 = vld [vmem:[#allocation3 + $0x10] sm:$0xff]
        %v875 = vld [vmem:[#allocation3 + $0x18] sm:$0xff]
        %v876 = vld [vmem:[#allocation3 + $0x20] sm:$0xff]
        %v877 = vld [vmem:[#allocation3 + $0x28] sm:$0xff]
        %v878 = vld [vmem:[#allocation3 + $0x30] sm:$0xff]
        %v879 = vld [vmem:[#allocation3 + $0x38] sm:$0xff]
        %v880 = vld [vmem:[#allocation3 + $0x40] sm:$0xff]
        %v881 = vld [vmem:[#allocation3 + $0x48] sm:$0xff]
        %v882 = vld [vmem:[#allocation3 + $0x50] sm:$0xff]
        %v883 = vld [vmem:[#allocation3 + $0x58] sm:$0xff]
        %v884 = vld [vmem:[#allocation3 + $0x60] sm:$0xff]
        %v885 = vld [vmem:[#allocation3 + $0x68] sm:$0xff]
        %v886 = vld [vmem:[#allocation3 + $0x70] sm:$0xff]
        %v887 = vld [vmem:[#allocation3 + $0x78] sm:$0xff]
        %v888 = vld [vmem:[%s6] sm:$0xf]
        %v890 = vlaneseq
        %v891 = vshrl.u32 %v890, 7
        %v892 = vsub.s32 0, %v891
        %v893 = vrot.slane %v888, %v892
        %v894 = vlaneseq
        %v895 = vshrl.u32 %v894, 7
        %v896 = vsub.s32 1, %v895
        %v897 = vrot.slane %v888, %v896
        %v898 = vlaneseq
        %v899 = vshrl.u32 %v898, 7
        %v900 = vsub.s32 2, %v899
        %v901 = vrot.slane %v888, %v900
        %v902 = vlaneseq
        %v903 = vshrl.u32 %v902, 7
        %v904 = vsub.s32 3, %v903
        %v905 = vrot.slane %v888, %v904
        %v926 = vunpack.c.l.b16 %v872
        %v927 = vunpack.c.h.b16 %v872
        %v928 = vunpack.c.l.b16 %v873
        %v929 = vunpack.c.h.b16 %v873
        %v930 = vunpack.c.l.b16 %v874
        %v931 = vunpack.c.h.b16 %v874
        %v932 = vunpack.c.l.b16 %v875
        %v933 = vunpack.c.h.b16 %v875
        %v934 = vunpack.c.l.b16 %v876
        %v935 = vunpack.c.h.b16 %v876
        %v936 = vunpack.c.l.b16 %v877
        %v937 = vunpack.c.h.b16 %v877
        %v938 = vunpack.c.l.b16 %v878
        %v939 = vunpack.c.h.b16 %v878
        %v940 = vunpack.c.l.b16 %v879
        %v941 = vunpack.c.h.b16 %v879
        %v942 = vunpack.c.l.b16 %v880
        %v943 = vunpack.c.h.b16 %v880
        %v944 = vunpack.c.l.b16 %v881
        %v945 = vunpack.c.h.b16 %v881
        %v946 = vunpack.c.l.b16 %v882
        %v947 = vunpack.c.h.b16 %v882
        %v948 = vunpack.c.l.b16 %v883
        %v949 = vunpack.c.h.b16 %v883
        %v950 = vunpack.c.l.b16 %v884
        %v951 = vunpack.c.h.b16 %v884
        %v952 = vunpack.c.l.b16 %v885
        %v953 = vunpack.c.h.b16 %v885
        %v954 = vunpack.c.l.b16 %v886
        %v955 = vunpack.c.h.b16 %v886
        %v956 = vunpack.c.l.b16 %v887
        %v957 = vunpack.c.h.b16 %v887
        %v958 = vpack.c.b16 %v930, %v926
        %v959 = vpack.c.b16 %v931, %v927
        %v960 = vpack.c.b16 %v932, %v928
        %v961 = vpack.c.b16 %v933, %v929
        %v962 = vpack.c.b16 %v938, %v934
        %v963 = vpack.c.b16 %v939, %v935
        %v964 = vpack.c.b16 %v940, %v936
        %v965 = vpack.c.b16 %v941, %v937
        %v966 = vpack.c.b16 %v946, %v942
        %v967 = vpack.c.b16 %v947, %v943
        %v968 = vpack.c.b16 %v948, %v944
        %v969 = vpack.c.b16 %v949, %v945
        %v970 = vpack.c.b16 %v954, %v950
        %v971 = vpack.c.b16 %v955, %v951
        %v972 = vpack.c.b16 %v956, %v952
        %v973 = vpack.c.b16 %v957, %v953
        %vm990 = vcmask 523264
        %v992 = vsel %vm990, %v868, 0
        %v995 = vsel %vm990, %v869, 0
        %v998 = vsel %vm990, %v870, 0
        %v1001 = vsel %vm990, %v871, 0
        %1003 = vmatprep.subr.bf16.mxu0 %v959
        %1004 = vmatpush1.bf16.msra.mxu0 %v958
        %1005 = vmatprep.subr.bf16.mxu0 %v963
        %1006 = vmatpush1.bf16.msra.mxu0 %v962
        %1007 = vmatprep.subr.bf16.mxu0 %v967
        %1008 = vmatpush1.bf16.msra.mxu0 %v966
        %1009 = vmatprep.subr.bf16.mxu0 %v971
        %1010 = vmatpush1.bf16.msra.mxu0 %v970
        %1011 = vmatprep.subr.bf16.mxu0 0
        %1012 = vmatpush1.bf16.msra.mxu0 0
        %1013 = vmatprep.subr.bf16.mxu0 0
        %1014 = vmatpush1.bf16.msra.mxu0 0
        %1015 = vmatprep.subr.bf16.mxu0 0
        %1016 = vmatpush1.bf16.msra.mxu0 0
        %1017 = vmatprep.subr.bf16.mxu0 0
        %1018 = vmatpush1.bf16.msra.mxu0 0
        %1019 = vmatprep.subr.bf16.mxu0 0
        %1020 = vmatpush1.bf16.msra.mxu0 0
        %1021 = vmatprep.subr.bf16.mxu0 0
        %1022 = vmatpush1.bf16.msra.mxu0 0
        %1023 = vmatprep.subr.bf16.mxu0 0
        %1024 = vmatpush1.bf16.msra.mxu0 0
        %1025 = vmatprep.subr.bf16.mxu0 0
        %1026 = vmatpush1.bf16.msra.mxu0 0
        %1027 = vmatprep.subr.bf16.mxu0 0
        %1028 = vmatpush1.bf16.msra.mxu0 0
        %1029 = vmatprep.subr.bf16.mxu0 0
        %1030 = vmatpush1.bf16.msra.mxu0 0
        %1031 = vmatprep.subr.bf16.mxu0 0
        %1032 = vmatpush1.bf16.msra.mxu0 0
        %1033 = vmatprep.subr.bf16.mxu0 0
        %1034 = vmatpush1.bf16.msra.mxu0 0
        %1035 = vmatprep.mubr.bf16.mxu0 0
        %1036 = vmatmul.mubr.bf16.gmra.mrb[0].mxu0 %v992
        %v1037 = vpop.f32.mrb[0].mxu0
        %v1038 = vadd.f32 %v893, %v1037
        %v1039 = vpop.f32.mrb[0].mxu0
        %v1040 = vadd.f32 %v897, %v1039
        %v1041 = vpop.f32.mrb[0].mxu0
        %v1042 = vadd.f32 %v893, %v1041
        %v1043 = vpop.f32.mrb[0].mxu0
        %v1044 = vadd.f32 %v897, %v1043
        %1045 = vmatprep.mubr.bf16.mxu0 0
        %1046 = vmatmul.mubr.bf16.gmra.mrb[0].mxu0 %v995
        %v1047 = vpop.f32.mrb[0].mxu0
        %v1048 = vadd.f32 %v893, %v1047
        %v1049 = vpop.f32.mrb[0].mxu0
        %v1050 = vadd.f32 %v897, %v1049
        %v1051 = vpop.f32.mrb[0].mxu0
        %v1052 = vadd.f32 %v893, %v1051
        %v1053 = vpop.f32.mrb[0].mxu0
        %v1054 = vadd.f32 %v897, %v1053
        %1055 = vmatprep.mubr.bf16.mxu0 0
        %1056 = vmatmul.mubr.bf16.gmra.mrb[0].mxu0 %v998
        %v1057 = vpop.f32.mrb[0].mxu0
        %v1058 = vadd.f32 %v893, %v1057
        %v1059 = vpop.f32.mrb[0].mxu0
        %v1060 = vadd.f32 %v897, %v1059
        %v1061 = vpop.f32.mrb[0].mxu0
        %v1062 = vadd.f32 %v893, %v1061
        %v1063 = vpop.f32.mrb[0].mxu0
        %v1064 = vadd.f32 %v897, %v1063
        %1065 = vmatprep.mubr.bf16.mxu0 0
        %1066 = vmatmul.mubr.bf16.gmra.mrb[0].mxu0 %v1001
        %v1067 = vpop.f32.mrb[0].mxu0
        %v1068 = vadd.f32 %v893, %v1067
        %v1069 = vpop.f32.mrb[0].mxu0
        %v1070 = vadd.f32 %v897, %v1069
        %v1071 = vpop.f32.mrb[0].mxu0
        %v1072 = vadd.f32 %v893, %v1071
        %v1073 = vpop.f32.mrb[0].mxu0
        %v1074 = vadd.f32 %v897, %v1073
        %1075 = vdwg.mxu0
        %1076 = vmatprep.subr.bf16.mxu0 %v961
        %1077 = vmatpush1.bf16.msra.mxu0 %v960
        %1078 = vmatprep.subr.bf16.mxu0 %v965
        %1079 = vmatpush1.bf16.msra.mxu0 %v964
        %1080 = vmatprep.subr.bf16.mxu0 %v969
        %1081 = vmatpush1.bf16.msra.mxu0 %v968
        %1082 = vmatprep.subr.bf16.mxu0 %v973
        %1083 = vmatpush1.bf16.msra.mxu0 %v972
        %1084 = vmatprep.subr.bf16.mxu0 0
        %1085 = vmatpush1.bf16.msra.mxu0 0
        %1086 = vmatprep.subr.bf16.mxu0 0
        %1087 = vmatpush1.bf16.msra.mxu0 0
        %1088 = vmatprep.subr.bf16.mxu0 0
        %1089 = vmatpush1.bf16.msra.mxu0 0
        %1090 = vmatprep.subr.bf16.mxu0 0
        %1091 = vmatpush1.bf16.msra.mxu0 0
        %1092 = vmatprep.subr.bf16.mxu0 0
        %1093 = vmatpush1.bf16.msra.mxu0 0
        %1094 = vmatprep.subr.bf16.mxu0 0
        %1095 = vmatpush1.bf16.msra.mxu0 0
        %1096 = vmatprep.subr.bf16.mxu0 0
        %1097 = vmatpush1.bf16.msra.mxu0 0
        %1098 = vmatprep.subr.bf16.mxu0 0
        %1099 = vmatpush1.bf16.msra.mxu0 0
        %1100 = vmatprep.subr.bf16.mxu0 0
        %1101 = vmatpush1.bf16.msra.mxu0 0
        %1102 = vmatprep.subr.bf16.mxu0 0
        %1103 = vmatpush1.bf16.msra.mxu0 0
        %1104 = vmatprep.subr.bf16.mxu0 0
        %1105 = vmatpush1.bf16.msra.mxu0 0
        %1106 = vmatprep.subr.bf16.mxu0 0
        %1107 = vmatpush1.bf16.msra.mxu0 0
        %1108 = vmatprep.mubr.bf16.mxu0 0
        %1109 = vmatmul.mubr.bf16.gmra.mrb[0].mxu0 %v992
        %v1110 = vpop.f32.mrb[0].mxu0
        %v1111 = vadd.f32 %v901, %v1110
        %v1112 = vpop.f32.mrb[0].mxu0
        %v1113 = vadd.f32 %v905, %v1112
        %v1114 = vpop.f32.mrb[0].mxu0
        %v1115 = vadd.f32 %v901, %v1114
        %v1116 = vpop.f32.mrb[0].mxu0
        %v1117 = vadd.f32 %v905, %v1116
        %1118 = vmatprep.mubr.bf16.mxu0 0
        %1119 = vmatmul.mubr.bf16.gmra.mrb[0].mxu0 %v995
        %v1120 = vpop.f32.mrb[0].mxu0
        %v1121 = vadd.f32 %v901, %v1120
        %v1122 = vpop.f32.mrb[0].mxu0
        %v1123 = vadd.f32 %v905, %v1122
        %v1124 = vpop.f32.mrb[0].mxu0
        %v1125 = vadd.f32 %v901, %v1124
        %v1126 = vpop.f32.mrb[0].mxu0
        %v1127 = vadd.f32 %v905, %v1126
        %1128 = vmatprep.mubr.bf16.mxu0 0
        %1129 = vmatmul.mubr.bf16.gmra.mrb[0].mxu0 %v998
        %v1130 = vpop.f32.mrb[0].mxu0
        %v1131 = vadd.f32 %v901, %v1130
        %v1132 = vpop.f32.mrb[0].mxu0
        %v1133 = vadd.f32 %v905, %v1132
        %v1134 = vpop.f32.mrb[0].mxu0
        %v1135 = vadd.f32 %v901, %v1134
        %v1136 = vpop.f32.mrb[0].mxu0
        %v1137 = vadd.f32 %v905, %v1136
        %1138 = vmatprep.mubr.bf16.mxu0 0
        %1139 = vmatmul.mubr.bf16.gmra.mrb[0].mxu0 %v1001
        %v1140 = vpop.f32.mrb[0].mxu0
        %v1141 = vadd.f32 %v901, %v1140
        %v1142 = vpop.f32.mrb[0].mxu0
        %v1143 = vadd.f32 %v905, %v1142
        %v1144 = vpop.f32.mrb[0].mxu0
        %v1145 = vadd.f32 %v901, %v1144
        %v1146 = vpop.f32.mrb[0].mxu0
        %v1147 = vadd.f32 %v905, %v1146
        %1148 = vdwg.mxu0
        %1149 = vst [vmem:[#allocation2] sm:$0xff] %v1038
        %1150 = vst [vmem:[#allocation2 + $0x8] sm:$0xff] %v1040
        %1151 = vst [vmem:[#allocation2 + $0x10] sm:$0xff] %v1111
        %1152 = vst [vmem:[#allocation2 + $0x18] sm:$0xff] %v1113
        %1153 = vst [vmem:[#allocation2 + $0x20] sm:$0xff] %v1042
        %1154 = vst [vmem:[#allocation2 + $0x28] sm:$0xff] %v1044
        %1155 = vst [vmem:[#allocation2 + $0x30] sm:$0xff] %v1115
        %1156 = vst [vmem:[#allocation2 + $0x38] sm:$0xff] %v1117
        %1157 = vst [vmem:[#allocation2 + $0x40] sm:$0xff] %v1048
        %1158 = vst [vmem:[#allocation2 + $0x48] sm:$0xff] %v1050
        %1159 = vst [vmem:[#allocation2 + $0x50] sm:$0xff] %v1121
        %1160 = vst [vmem:[#allocation2 + $0x58] sm:$0xff] %v1123
        %1161 = vst [vmem:[#allocation2 + $0x60] sm:$0xff] %v1052
        %1162 = vst [vmem:[#allocation2 + $0x68] sm:$0xff] %v1054
        %1163 = vst [vmem:[#allocation2 + $0x70] sm:$0xff] %v1125
        %1164 = vst [vmem:[#allocation2 + $0x78] sm:$0xff] %v1127
        %1165 = vst [vmem:[#allocation2 + $0x80] sm:$0xff] %v1058
        %1166 = vst [vmem:[#allocation2 + $0x88] sm:$0xff] %v1060
        %1167 = vst [vmem:[#allocation2 + $0x90] sm:$0xff] %v1131
        %1168 = vst [vmem:[#allocation2 + $0x98] sm:$0xff] %v1133
        %1169 = vst [vmem:[#allocation2 + $0xa0] sm:$0xff] %v1062
        %1170 = vst [vmem:[#allocation2 + $0xa8] sm:$0xff] %v1064
        %1171 = vst [vmem:[#allocation2 + $0xb0] sm:$0xff] %v1135
        %1172 = vst [vmem:[#allocation2 + $0xb8] sm:$0xff] %v1137
        %1173 = vst [vmem:[#allocation2 + $0xc0] sm:$0xff] %v1068
        %1174 = vst [vmem:[#allocation2 + $0xc8] sm:$0xff] %v1070
        %1175 = vst [vmem:[#allocation2 + $0xd0] sm:$0xff] %v1141
        %1176 = vst [vmem:[#allocation2 + $0xd8] sm:$0xff] %v1143
        %1177 = vst [vmem:[#allocation2 + $0xe0] sm:$0xff] %v1072
        %1178 = vst [vmem:[#allocation2 + $0xe8] sm:$0xff] %v1074
        %1179 = vst [vmem:[#allocation2 + $0xf0] sm:$0xff] %v1145
        %1180 = vst [vmem:[#allocation2 + $0xf8] sm:$0xff] %v1147
        %v1181 = vpack.c.bf16 %v867, %v867
        %v1182 = vld [vmem:[#allocation6] sm:$0xff]
        %v1183 = vld [vmem:[#allocation6 + $0x8] sm:$0xff]
        %v1184 = vld [vmem:[#allocation6 + $0x10] sm:$0xff]
        %v1185 = vld [vmem:[#allocation6 + $0x18] sm:$0xff]
        %v1186 = vld [vmem:[#allocation6 + $0x20] sm:$0xff]
        %v1187 = vld [vmem:[#allocation6 + $0x28] sm:$0xff]
        %v1188 = vld [vmem:[#allocation6 + $0x30] sm:$0xff]
        %v1189 = vld [vmem:[#allocation6 + $0x38] sm:$0xff]
        %v1190 = vld [vmem:[#allocation6 + $0x40] sm:$0xff]
        %v1191 = vld [vmem:[#allocation6 + $0x48] sm:$0xff]
        %v1192 = vld [vmem:[#allocation6 + $0x50] sm:$0xff]
        %v1193 = vld [vmem:[#allocation6 + $0x58] sm:$0xff]
        %v1194 = vld [vmem:[#allocation6 + $0x60] sm:$0xff]
        %v1195 = vld [vmem:[#allocation6 + $0x68] sm:$0xff]
        %v1196 = vld [vmem:[#allocation6 + $0x70] sm:$0xff]
        %v1197 = vld [vmem:[#allocation6 + $0x78] sm:$0xff]
        %v1198 = vld [vmem:[%s7] sm:$0xf]
        %v1200 = vlaneseq
        %v1201 = vshrl.u32 %v1200, 7
        %v1202 = vsub.s32 0, %v1201
        %v1203 = vrot.slane %v1198, %v1202
        %v1204 = vlaneseq
        %v1205 = vshrl.u32 %v1204, 7
        %v1206 = vsub.s32 2, %v1205
        %v1207 = vrot.slane %v1198, %v1206
        %v1208 = vlaneseq
        %v1209 = vshrl.u32 %v1208, 7
        %v1210 = vsub.s32 3, %v1209
        %v1211 = vrot.slane %v1198, %v1210
        %v1231 = vunpack.c.l.b16 %v1182
        %v1232 = vunpack.c.h.b16 %v1182
        %v1233 = vunpack.c.l.b16 %v1183
        %v1234 = vunpack.c.h.b16 %v1183
        %v1235 = vunpack.c.l.b16 %v1184
        %v1236 = vunpack.c.h.b16 %v1184
        %v1237 = vunpack.c.l.b16 %v1185
        %v1238 = vunpack.c.h.b16 %v1185
        %v1239 = vunpack.c.l.b16 %v1186
        %v1240 = vunpack.c.h.b16 %v1186
        %v1241 = vunpack.c.l.b16 %v1187
        %v1242 = vunpack.c.h.b16 %v1187
        %v1243 = vunpack.c.l.b16 %v1188
        %v1244 = vunpack.c.h.b16 %v1188
        %v1245 = vunpack.c.l.b16 %v1189
        %v1246 = vunpack.c.h.b16 %v1189
        %v1247 = vunpack.c.l.b16 %v1190
        %v1248 = vunpack.c.h.b16 %v1190
        %v1249 = vunpack.c.l.b16 %v1191
        %v1250 = vunpack.c.h.b16 %v1191
        %v1251 = vunpack.c.l.b16 %v1192
        %v1252 = vunpack.c.h.b16 %v1192
        %v1253 = vunpack.c.l.b16 %v1193
        %v1254 = vunpack.c.h.b16 %v1193
        %v1255 = vunpack.c.l.b16 %v1194
        %v1256 = vunpack.c.h.b16 %v1194
        %v1257 = vunpack.c.l.b16 %v1195
        %v1258 = vunpack.c.h.b16 %v1195
        %v1259 = vunpack.c.l.b16 %v1196
        %v1260 = vunpack.c.h.b16 %v1196
        %v1261 = vunpack.c.l.b16 %v1197
        %v1262 = vunpack.c.h.b16 %v1197
        %v1263 = vpack.c.b16 %v1235, %v1231
        %v1264 = vpack.c.b16 %v1236, %v1232
        %v1265 = vpack.c.b16 %v1237, %v1233
        %v1266 = vpack.c.b16 %v1238, %v1234
        %v1267 = vpack.c.b16 %v1243, %v1239
        %v1268 = vpack.c.b16 %v1244, %v1240
        %v1269 = vpack.c.b16 %v1245, %v1241
        %v1270 = vpack.c.b16 %v1246, %v1242
        %v1271 = vpack.c.b16 %v1251, %v1247
        %v1272 = vpack.c.b16 %v1252, %v1248
        %v1273 = vpack.c.b16 %v1253, %v1249
        %v1274 = vpack.c.b16 %v1254, %v1250
        %v1275 = vpack.c.b16 %v1259, %v1255
        %v1276 = vpack.c.b16 %v1260, %v1256
        %v1277 = vpack.c.b16 %v1261, %v1257
        %v1278 = vpack.c.b16 %v1262, %v1258
        %v1296 = vsel %vm990, %v1181, 0
        %1298 = vmatprep.subr.bf16.mxu0 %v1264
        %1299 = vmatpush1.bf16.msra.mxu0 %v1263
        %1300 = vmatprep.subr.bf16.mxu0 %v1268
        %1301 = vmatpush1.bf16.msra.mxu0 %v1267
        %1302 = vmatprep.subr.bf16.mxu0 %v1272
        %1303 = vmatpush1.bf16.msra.mxu0 %v1271
        %1304 = vmatprep.subr.bf16.mxu0 %v1276
        %1305 = vmatpush1.bf16.msra.mxu0 %v1275
        %1306 = vmatprep.subr.bf16.mxu0 0
        %1307 = vmatpush1.bf16.msra.mxu0 0
        %1308 = vmatprep.subr.bf16.mxu0 0
        %1309 = vmatpush1.bf16.msra.mxu0 0
        %1310 = vmatprep.subr.bf16.mxu0 0
        %1311 = vmatpush1.bf16.msra.mxu0 0
        %1312 = vmatprep.subr.bf16.mxu0 0
        %1313 = vmatpush1.bf16.msra.mxu0 0
        %1314 = vmatprep.subr.bf16.mxu0 0
        %1315 = vmatpush1.bf16.msra.mxu0 0
        %1316 = vmatprep.subr.bf16.mxu0 0
        %1317 = vmatpush1.bf16.msra.mxu0 0
        %1318 = vmatprep.subr.bf16.mxu0 0
        %1319 = vmatpush1.bf16.msra.mxu0 0
        %1320 = vmatprep.subr.bf16.mxu0 0
        %1321 = vmatpush1.bf16.msra.mxu0 0
        %1322 = vmatprep.subr.bf16.mxu0 0
        %1323 = vmatpush1.bf16.msra.mxu0 0
        %1324 = vmatprep.subr.bf16.mxu0 0
        %1325 = vmatpush1.bf16.msra.mxu0 0
        %1326 = vmatprep.subr.bf16.mxu0 0
        %1327 = vmatpush1.bf16.msra.mxu0 0
        %1328 = vmatprep.subr.bf16.mxu0 0
        %1329 = vmatpush1.bf16.msra.mxu0 0
        %1330 = vmatprep.mubr.bf16.mxu0 0
        %1331 = vmatmul.mubr.bf16.gmra.mrb[0].mxu0 %v1296
        %v1332 = vpop.f32.mrb[0].mxu0
        %v1333 = vadd.f32 %v1203, %v1332
        %v1334 = vpop.f32.mrb[0].mxu0
        %v1335 = vpop.f32.mrb[0].mxu0
        %v1336 = vpop.f32.mrb[0].mxu0
        %1337 = vdwg.mxu0
        %1338 = vmatprep.subr.bf16.mxu0 %v1266
        %1339 = vmatpush1.bf16.msra.mxu0 %v1265
        %1340 = vmatprep.subr.bf16.mxu0 %v1270
        %1341 = vmatpush1.bf16.msra.mxu0 %v1269
        %1342 = vmatprep.subr.bf16.mxu0 %v1274
        %1343 = vmatpush1.bf16.msra.mxu0 %v1273
        %1344 = vmatprep.subr.bf16.mxu0 %v1278
        %1345 = vmatpush1.bf16.msra.mxu0 %v1277
        %1346 = vmatprep.subr.bf16.mxu0 0
        %1347 = vmatpush1.bf16.msra.mxu0 0
        %1348 = vmatprep.subr.bf16.mxu0 0
        %1349 = vmatpush1.bf16.msra.mxu0 0
        %1350 = vmatprep.subr.bf16.mxu0 0
        %1351 = vmatpush1.bf16.msra.mxu0 0
        %1352 = vmatprep.subr.bf16.mxu0 0
        %1353 = vmatpush1.bf16.msra.mxu0 0
        %1354 = vmatprep.subr.bf16.mxu0 0
        %1355 = vmatpush1.bf16.msra.mxu0 0
        %1356 = vmatprep.subr.bf16.mxu0 0
        %1357 = vmatpush1.bf16.msra.mxu0 0
        %1358 = vmatprep.subr.bf16.mxu0 0
        %1359 = vmatpush1.bf16.msra.mxu0 0
        %1360 = vmatprep.subr.bf16.mxu0 0
        %1361 = vmatpush1.bf16.msra.mxu0 0
        %1362 = vmatprep.subr.bf16.mxu0 0
        %1363 = vmatpush1.bf16.msra.mxu0 0
        %1364 = vmatprep.subr.bf16.mxu0 0
        %1365 = vmatpush1.bf16.msra.mxu0 0
        %1366 = vmatprep.subr.bf16.mxu0 0
        %1367 = vmatpush1.bf16.msra.mxu0 0
        %1368 = vmatprep.subr.bf16.mxu0 0
        %1369 = vmatpush1.bf16.msra.mxu0 0
        %1370 = vmatprep.mubr.bf16.mxu0 0
        %1371 = vmatmul.mubr.bf16.gmra.mrb[0].mxu0 %v1296
        %v1372 = vpop.f32.mrb[0].mxu0
        %v1373 = vadd.f32 %v1207, %v1372
        %v1374 = vpop.f32.mrb[0].mxu0
        %v1375 = vadd.f32 %v1211, %v1374
        %v1376 = vpop.f32.mrb[0].mxu0
        %v1377 = vpop.f32.mrb[0].mxu0
        %1378 = vdwg.mxu0
        %v1379 = vld [vmem:[#allocation2] sm:$0xff]
        %v1380 = vld [vmem:[#allocation2 + $0x8] sm:$0xff]
        %v1381 = vld [vmem:[#allocation2 + $0x10] sm:$0xff]
        %v1382 = vld [vmem:[#allocation2 + $0x18] sm:$0xff]
        %v1383 = vld [vmem:[#allocation8] sm:$0xff]
        %v1384 = vld [vmem:[#allocation8 + $0x8] sm:$0xff]
        %v1385 = vld [vmem:[#allocation8 + $0x10] sm:$0xff]
        %v1386 = vld [vmem:[#allocation8 + $0x18] sm:$0xff]
        %v1387 = vld [vmem:[#allocation8 + $0x20] sm:$0xff]
        %v1388 = vld [vmem:[#allocation8 + $0x28] sm:$0xff]
        %v1389 = vld [vmem:[#allocation8 + $0x30] sm:$0xff]
        %v1390 = vld [vmem:[#allocation8 + $0x38] sm:$0xff]
        %v1391 = vld [vmem:[#allocation8 + $0x40] sm:$0xff]
        %v1392 = vld [vmem:[#allocation8 + $0x48] sm:$0xff]
        %v1393 = vld [vmem:[#allocation8 + $0x50] sm:$0xff]
        %v1394 = vld [vmem:[#allocation8 + $0x58] sm:$0xff]
        %v1395 = vld [vmem:[#allocation8 + $0x60] sm:$0xff]
        %v1396 = vld [vmem:[#allocation8 + $0x68] sm:$0xff]
        %v1397 = vld [vmem:[#allocation8 + $0x70] sm:$0xff]
        %v1398 = vld [vmem:[#allocation8 + $0x78] sm:$0xff]
        %v1399 = vld [vmem:[#allocation8 + $0x80] sm:$0xff]
        %v1400 = vld [vmem:[#allocation8 + $0x88] sm:$0xff]
        %v1401 = vld [vmem:[#allocation8 + $0x90] sm:$0xff]
        %v1402 = vld [vmem:[#allocation8 + $0x98] sm:$0xff]
        %v1403 = vld [vmem:[#allocation8 + $0xa0] sm:$0xff]
        %v1404 = vld [vmem:[#allocation8 + $0xa8] sm:$0xff]
        %v1405 = vld [vmem:[#allocation8 + $0xb0] sm:$0xff]
        %v1406 = vld [vmem:[#allocation8 + $0xb8] sm:$0xff]
        %v1407 = vld [vmem:[#allocation8 + $0xc0] sm:$0xff]
        %v1408 = vld [vmem:[#allocation8 + $0xc8] sm:$0xff]
        %v1409 = vld [vmem:[#allocation8 + $0xd0] sm:$0xff]
        %v1410 = vld [vmem:[#allocation8 + $0xd8] sm:$0xff]
        %v1411 = vld [vmem:[#allocation8 + $0xe0] sm:$0xff]
        %v1412 = vld [vmem:[#allocation8 + $0xe8] sm:$0xff]
        %v1413 = vld [vmem:[#allocation8 + $0xf0] sm:$0xff]
        %v1414 = vld [vmem:[#allocation8 + $0xf8] sm:$0xff]
        %v1447 = vunpack.c.l.b16 %v1383
        %v1448 = vunpack.c.h.b16 %v1383
        %v1449 = vunpack.c.l.b16 %v1384
        %v1450 = vunpack.c.h.b16 %v1384
        %v1451 = vunpack.c.l.b16 %v1385
        %v1452 = vunpack.c.h.b16 %v1385
        %v1453 = vunpack.c.l.b16 %v1386
        %v1454 = vunpack.c.h.b16 %v1386
        %v1455 = vunpack.c.l.b16 %v1387
        %v1456 = vunpack.c.h.b16 %v1387
        %v1457 = vunpack.c.l.b16 %v1388
        %v1458 = vunpack.c.h.b16 %v1388
        %v1459 = vunpack.c.l.b16 %v1389
        %v1460 = vunpack.c.h.b16 %v1389
        %v1461 = vunpack.c.l.b16 %v1390
        %v1462 = vunpack.c.h.b16 %v1390
        %v1463 = vunpack.c.l.b16 %v1391
        %v1464 = vunpack.c.h.b16 %v1391
        %v1465 = vunpack.c.l.b16 %v1392
        %v1466 = vunpack.c.h.b16 %v1392
        %v1467 = vunpack.c.l.b16 %v1393
        %v1468 = vunpack.c.h.b16 %v1393
        %v1469 = vunpack.c.l.b16 %v1394
        %v1470 = vunpack.c.h.b16 %v1394
        %v1471 = vunpack.c.l.b16 %v1395
        %v1472 = vunpack.c.h.b16 %v1395
        %v1473 = vunpack.c.l.b16 %v1396
        %v1474 = vunpack.c.h.b16 %v1396
        %v1475 = vunpack.c.l.b16 %v1397
        %v1476 = vunpack.c.h.b16 %v1397
        %v1477 = vunpack.c.l.b16 %v1398
        %v1478 = vunpack.c.h.b16 %v1398
        %v1479 = vunpack.c.l.b16 %v1399
        %v1480 = vunpack.c.h.b16 %v1399
        %v1481 = vunpack.c.l.b16 %v1400
        %v1482 = vunpack.c.h.b16 %v1400
        %v1483 = vunpack.c.l.b16 %v1401
        %v1484 = vunpack.c.h.b16 %v1401
        %v1485 = vunpack.c.l.b16 %v1402
        %v1486 = vunpack.c.h.b16 %v1402
        %v1487 = vunpack.c.l.b16 %v1403
        %v1488 = vunpack.c.h.b16 %v1403
        %v1489 = vunpack.c.l.b16 %v1404
        %v1490 = vunpack.c.h.b16 %v1404
        %v1491 = vunpack.c.l.b16 %v1405
        %v1492 = vunpack.c.h.b16 %v1405
        %v1493 = vunpack.c.l.b16 %v1406
        %v1494 = vunpack.c.h.b16 %v1406
        %v1495 = vunpack.c.l.b16 %v1407
        %v1496 = vunpack.c.h.b16 %v1407
        %v1497 = vunpack.c.l.b16 %v1408
        %v1498 = vunpack.c.h.b16 %v1408
        %v1499 = vunpack.c.l.b16 %v1409
        %v1500 = vunpack.c.h.b16 %v1409
        %v1501 = vunpack.c.l.b16 %v1410
        %v1502 = vunpack.c.h.b16 %v1410
        %v1503 = vunpack.c.l.b16 %v1411
        %v1504 = vunpack.c.h.b16 %v1411
        %v1505 = vunpack.c.l.b16 %v1412
        %v1506 = vunpack.c.h.b16 %v1412
        %v1507 = vunpack.c.l.b16 %v1413
        %v1508 = vunpack.c.h.b16 %v1413
        %v1509 = vunpack.c.l.b16 %v1414
        %v1510 = vunpack.c.h.b16 %v1414
        %v1511 = vpack.c.b16 %v1451, %v1447
        %v1512 = vpack.c.b16 %v1452, %v1448
        %v1513 = vpack.c.b16 %v1453, %v1449
        %v1514 = vpack.c.b16 %v1454, %v1450
        %v1515 = vpack.c.b16 %v1459, %v1455
        %v1516 = vpack.c.b16 %v1460, %v1456
        %v1517 = vpack.c.b16 %v1461, %v1457
        %v1518 = vpack.c.b16 %v1462, %v1458
        %v1519 = vpack.c.b16 %v1467, %v1463
        %v1520 = vpack.c.b16 %v1468, %v1464
        %v1521 = vpack.c.b16 %v1469, %v1465
        %v1522 = vpack.c.b16 %v1470, %v1466
        %v1523 = vpack.c.b16 %v1475, %v1471
        %v1524 = vpack.c.b16 %v1476, %v1472
        %v1525 = vpack.c.b16 %v1477, %v1473
        %v1526 = vpack.c.b16 %v1478, %v1474
        %v1527 = vpack.c.b16 %v1483, %v1479
        %v1528 = vpack.c.b16 %v1484, %v1480
        %v1529 = vpack.c.b16 %v1485, %v1481
        %v1530 = vpack.c.b16 %v1486, %v1482
        %v1531 = vpack.c.b16 %v1491, %v1487
        %v1532 = vpack.c.b16 %v1492, %v1488
        %v1533 = vpack.c.b16 %v1493, %v1489
        %v1534 = vpack.c.b16 %v1494, %v1490
        %v1535 = vpack.c.b16 %v1499, %v1495
        %v1536 = vpack.c.b16 %v1500, %v1496
        %v1537 = vpack.c.b16 %v1501, %v1497
        %v1538 = vpack.c.b16 %v1502, %v1498
        %v1539 = vpack.c.b16 %v1507, %v1503
        %v1540 = vpack.c.b16 %v1508, %v1504
        %v1541 = vpack.c.b16 %v1509, %v1505
        %v1542 = vpack.c.b16 %v1510, %v1506
        %1575 = vmatprep.subr.bf16.mxu0 %v1512
        %1576 = vmatpush1.bf16.msra.mxu0 %v1511
        %1577 = vmatprep.subr.bf16.mxu0 %v1516
        %1578 = vmatpush1.bf16.msra.mxu0 %v1515
        %1579 = vmatprep.subr.bf16.mxu0 %v1520
        %1580 = vmatpush1.bf16.msra.mxu0 %v1519
        %1581 = vmatprep.subr.bf16.mxu0 %v1524
        %1582 = vmatpush1.bf16.msra.mxu0 %v1523
        %1583 = vmatprep.subr.bf16.mxu0 %v1528
        %1584 = vmatpush1.bf16.msra.mxu0 %v1527
        %1585 = vmatprep.subr.bf16.mxu0 %v1532
        %1586 = vmatpush1.bf16.msra.mxu0 %v1531
        %1587 = vmatprep.subr.bf16.mxu0 %v1536
        %1588 = vmatpush1.bf16.msra.mxu0 %v1535
        %1589 = vmatprep.subr.bf16.mxu0 %v1540
        %1590 = vmatpush1.bf16.msra.mxu0 %v1539
        %1591 = vmatprep.subr.bf16.mxu0 0
        %1592 = vmatpush1.bf16.msra.mxu0 0
        %1593 = vmatprep.subr.bf16.mxu0 0
        %1594 = vmatpush1.bf16.msra.mxu0 0
        %1595 = vmatprep.subr.bf16.mxu0 0
        %1596 = vmatpush1.bf16.msra.mxu0 0
        %1597 = vmatprep.subr.bf16.mxu0 0
        %1598 = vmatpush1.bf16.msra.mxu0 0
        %1599 = vmatprep.subr.bf16.mxu0 0
        %1600 = vmatpush1.bf16.msra.mxu0 0
        %1601 = vmatprep.subr.bf16.mxu0 0
        %1602 = vmatpush1.bf16.msra.mxu0 0
        %1603 = vmatprep.subr.bf16.mxu0 0
        %1604 = vmatpush1.bf16.msra.mxu0 0
        %1605 = vmatprep.subr.bf16.mxu0 0
        %1606 = vmatpush1.bf16.msra.mxu0 0
        %1607 = vmatprep.mubr.bf16.mxu0 0
        %1608 = vmatmul.mubr.bf16.gmra.mrb[0].mxu0 0
        %v1609 = vpop.f32.mrb[0].mxu0
        %v1610 = vadd.f32 0.0, %v1609
        %v1611 = vpop.f32.mrb[0].mxu0
        %v1612 = vadd.f32 0.0, %v1611
        %v1613 = vpop.f32.mrb[0].mxu0
        %v1614 = vpop.f32.mrb[0].mxu0
        %1615 = vdwg.mxu0
        %1616 = vmatprep.subr.bf16.mxu0 %v1514
        %1617 = vmatpush1.bf16.msra.mxu0 %v1513
        %1618 = vmatprep.subr.bf16.mxu0 %v1518
        %1619 = vmatpush1.bf16.msra.mxu0 %v1517
        %1620 = vmatprep.subr.bf16.mxu0 %v1522
        %1621 = vmatpush1.bf16.msra.mxu0 %v1521
        %1622 = vmatprep.subr.bf16.mxu0 %v1526
        %1623 = vmatpush1.bf16.msra.mxu0 %v1525
        %1624 = vmatprep.subr.bf16.mxu0 %v1530
        %1625 = vmatpush1.bf16.msra.mxu0 %v1529
        %1626 = vmatprep.subr.bf16.mxu0 %v1534
        %1627 = vmatpush1.bf16.msra.mxu0 %v1533
        %1628 = vmatprep.subr.bf16.mxu0 %v1538
        %1629 = vmatpush1.bf16.msra.mxu0 %v1537
        %1630 = vmatprep.subr.bf16.mxu0 %v1542
        %1631 = vmatpush1.bf16.msra.mxu0 %v1541
        %1632 = vmatprep.subr.bf16.mxu0 0
        %1633 = vmatpush1.bf16.msra.mxu0 0
        %1634 = vmatprep.subr.bf16.mxu0 0
        %1635 = vmatpush1.bf16.msra.mxu0 0
        %1636 = vmatprep.subr.bf16.mxu0 0
        %1637 = vmatpush1.bf16.msra.mxu0 0
        %1638 = vmatprep.subr.bf16.mxu0 0
        %1639 = vmatpush1.bf16.msra.mxu0 0
        %1640 = vmatprep.subr.bf16.mxu0 0
        %1641 = vmatpush1.bf16.msra.mxu0 0
        %1642 = vmatprep.subr.bf16.mxu0 0
        %1643 = vmatpush1.bf16.msra.mxu0 0
        %1644 = vmatprep.subr.bf16.mxu0 0
        %1645 = vmatpush1.bf16.msra.mxu0 0
        %1646 = vmatprep.subr.bf16.mxu0 0
        %1647 = vmatpush1.bf16.msra.mxu0 0
        %1648 = vmatprep.mubr.bf16.mxu0 0
        %1649 = vmatmul.mubr.bf16.gmra.mrb[0].mxu0 0
        %v1650 = vpop.f32.mrb[0].mxu0
        %v1651 = vadd.f32 0.0, %v1650
        %v1652 = vpop.f32.mrb[0].mxu0
        %v1653 = vadd.f32 0.0, %v1652
        %v1654 = vpop.f32.mrb[0].mxu0
        %v1655 = vpop.f32.mrb[0].mxu0
        %1656 = vdwg.mxu0
        %v1657 = vadd.f32 %v1379, %v1610
        %v1658 = vadd.f32 %v1380, %v1612
        %v1659 = vadd.f32 %v1381, %v1651
        %v1660 = vadd.f32 %v1382, %v1653
        %v1661 = vxor.u32 %v1657, 2147483648
        %v1662 = vxor.u32 %v1658, 2147483648
        %v1663 = vxor.u32 %v1659, 2147483648
        %v1664 = vmul.f32 %v1661, 1.442695
        %v1665 = vpow.pop %v1664
        %v1666 = vmul.f32 %v1662, 1.442695
        %v1667 = vpow.pop %v1666
        %v1668 = vmul.f32 %v1663, 1.442695
        %v1669 = vpow.pop %v1668
        %v1670 = vadd.f32 %v1665, 1.0
        %v1671 = vadd.f32 %v1667, 1.0
        %v1672 = vadd.f32 %v1669, 1.0
        %v1673 = vrcp.pop %v1670
        %v1674 = vmul.f32 1.0, %v1673
        %v1675 = vrcp.pop %v1671
        %v1676 = vmul.f32 1.0, %v1675
        %v1677 = vrcp.pop %v1672
        %v1678 = vmul.f32 1.0, %v1677
        %v1679 = vtanh.pop %v1660
        %v1680 = vmul.f32 %v1676, 0.0
        %v1681 = vmul.f32 %v1674, %v1679
        %v1682 = vadd.f32 %v1680, %v1681
        %v1683 = vtanh.pop %v1682
        %v1684 = vmul.f32 %v1678, %v1683
        %v1685 = vld [vmem:[#allocation2 + $0x20] sm:$0xff]
        %v1686 = vld [vmem:[#allocation2 + $0x28] sm:$0xff]
        %v1687 = vld [vmem:[#allocation2 + $0x30] sm:$0xff]
        %v1688 = vld [vmem:[#allocation2 + $0x38] sm:$0xff]
        %v1689 = vpack.c.bf16 %v1684, %v1684
        %1690 = vmatprep.subr.bf16.mxu0 %v1512
        %1691 = vmatpush1.bf16.msra.mxu0 %v1511
        %1692 = vmatprep.subr.bf16.mxu0 %v1516
        %1693 = vmatpush1.bf16.msra.mxu0 %v1515
        %1694 = vmatprep.subr.bf16.mxu0 %v1520
        %1695 = vmatpush1.bf16.msra.mxu0 %v1519
        %1696 = vmatprep.subr.bf16.mxu0 %v1524
        %1697 = vmatpush1.bf16.msra.mxu0 %v1523
        %1698 = vmatprep.subr.bf16.mxu0 %v1528
        %1699 = vmatpush1.bf16.msra.mxu0 %v1527
        %1700 = vmatprep.subr.bf16.mxu0 %v1532
        %1701 = vmatpush1.bf16.msra.mxu0 %v1531
        %1702 = vmatprep.subr.bf16.mxu0 %v1536
        %1703 = vmatpush1.bf16.msra.mxu0 %v1535
        %1704 = vmatprep.subr.bf16.mxu0 %v1540
        %1705 = vmatpush1.bf16.msra.mxu0 %v1539
        %1706 = vmatprep.subr.bf16.mxu0 0
        %1707 = vmatpush1.bf16.msra.mxu0 0
        %1708 = vmatprep.subr.bf16.mxu0 0
        %1709 = vmatpush1.bf16.msra.mxu0 0
        %1710 = vmatprep.subr.bf16.mxu0 0
        %1711 = vmatpush1.bf16.msra.mxu0 0
        %1712 = vmatprep.subr.bf16.mxu0 0
        %1713 = vmatpush1.bf16.msra.mxu0 0
        %1714 = vmatprep.subr.bf16.mxu0 0
        %1715 = vmatpush1.bf16.msra.mxu0 0
        %1716 = vmatprep.subr.bf16.mxu0 0
        %1717 = vmatpush1.bf16.msra.mxu0 0
        %1718 = vmatprep.subr.bf16.mxu0 0
        %1719 = vmatpush1.bf16.msra.mxu0 0
        %1720 = vmatprep.subr.bf16.mxu0 0
        %1721 = vmatpush1.bf16.msra.mxu0 0
        %1722 = vmatprep.mubr.bf16.mxu0 0
        %1723 = vmatmul.mubr.bf16.gmra.mrb[0].mxu0 %v1689
        %v1724 = vpop.f32.mrb[0].mxu0
        %v1725 = vadd.f32 0.0, %v1724
        %v1726 = vpop.f32.mrb[0].mxu0
        %v1727 = vadd.f32 0.0, %v1726
        %v1728 = vpop.f32.mrb[0].mxu0
        %v1729 = vpop.f32.mrb[0].mxu0
        %1730 = vdwg.mxu0
        %1731 = vmatprep.subr.bf16.mxu0 %v1514
        %1732 = vmatpush1.bf16.msra.mxu0 %v1513
        %1733 = vmatprep.subr.bf16.mxu0 %v1518
        %1734 = vmatpush1.bf16.msra.mxu0 %v1517
        %1735 = vmatprep.subr.bf16.mxu0 %v1522
        %1736 = vmatpush1.bf16.msra.mxu0 %v1521
        %1737 = vmatprep.subr.bf16.mxu0 %v1526
        %1738 = vmatpush1.bf16.msra.mxu0 %v1525
        %1739 = vmatprep.subr.bf16.mxu0 %v1530
        %1740 = vmatpush1.bf16.msra.mxu0 %v1529
        %1741 = vmatprep.subr.bf16.mxu0 %v1534
        %1742 = vmatpush1.bf16.msra.mxu0 %v1533
        %1743 = vmatprep.subr.bf16.mxu0 %v1538
        %1744 = vmatpush1.bf16.msra.mxu0 %v1537
        %1745 = vmatprep.subr.bf16.mxu0 %v1542
        %1746 = vmatpush1.bf16.msra.mxu0 %v1541
        %1747 = vmatprep.subr.bf16.mxu0 0
        %1748 = vmatpush1.bf16.msra.mxu0 0
        %1749 = vmatprep.subr.bf16.mxu0 0
        %1750 = vmatpush1.bf16.msra.mxu0 0
        %1751 = vmatprep.subr.bf16.mxu0 0
        %1752 = vmatpush1.bf16.msra.mxu0 0
        %1753 = vmatprep.subr.bf16.mxu0 0
        %1754 = vmatpush1.bf16.msra.mxu0 0
        %1755 = vmatprep.subr.bf16.mxu0 0
        %1756 = vmatpush1.bf16.msra.mxu0 0
        %1757 = vmatprep.subr.bf16.mxu0 0
        %1758 = vmatpush1.bf16.msra.mxu0 0
        %1759 = vmatprep.subr.bf16.mxu0 0
        %1760 = vmatpush1.bf16.msra.mxu0 0
        %1761 = vmatprep.subr.bf16.mxu0 0
        %1762 = vmatpush1.bf16.msra.mxu0 0
        %1763 = vmatprep.mubr.bf16.mxu0 0
        %1764 = vmatmul.mubr.bf16.gmra.mrb[0].mxu0 %v1689
        %v1765 = vpop.f32.mrb[0].mxu0
        %v1766 = vadd.f32 0.0, %v1765
        %v1767 = vpop.f32.mrb[0].mxu0
        %v1768 = vadd.f32 0.0, %v1767
        %v1769 = vpop.f32.mrb[0].mxu0
        %v1770 = vpop.f32.mrb[0].mxu0
        %1771 = vdwg.mxu0
        %v1772 = vadd.f32 %v1685, %v1725
        %v1773 = vadd.f32 %v1686, %v1727
        %v1774 = vadd.f32 %v1687, %v1766
        %v1775 = vadd.f32 %v1688, %v1768
        %v1776 = vxor.u32 %v1772, 2147483648
        %v1777 = vxor.u32 %v1773, 2147483648
        %v1778 = vxor.u32 %v1774, 2147483648
        %v1779 = vmul.f32 %v1776, 1.442695
        %v1780 = vpow.pop %v1779
        %v1781 = vmul.f32 %v1777, 1.442695
        %v1782 = vpow.pop %v1781
        %v1783 = vmul.f32 %v1778, 1.442695
        %v1784 = vpow.pop %v1783
        %v1785 = vadd.f32 %v1780, 1.0
        %v1786 = vadd.f32 %v1782, 1.0
        %v1787 = vadd.f32 %v1784, 1.0
        %v1788 = vrcp.pop %v1785
        %v1789 = vmul.f32 1.0, %v1788
        %v1790 = vrcp.pop %v1786
        %v1791 = vmul.f32 1.0, %v1790
        %v1792 = vrcp.pop %v1787
        %v1793 = vmul.f32 1.0, %v1792
        %v1794 = vtanh.pop %v1775
        %v1795 = vmul.f32 %v1791, %v1682
        %v1796 = vmul.f32 %v1789, %v1794
        %v1797 = vadd.f32 %v1795, %v1796
        %v1798 = vtanh.pop %v1797
        %v1799 = vmul.f32 %v1793, %v1798
        %v1800 = vld [vmem:[#allocation2 + $0x40] sm:$0xff]
        %v1801 = vld [vmem:[#allocation2 + $0x48] sm:$0xff]
        %v1802 = vld [vmem:[#allocation2 + $0x50] sm:$0xff]
        %v1803 = vld [vmem:[#allocation2 + $0x58] sm:$0xff]
        %v1804 = vpack.c.bf16 %v1799, %v1799
        %1805 = vmatprep.subr.bf16.mxu0 %v1512
        %1806 = vmatpush1.bf16.msra.mxu0 %v1511
        %1807 = vmatprep.subr.bf16.mxu0 %v1516
        %1808 = vmatpush1.bf16.msra.mxu0 %v1515
        %1809 = vmatprep.subr.bf16.mxu0 %v1520
        %1810 = vmatpush1.bf16.msra.mxu0 %v1519
        %1811 = vmatprep.subr.bf16.mxu0 %v1524
        %1812 = vmatpush1.bf16.msra.mxu0 %v1523
        %1813 = vmatprep.subr.bf16.mxu0 %v1528
        %1814 = vmatpush1.bf16.msra.mxu0 %v1527
        %1815 = vmatprep.subr.bf16.mxu0 %v1532
        %1816 = vmatpush1.bf16.msra.mxu0 %v1531
        %1817 = vmatprep.subr.bf16.mxu0 %v1536
        %1818 = vmatpush1.bf16.msra.mxu0 %v1535
        %1819 = vmatprep.subr.bf16.mxu0 %v1540
        %1820 = vmatpush1.bf16.msra.mxu0 %v1539
        %1821 = vmatprep.subr.bf16.mxu0 0
        %1822 = vmatpush1.bf16.msra.mxu0 0
        %1823 = vmatprep.subr.bf16.mxu0 0
        %1824 = vmatpush1.bf16.msra.mxu0 0
        %1825 = vmatprep.subr.bf16.mxu0 0
        %1826 = vmatpush1.bf16.msra.mxu0 0
        %1827 = vmatprep.subr.bf16.mxu0 0
        %1828 = vmatpush1.bf16.msra.mxu0 0
        %1829 = vmatprep.subr.bf16.mxu0 0
        %1830 = vmatpush1.bf16.msra.mxu0 0
        %1831 = vmatprep.subr.bf16.mxu0 0
        %1832 = vmatpush1.bf16.msra.mxu0 0
        %1833 = vmatprep.subr.bf16.mxu0 0
        %1834 = vmatpush1.bf16.msra.mxu0 0
        %1835 = vmatprep.subr.bf16.mxu0 0
        %1836 = vmatpush1.bf16.msra.mxu0 0
        %1837 = vmatprep.mubr.bf16.mxu0 0
        %1838 = vmatmul.mubr.bf16.gmra.mrb[0].mxu0 %v1804
        %v1839 = vpop.f32.mrb[0].mxu0
        %v1840 = vadd.f32 0.0, %v1839
        %v1841 = vpop.f32.mrb[0].mxu0
        %v1842 = vadd.f32 0.0, %v1841
        %v1843 = vpop.f32.mrb[0].mxu0
        %v1844 = vpop.f32.mrb[0].mxu0
        %1845 = vdwg.mxu0
        %1846 = vmatprep.subr.bf16.mxu0 %v1514
        %1847 = vmatpush1.bf16.msra.mxu0 %v1513
        %1848 = vmatprep.subr.bf16.mxu0 %v1518
        %1849 = vmatpush1.bf16.msra.mxu0 %v1517
        %1850 = vmatprep.subr.bf16.mxu0 %v1522
        %1851 = vmatpush1.bf16.msra.mxu0 %v1521
        %1852 = vmatprep.subr.bf16.mxu0 %v1526
        %1853 = vmatpush1.bf16.msra.mxu0 %v1525
        %1854 = vmatprep.subr.bf16.mxu0 %v1530
        %1855 = vmatpush1.bf16.msra.mxu0 %v1529
        %1856 = vmatprep.subr.bf16.mxu0 %v1534
        %1857 = vmatpush1.bf16.msra.mxu0 %v1533
        %1858 = vmatprep.subr.bf16.mxu0 %v1538
        %1859 = vmatpush1.bf16.msra.mxu0 %v1537
        %1860 = vmatprep.subr.bf16.mxu0 %v1542
        %1861 = vmatpush1.bf16.msra.mxu0 %v1541
        %1862 = vmatprep.subr.bf16.mxu0 0
        %1863 = vmatpush1.bf16.msra.mxu0 0
        %1864 = vmatprep.subr.bf16.mxu0 0
        %1865 = vmatpush1.bf16.msra.mxu0 0
        %1866 = vmatprep.subr.bf16.mxu0 0
        %1867 = vmatpush1.bf16.msra.mxu0 0
        %1868 = vmatprep.subr.bf16.mxu0 0
        %1869 = vmatpush1.bf16.msra.mxu0 0
        %1870 = vmatprep.subr.bf16.mxu0 0
        %1871 = vmatpush1.bf16.msra.mxu0 0
        %1872 = vmatprep.subr.bf16.mxu0 0
        %1873 = vmatpush1.bf16.msra.mxu0 0
        %1874 = vmatprep.subr.bf16.mxu0 0
        %1875 = vmatpush1.bf16.msra.mxu0 0
        %1876 = vmatprep.subr.bf16.mxu0 0
        %1877 = vmatpush1.bf16.msra.mxu0 0
        %1878 = vmatprep.mubr.bf16.mxu0 0
        %1879 = vmatmul.mubr.bf16.gmra.mrb[0].mxu0 %v1804
        %v1880 = vpop.f32.mrb[0].mxu0
        %v1881 = vadd.f32 0.0, %v1880
        %v1882 = vpop.f32.mrb[0].mxu0
        %v1883 = vadd.f32 0.0, %v1882
        %v1884 = vpop.f32.mrb[0].mxu0
        %v1885 = vpop.f32.mrb[0].mxu0
        %1886 = vdwg.mxu0
        %v1887 = vadd.f32 %v1800, %v1840
        %v1888 = vadd.f32 %v1801, %v1842
        %v1889 = vadd.f32 %v1802, %v1881
        %v1890 = vadd.f32 %v1803, %v1883
        %v1891 = vxor.u32 %v1887, 2147483648
        %v1892 = vxor.u32 %v1888, 2147483648
        %v1893 = vxor.u32 %v1889, 2147483648
        %v1894 = vmul.f32 %v1891, 1.442695
        %v1895 = vpow.pop %v1894
        %v1896 = vmul.f32 %v1892, 1.442695
        %v1897 = vpow.pop %v1896
        %v1898 = vmul.f32 %v1893, 1.442695
        %v1899 = vpow.pop %v1898
        %v1900 = vadd.f32 %v1895, 1.0
        %v1901 = vadd.f32 %v1897, 1.0
        %v1902 = vadd.f32 %v1899, 1.0
        %v1903 = vrcp.pop %v1900
        %v1904 = vmul.f32 1.0, %v1903
        %v1905 = vrcp.pop %v1901
        %v1906 = vmul.f32 1.0, %v1905
        %v1907 = vrcp.pop %v1902
        %v1908 = vmul.f32 1.0, %v1907
        %v1909 = vtanh.pop %v1890
        %v1910 = vmul.f32 %v1906, %v1797
        %v1911 = vmul.f32 %v1904, %v1909
        %v1912 = vadd.f32 %v1910, %v1911
        %v1913 = vtanh.pop %v1912
        %v1914 = vmul.f32 %v1908, %v1913
        %v1915 = vld [vmem:[#allocation2 + $0x60] sm:$0xff]
        %v1916 = vld [vmem:[#allocation2 + $0x68] sm:$0xff]
        %v1917 = vld [vmem:[#allocation2 + $0x70] sm:$0xff]
        %v1918 = vld [vmem:[#allocation2 + $0x78] sm:$0xff]
        %v1919 = vpack.c.bf16 %v1914, %v1914
        %1920 = vmatprep.subr.bf16.mxu0 %v1512
        %1921 = vmatpush1.bf16.msra.mxu0 %v1511
        %1922 = vmatprep.subr.bf16.mxu0 %v1516
        %1923 = vmatpush1.bf16.msra.mxu0 %v1515
        %1924 = vmatprep.subr.bf16.mxu0 %v1520
        %1925 = vmatpush1.bf16.msra.mxu0 %v1519
        %1926 = vmatprep.subr.bf16.mxu0 %v1524
        %1927 = vmatpush1.bf16.msra.mxu0 %v1523
        %1928 = vmatprep.subr.bf16.mxu0 %v1528
        %1929 = vmatpush1.bf16.msra.mxu0 %v1527
        %1930 = vmatprep.subr.bf16.mxu0 %v1532
        %1931 = vmatpush1.bf16.msra.mxu0 %v1531
        %1932 = vmatprep.subr.bf16.mxu0 %v1536
        %1933 = vmatpush1.bf16.msra.mxu0 %v1535
        %1934 = vmatprep.subr.bf16.mxu0 %v1540
        %1935 = vmatpush1.bf16.msra.mxu0 %v1539
        %1936 = vmatprep.subr.bf16.mxu0 0
        %1937 = vmatpush1.bf16.msra.mxu0 0
        %1938 = vmatprep.subr.bf16.mxu0 0
        %1939 = vmatpush1.bf16.msra.mxu0 0
        %1940 = vmatprep.subr.bf16.mxu0 0
        %1941 = vmatpush1.bf16.msra.mxu0 0
        %1942 = vmatprep.subr.bf16.mxu0 0
        %1943 = vmatpush1.bf16.msra.mxu0 0
        %1944 = vmatprep.subr.bf16.mxu0 0
        %1945 = vmatpush1.bf16.msra.mxu0 0
        %1946 = vmatprep.subr.bf16.mxu0 0
        %1947 = vmatpush1.bf16.msra.mxu0 0
        %1948 = vmatprep.subr.bf16.mxu0 0
        %1949 = vmatpush1.bf16.msra.mxu0 0
        %1950 = vmatprep.subr.bf16.mxu0 0
        %1951 = vmatpush1.bf16.msra.mxu0 0
        %1952 = vmatprep.mubr.bf16.mxu0 0
        %1953 = vmatmul.mubr.bf16.gmra.mrb[0].mxu0 %v1919
        %v1954 = vpop.f32.mrb[0].mxu0
        %v1955 = vadd.f32 0.0, %v1954
        %v1956 = vpop.f32.mrb[0].mxu0
        %v1957 = vadd.f32 0.0, %v1956
        %v1958 = vpop.f32.mrb[0].mxu0
        %v1959 = vpop.f32.mrb[0].mxu0
        %1960 = vdwg.mxu0
        %1961 = vmatprep.subr.bf16.mxu0 %v1514
        %1962 = vmatpush1.bf16.msra.mxu0 %v1513
        %1963 = vmatprep.subr.bf16.mxu0 %v1518
        %1964 = vmatpush1.bf16.msra.mxu0 %v1517
        %1965 = vmatprep.subr.bf16.mxu0 %v1522
        %1966 = vmatpush1.bf16.msra.mxu0 %v1521
        %1967 = vmatprep.subr.bf16.mxu0 %v1526
        %1968 = vmatpush1.bf16.msra.mxu0 %v1525
        %1969 = vmatprep.subr.bf16.mxu0 %v1530
        %1970 = vmatpush1.bf16.msra.mxu0 %v1529
        %1971 = vmatprep.subr.bf16.mxu0 %v1534
        %1972 = vmatpush1.bf16.msra.mxu0 %v1533
        %1973 = vmatprep.subr.bf16.mxu0 %v1538
        %1974 = vmatpush1.bf16.msra.mxu0 %v1537
        %1975 = vmatprep.subr.bf16.mxu0 %v1542
        %1976 = vmatpush1.bf16.msra.mxu0 %v1541
        %1977 = vmatprep.subr.bf16.mxu0 0
        %1978 = vmatpush1.bf16.msra.mxu0 0
        %1979 = vmatprep.subr.bf16.mxu0 0
        %1980 = vmatpush1.bf16.msra.mxu0 0
        %1981 = vmatprep.subr.bf16.mxu0 0
        %1982 = vmatpush1.bf16.msra.mxu0 0
        %1983 = vmatprep.subr.bf16.mxu0 0
        %1984 = vmatpush1.bf16.msra.mxu0 0
        %1985 = vmatprep.subr.bf16.mxu0 0
        %1986 = vmatpush1.bf16.msra.mxu0 0
        %1987 = vmatprep.subr.bf16.mxu0 0
        %1988 = vmatpush1.bf16.msra.mxu0 0
        %1989 = vmatprep.subr.bf16.mxu0 0
        %1990 = vmatpush1.bf16.msra.mxu0 0
        %1991 = vmatprep.subr.bf16.mxu0 0
        %1992 = vmatpush1.bf16.msra.mxu0 0
        %1993 = vmatprep.mubr.bf16.mxu0 0
        %1994 = vmatmul.mubr.bf16.gmra.mrb[0].mxu0 %v1919
        %v1995 = vpop.f32.mrb[0].mxu0
        %v1996 = vadd.f32 0.0, %v1995
        %v1997 = vpop.f32.mrb[0].mxu0
        %v1998 = vadd.f32 0.0, %v1997
        %v1999 = vpop.f32.mrb[0].mxu0
        %v2000 = vpop.f32.mrb[0].mxu0
        %2001 = vdwg.mxu0
        %v2002 = vadd.f32 %v1915, %v1955
        %v2003 = vadd.f32 %v1916, %v1957
        %v2004 = vadd.f32 %v1917, %v1996
        %v2005 = vadd.f32 %v1918, %v1998
        %v2006 = vxor.u32 %v2002, 2147483648
        %v2007 = vxor.u32 %v2003, 2147483648
        %v2008 = vxor.u32 %v2004, 2147483648
        %v2009 = vmul.f32 %v2006, 1.442695
        %v2010 = vpow.pop %v2009
        %v2011 = vmul.f32 %v2007, 1.442695
        %v2012 = vpow.pop %v2011
        %v2013 = vmul.f32 %v2008, 1.442695
        %v2014 = vpow.pop %v2013
        %v2015 = vadd.f32 %v2010, 1.0
        %v2016 = vadd.f32 %v2012, 1.0
        %v2017 = vadd.f32 %v2014, 1.0
        %v2018 = vrcp.pop %v2015
        %v2019 = vmul.f32 1.0, %v2018
        %v2020 = vrcp.pop %v2016
        %v2021 = vmul.f32 1.0, %v2020
        %v2022 = vrcp.pop %v2017
        %v2023 = vmul.f32 1.0, %v2022
        %v2024 = vtanh.pop %v2005
        %v2025 = vmul.f32 %v2021, %v1912
        %v2026 = vmul.f32 %v2019, %v2024
        %v2027 = vadd.f32 %v2025, %v2026
        %v2028 = vtanh.pop %v2027
        %v2029 = vmul.f32 %v2023, %v2028
        %v2030 = vld [vmem:[#allocation2 + $0x80] sm:$0xff]
        %v2031 = vld [vmem:[#allocation2 + $0x88] sm:$0xff]
        %v2032 = vld [vmem:[#allocation2 + $0x90] sm:$0xff]
        %v2033 = vld [vmem:[#allocation2 + $0x98] sm:$0xff]
        %v2034 = vpack.c.bf16 %v2029, %v2029
        %2035 = vmatprep.subr.bf16.mxu0 %v1512
        %2036 = vmatpush1.bf16.msra.mxu0 %v1511
        %2037 = vmatprep.subr.bf16.mxu0 %v1516
        %2038 = vmatpush1.bf16.msra.mxu0 %v1515
        %2039 = vmatprep.subr.bf16.mxu0 %v1520
        %2040 = vmatpush1.bf16.msra.mxu0 %v1519
        %2041 = vmatprep.subr.bf16.mxu0 %v1524
        %2042 = vmatpush1.bf16.msra.mxu0 %v1523
        %2043 = vmatprep.subr.bf16.mxu0 %v1528
        %2044 = vmatpush1.bf16.msra.mxu0 %v1527
        %2045 = vmatprep.subr.bf16.mxu0 %v1532
        %2046 = vmatpush1.bf16.msra.mxu0 %v1531
        %2047 = vmatprep.subr.bf16.mxu0 %v1536
        %2048 = vmatpush1.bf16.msra.mxu0 %v1535
        %2049 = vmatprep.subr.bf16.mxu0 %v1540
        %2050 = vmatpush1.bf16.msra.mxu0 %v1539
        %2051 = vmatprep.subr.bf16.mxu0 0
        %2052 = vmatpush1.bf16.msra.mxu0 0
        %2053 = vmatprep.subr.bf16.mxu0 0
        %2054 = vmatpush1.bf16.msra.mxu0 0
        %2055 = vmatprep.subr.bf16.mxu0 0
        %2056 = vmatpush1.bf16.msra.mxu0 0
        %2057 = vmatprep.subr.bf16.mxu0 0
        %2058 = vmatpush1.bf16.msra.mxu0 0
        %2059 = vmatprep.subr.bf16.mxu0 0
        %2060 = vmatpush1.bf16.msra.mxu0 0
        %2061 = vmatprep.subr.bf16.mxu0 0
        %2062 = vmatpush1.bf16.msra.mxu0 0
        %2063 = vmatprep.subr.bf16.mxu0 0
        %2064 = vmatpush1.bf16.msra.mxu0 0
        %2065 = vmatprep.subr.bf16.mxu0 0
        %2066 = vmatpush1.bf16.msra.mxu0 0
        %2067 = vmatprep.mubr.bf16.mxu0 0
        %2068 = vmatmul.mubr.bf16.gmra.mrb[0].mxu0 %v2034
        %v2069 = vpop.f32.mrb[0].mxu0
        %v2070 = vadd.f32 0.0, %v2069
        %v2071 = vpop.f32.mrb[0].mxu0
        %v2072 = vadd.f32 0.0, %v2071
        %v2073 = vpop.f32.mrb[0].mxu0
        %v2074 = vpop.f32.mrb[0].mxu0
        %2075 = vdwg.mxu0
        %2076 = vmatprep.subr.bf16.mxu0 %v1514
        %2077 = vmatpush1.bf16.msra.mxu0 %v1513
        %2078 = vmatprep.subr.bf16.mxu0 %v1518
        %2079 = vmatpush1.bf16.msra.mxu0 %v1517
        %2080 = vmatprep.subr.bf16.mxu0 %v1522
        %2081 = vmatpush1.bf16.msra.mxu0 %v1521
        %2082 = vmatprep.subr.bf16.mxu0 %v1526
        %2083 = vmatpush1.bf16.msra.mxu0 %v1525
        %2084 = vmatprep.subr.bf16.mxu0 %v1530
        %2085 = vmatpush1.bf16.msra.mxu0 %v1529
        %2086 = vmatprep.subr.bf16.mxu0 %v1534
        %2087 = vmatpush1.bf16.msra.mxu0 %v1533
        %2088 = vmatprep.subr.bf16.mxu0 %v1538
        %2089 = vmatpush1.bf16.msra.mxu0 %v1537
        %2090 = vmatprep.subr.bf16.mxu0 %v1542
        %2091 = vmatpush1.bf16.msra.mxu0 %v1541
        %2092 = vmatprep.subr.bf16.mxu0 0
        %2093 = vmatpush1.bf16.msra.mxu0 0
        %2094 = vmatprep.subr.bf16.mxu0 0
        %2095 = vmatpush1.bf16.msra.mxu0 0
        %2096 = vmatprep.subr.bf16.mxu0 0
        %2097 = vmatpush1.bf16.msra.mxu0 0
        %2098 = vmatprep.subr.bf16.mxu0 0
        %2099 = vmatpush1.bf16.msra.mxu0 0
        %2100 = vmatprep.subr.bf16.mxu0 0
        %2101 = vmatpush1.bf16.msra.mxu0 0
        %2102 = vmatprep.subr.bf16.mxu0 0
        %2103 = vmatpush1.bf16.msra.mxu0 0
        %2104 = vmatprep.subr.bf16.mxu0 0
        %2105 = vmatpush1.bf16.msra.mxu0 0
        %2106 = vmatprep.subr.bf16.mxu0 0
        %2107 = vmatpush1.bf16.msra.mxu0 0
        %2108 = vmatprep.mubr.bf16.mxu0 0
        %2109 = vmatmul.mubr.bf16.gmra.mrb[0].mxu0 %v2034
        %v2110 = vpop.f32.mrb[0].mxu0
        %v2111 = vadd.f32 0.0, %v2110
        %v2112 = vpop.f32.mrb[0].mxu0
        %v2113 = vadd.f32 0.0, %v2112
        %v2114 = vpop.f32.mrb[0].mxu0
        %v2115 = vpop.f32.mrb[0].mxu0
        %2116 = vdwg.mxu0
        %v2117 = vadd.f32 %v2030, %v2070
        %v2118 = vadd.f32 %v2031, %v2072
        %v2119 = vadd.f32 %v2032, %v2111
        %v2120 = vadd.f32 %v2033, %v2113
        %v2121 = vxor.u32 %v2117, 2147483648
        %v2122 = vxor.u32 %v2118, 2147483648
        %v2123 = vxor.u32 %v2119, 2147483648
        %v2124 = vmul.f32 %v2121, 1.442695
        %v2125 = vpow.pop %v2124
        %v2126 = vmul.f32 %v2122, 1.442695
        %v2127 = vpow.pop %v2126
        %v2128 = vmul.f32 %v2123, 1.442695
        %v2129 = vpow.pop %v2128
        %v2130 = vadd.f32 %v2125, 1.0
        %v2131 = vadd.f32 %v2127, 1.0
        %v2132 = vadd.f32 %v2129, 1.0
        %v2133 = vrcp.pop %v2130
        %v2134 = vmul.f32 1.0, %v2133
        %v2135 = vrcp.pop %v2131
        %v2136 = vmul.f32 1.0, %v2135
        %v2137 = vrcp.pop %v2132
        %v2138 = vmul.f32 1.0, %v2137
        %v2139 = vtanh.pop %v2120
        %v2140 = vmul.f32 %v2136, %v2027
        %v2141 = vmul.f32 %v2134, %v2139
        %v2142 = vadd.f32 %v2140, %v2141
        %v2143 = vtanh.pop %v2142
        %v2144 = vmul.f32 %v2138, %v2143
        %v2145 = vld [vmem:[#allocation2 + $0xa0] sm:$0xff]
        %v2146 = vld [vmem:[#allocation2 + $0xa8] sm:$0xff]
        %v2147 = vld [vmem:[#allocation2 + $0xb0] sm:$0xff]
        %v2148 = vld [vmem:[#allocation2 + $0xb8] sm:$0xff]
        %v2149 = vpack.c.bf16 %v2144, %v2144
        %2150 = vmatprep.subr.bf16.mxu0 %v1512
        %2151 = vmatpush1.bf16.msra.mxu0 %v1511
        %2152 = vmatprep.subr.bf16.mxu0 %v1516
        %2153 = vmatpush1.bf16.msra.mxu0 %v1515
        %2154 = vmatprep.subr.bf16.mxu0 %v1520
        %2155 = vmatpush1.bf16.msra.mxu0 %v1519
        %2156 = vmatprep.subr.bf16.mxu0 %v1524
        %2157 = vmatpush1.bf16.msra.mxu0 %v1523
        %2158 = vmatprep.subr.bf16.mxu0 %v1528
        %2159 = vmatpush1.bf16.msra.mxu0 %v1527
        %2160 = vmatprep.subr.bf16.mxu0 %v1532
        %2161 = vmatpush1.bf16.msra.mxu0 %v1531
        %2162 = vmatprep.subr.bf16.mxu0 %v1536
        %2163 = vmatpush1.bf16.msra.mxu0 %v1535
        %2164 = vmatprep.subr.bf16.mxu0 %v1540
        %2165 = vmatpush1.bf16.msra.mxu0 %v1539
        %2166 = vmatprep.subr.bf16.mxu0 0
        %2167 = vmatpush1.bf16.msra.mxu0 0
        %2168 = vmatprep.subr.bf16.mxu0 0
        %2169 = vmatpush1.bf16.msra.mxu0 0
        %2170 = vmatprep.subr.bf16.mxu0 0
        %2171 = vmatpush1.bf16.msra.mxu0 0
        %2172 = vmatprep.subr.bf16.mxu0 0
        %2173 = vmatpush1.bf16.msra.mxu0 0
        %2174 = vmatprep.subr.bf16.mxu0 0
        %2175 = vmatpush1.bf16.msra.mxu0 0
        %2176 = vmatprep.subr.bf16.mxu0 0
        %2177 = vmatpush1.bf16.msra.mxu0 0
        %2178 = vmatprep.subr.bf16.mxu0 0
        %2179 = vmatpush1.bf16.msra.mxu0 0
        %2180 = vmatprep.subr.bf16.mxu0 0
        %2181 = vmatpush1.bf16.msra.mxu0 0
        %2182 = vmatprep.mubr.bf16.mxu0 0
        %2183 = vmatmul.mubr.bf16.gmra.mrb[0].mxu0 %v2149
        %v2184 = vpop.f32.mrb[0].mxu0
        %v2185 = vadd.f32 0.0, %v2184
        %v2186 = vpop.f32.mrb[0].mxu0
        %v2187 = vadd.f32 0.0, %v2186
        %v2188 = vpop.f32.mrb[0].mxu0
        %v2189 = vpop.f32.mrb[0].mxu0
        %2190 = vdwg.mxu0
        %2191 = vmatprep.subr.bf16.mxu0 %v1514
        %2192 = vmatpush1.bf16.msra.mxu0 %v1513
        %2193 = vmatprep.subr.bf16.mxu0 %v1518
        %2194 = vmatpush1.bf16.msra.mxu0 %v1517
        %2195 = vmatprep.subr.bf16.mxu0 %v1522
        %2196 = vmatpush1.bf16.msra.mxu0 %v1521
        %2197 = vmatprep.subr.bf16.mxu0 %v1526
        %2198 = vmatpush1.bf16.msra.mxu0 %v1525
        %2199 = vmatprep.subr.bf16.mxu0 %v1530
        %2200 = vmatpush1.bf16.msra.mxu0 %v1529
        %2201 = vmatprep.subr.bf16.mxu0 %v1534
        %2202 = vmatpush1.bf16.msra.mxu0 %v1533
        %2203 = vmatprep.subr.bf16.mxu0 %v1538
        %2204 = vmatpush1.bf16.msra.mxu0 %v1537
        %2205 = vmatprep.subr.bf16.mxu0 %v1542
        %2206 = vmatpush1.bf16.msra.mxu0 %v1541
        %2207 = vmatprep.subr.bf16.mxu0 0
        %2208 = vmatpush1.bf16.msra.mxu0 0
        %2209 = vmatprep.subr.bf16.mxu0 0
        %2210 = vmatpush1.bf16.msra.mxu0 0
        %2211 = vmatprep.subr.bf16.mxu0 0
        %2212 = vmatpush1.bf16.msra.mxu0 0
        %2213 = vmatprep.subr.bf16.mxu0 0
        %2214 = vmatpush1.bf16.msra.mxu0 0
        %2215 = vmatprep.subr.bf16.mxu0 0
        %2216 = vmatpush1.bf16.msra.mxu0 0
        %2217 = vmatprep.subr.bf16.mxu0 0
        %2218 = vmatpush1.bf16.msra.mxu0 0
        %2219 = vmatprep.subr.bf16.mxu0 0
        %2220 = vmatpush1.bf16.msra.mxu0 0
        %2221 = vmatprep.subr.bf16.mxu0 0
        %2222 = vmatpush1.bf16.msra.mxu0 0
        %2223 = vmatprep.mubr.bf16.mxu0 0
        %2224 = vmatmul.mubr.bf16.gmra.mrb[0].mxu0 %v2149
        %v2225 = vpop.f32.mrb[0].mxu0
        %v2226 = vadd.f32 0.0, %v2225
        %v2227 = vpop.f32.mrb[0].mxu0
        %v2228 = vadd.f32 0.0, %v2227
        %v2229 = vpop.f32.mrb[0].mxu0
        %v2230 = vpop.f32.mrb[0].mxu0
        %2231 = vdwg.mxu0
        %v2232 = vadd.f32 %v2145, %v2185
        %v2233 = vadd.f32 %v2146, %v2187
        %v2234 = vadd.f32 %v2147, %v2226
        %v2235 = vadd.f32 %v2148, %v2228
        %v2236 = vxor.u32 %v2232, 2147483648
        %v2237 = vxor.u32 %v2233, 2147483648
        %v2238 = vxor.u32 %v2234, 2147483648
        %v2239 = vmul.f32 %v2236, 1.442695
        %v2240 = vpow.pop %v2239
        %v2241 = vmul.f32 %v2237, 1.442695
        %v2242 = vpow.pop %v2241
        %v2243 = vmul.f32 %v2238, 1.442695
        %v2244 = vpow.pop %v2243
        %v2245 = vadd.f32 %v2240, 1.0
        %v2246 = vadd.f32 %v2242, 1.0
        %v2247 = vadd.f32 %v2244, 1.0
        %v2248 = vrcp.pop %v2245
        %v2249 = vmul.f32 1.0, %v2248
        %v2250 = vrcp.pop %v2246
        %v2251 = vmul.f32 1.0, %v2250
        %v2252 = vrcp.pop %v2247
        %v2253 = vmul.f32 1.0, %v2252
        %v2254 = vtanh.pop %v2235
        %v2255 = vmul.f32 %v2251, %v2142
        %v2256 = vmul.f32 %v2249, %v2254
        %v2257 = vadd.f32 %v2255, %v2256
        %v2258 = vtanh.pop %v2257
        %v2259 = vmul.f32 %v2253, %v2258
        %v2260 = vld [vmem:[#allocation2 + $0xc0] sm:$0xff]
        %v2261 = vld [vmem:[#allocation2 + $0xc8] sm:$0xff]
        %v2262 = vld [vmem:[#allocation2 + $0xd0] sm:$0xff]
        %v2263 = vld [vmem:[#allocation2 + $0xd8] sm:$0xff]
        %v2264 = vpack.c.bf16 %v2259, %v2259
        %2265 = vmatprep.subr.bf16.mxu0 %v1512
        %2266 = vmatpush1.bf16.msra.mxu0 %v1511
        %2267 = vmatprep.subr.bf16.mxu0 %v1516
        %2268 = vmatpush1.bf16.msra.mxu0 %v1515
        %2269 = vmatprep.subr.bf16.mxu0 %v1520
        %2270 = vmatpush1.bf16.msra.mxu0 %v1519
        %2271 = vmatprep.subr.bf16.mxu0 %v1524
        %2272 = vmatpush1.bf16.msra.mxu0 %v1523
        %2273 = vmatprep.subr.bf16.mxu0 %v1528
        %2274 = vmatpush1.bf16.msra.mxu0 %v1527
        %2275 = vmatprep.subr.bf16.mxu0 %v1532
        %2276 = vmatpush1.bf16.msra.mxu0 %v1531
        %2277 = vmatprep.subr.bf16.mxu0 %v1536
        %2278 = vmatpush1.bf16.msra.mxu0 %v1535
        %2279 = vmatprep.subr.bf16.mxu0 %v1540
        %2280 = vmatpush1.bf16.msra.mxu0 %v1539
        %2281 = vmatprep.subr.bf16.mxu0 0
        %2282 = vmatpush1.bf16.msra.mxu0 0
        %2283 = vmatprep.subr.bf16.mxu0 0
        %2284 = vmatpush1.bf16.msra.mxu0 0
        %2285 = vmatprep.subr.bf16.mxu0 0
        %2286 = vmatpush1.bf16.msra.mxu0 0
        %2287 = vmatprep.subr.bf16.mxu0 0
        %2288 = vmatpush1.bf16.msra.mxu0 0
        %2289 = vmatprep.subr.bf16.mxu0 0
        %2290 = vmatpush1.bf16.msra.mxu0 0
        %2291 = vmatprep.subr.bf16.mxu0 0
        %2292 = vmatpush1.bf16.msra.mxu0 0
        %2293 = vmatprep.subr.bf16.mxu0 0
        %2294 = vmatpush1.bf16.msra.mxu0 0
        %2295 = vmatprep.subr.bf16.mxu0 0
        %2296 = vmatpush1.bf16.msra.mxu0 0
        %2297 = vmatprep.mubr.bf16.mxu0 0
        %2298 = vmatmul.mubr.bf16.gmra.mrb[0].mxu0 %v2264
        %v2299 = vpop.f32.mrb[0].mxu0
        %v2300 = vadd.f32 0.0, %v2299
        %v2301 = vpop.f32.mrb[0].mxu0
        %v2302 = vadd.f32 0.0, %v2301
        %v2303 = vpop.f32.mrb[0].mxu0
        %v2304 = vpop.f32.mrb[0].mxu0
        %2305 = vdwg.mxu0
        %2306 = vmatprep.subr.bf16.mxu0 %v1514
        %2307 = vmatpush1.bf16.msra.mxu0 %v1513
        %2308 = vmatprep.subr.bf16.mxu0 %v1518
        %2309 = vmatpush1.bf16.msra.mxu0 %v1517
        %2310 = vmatprep.subr.bf16.mxu0 %v1522
        %2311 = vmatpush1.bf16.msra.mxu0 %v1521
        %2312 = vmatprep.subr.bf16.mxu0 %v1526
        %2313 = vmatpush1.bf16.msra.mxu0 %v1525
        %2314 = vmatprep.subr.bf16.mxu0 %v1530
        %2315 = vmatpush1.bf16.msra.mxu0 %v1529
        %2316 = vmatprep.subr.bf16.mxu0 %v1534
        %2317 = vmatpush1.bf16.msra.mxu0 %v1533
        %2318 = vmatprep.subr.bf16.mxu0 %v1538
        %2319 = vmatpush1.bf16.msra.mxu0 %v1537
        %2320 = vmatprep.subr.bf16.mxu0 %v1542
        %2321 = vmatpush1.bf16.msra.mxu0 %v1541
        %2322 = vmatprep.subr.bf16.mxu0 0
        %2323 = vmatpush1.bf16.msra.mxu0 0
        %2324 = vmatprep.subr.bf16.mxu0 0
        %2325 = vmatpush1.bf16.msra.mxu0 0
        %2326 = vmatprep.subr.bf16.mxu0 0
        %2327 = vmatpush1.bf16.msra.mxu0 0
        %2328 = vmatprep.subr.bf16.mxu0 0
        %2329 = vmatpush1.bf16.msra.mxu0 0
        %2330 = vmatprep.subr.bf16.mxu0 0
        %2331 = vmatpush1.bf16.msra.mxu0 0
        %2332 = vmatprep.subr.bf16.mxu0 0
        %2333 = vmatpush1.bf16.msra.mxu0 0
        %2334 = vmatprep.subr.bf16.mxu0 0
        %2335 = vmatpush1.bf16.msra.mxu0 0
        %2336 = vmatprep.subr.bf16.mxu0 0
        %2337 = vmatpush1.bf16.msra.mxu0 0
        %2338 = vmatprep.mubr.bf16.mxu0 0
        %2339 = vmatmul.mubr.bf16.gmra.mrb[0].mxu0 %v2264
        %v2340 = vpop.f32.mrb[0].mxu0
        %v2341 = vadd.f32 0.0, %v2340
        %v2342 = vpop.f32.mrb[0].mxu0
        %v2343 = vadd.f32 0.0, %v2342
        %v2344 = vpop.f32.mrb[0].mxu0
        %v2345 = vpop.f32.mrb[0].mxu0
        %2346 = vdwg.mxu0
        %v2347 = vadd.f32 %v2260, %v2300
        %v2348 = vadd.f32 %v2261, %v2302
        %v2349 = vadd.f32 %v2262, %v2341
        %v2350 = vadd.f32 %v2263, %v2343
        %v2351 = vxor.u32 %v2347, 2147483648
        %v2352 = vxor.u32 %v2348, 2147483648
        %v2353 = vxor.u32 %v2349, 2147483648
        %v2354 = vmul.f32 %v2351, 1.442695
        %v2355 = vpow.pop %v2354
        %v2356 = vmul.f32 %v2352, 1.442695
        %v2357 = vpow.pop %v2356
        %v2358 = vmul.f32 %v2353, 1.442695
        %v2359 = vpow.pop %v2358
        %v2360 = vadd.f32 %v2355, 1.0
        %v2361 = vadd.f32 %v2357, 1.0
        %v2362 = vadd.f32 %v2359, 1.0
        %v2363 = vrcp.pop %v2360
        %v2364 = vmul.f32 1.0, %v2363
        %v2365 = vrcp.pop %v2361
        %v2366 = vmul.f32 1.0, %v2365
        %v2367 = vrcp.pop %v2362
        %v2368 = vmul.f32 1.0, %v2367
        %v2369 = vtanh.pop %v2350
        %v2370 = vmul.f32 %v2366, %v2257
        %v2371 = vmul.f32 %v2364, %v2369
        %v2372 = vadd.f32 %v2370, %v2371
        %v2373 = vtanh.pop %v2372
        %v2374 = vmul.f32 %v2368, %v2373
        %v2375 = vld [vmem:[#allocation2 + $0xe0] sm:$0xff]
        %v2376 = vld [vmem:[#allocation2 + $0xe8] sm:$0xff]
        %v2377 = vld [vmem:[#allocation2 + $0xf0] sm:$0xff]
        %v2378 = vld [vmem:[#allocation2 + $0xf8] sm:$0xff]
        %v2379 = vpack.c.bf16 %v2374, %v2374
        %2380 = vmatprep.subr.bf16.mxu0 %v1512
        %2381 = vmatpush1.bf16.msra.mxu0 %v1511
        %2382 = vmatprep.subr.bf16.mxu0 %v1516
        %2383 = vmatpush1.bf16.msra.mxu0 %v1515
        %2384 = vmatprep.subr.bf16.mxu0 %v1520
        %2385 = vmatpush1.bf16.msra.mxu0 %v1519
        %2386 = vmatprep.subr.bf16.mxu0 %v1524
        %2387 = vmatpush1.bf16.msra.mxu0 %v1523
        %2388 = vmatprep.subr.bf16.mxu0 %v1528
        %2389 = vmatpush1.bf16.msra.mxu0 %v1527
        %2390 = vmatprep.subr.bf16.mxu0 %v1532
        %2391 = vmatpush1.bf16.msra.mxu0 %v1531
        %2392 = vmatprep.subr.bf16.mxu0 %v1536
        %2393 = vmatpush1.bf16.msra.mxu0 %v1535
        %2394 = vmatprep.subr.bf16.mxu0 %v1540
        %2395 = vmatpush1.bf16.msra.mxu0 %v1539
        %2396 = vmatprep.subr.bf16.mxu0 0
        %2397 = vmatpush1.bf16.msra.mxu0 0
        %2398 = vmatprep.subr.bf16.mxu0 0
        %2399 = vmatpush1.bf16.msra.mxu0 0
        %2400 = vmatprep.subr.bf16.mxu0 0
        %2401 = vmatpush1.bf16.msra.mxu0 0
        %2402 = vmatprep.subr.bf16.mxu0 0
        %2403 = vmatpush1.bf16.msra.mxu0 0
        %2404 = vmatprep.subr.bf16.mxu0 0
        %2405 = vmatpush1.bf16.msra.mxu0 0
        %2406 = vmatprep.subr.bf16.mxu0 0
        %2407 = vmatpush1.bf16.msra.mxu0 0
        %2408 = vmatprep.subr.bf16.mxu0 0
        %2409 = vmatpush1.bf16.msra.mxu0 0
        %2410 = vmatprep.subr.bf16.mxu0 0
        %2411 = vmatpush1.bf16.msra.mxu0 0
        %2412 = vmatprep.mubr.bf16.mxu0 0
        %2413 = vmatmul.mubr.bf16.gmra.mrb[0].mxu0 %v2379
        %v2414 = vpop.f32.mrb[0].mxu0
        %v2415 = vadd.f32 0.0, %v2414
        %v2416 = vpop.f32.mrb[0].mxu0
        %v2417 = vadd.f32 0.0, %v2416
        %v2418 = vpop.f32.mrb[0].mxu0
        %v2419 = vpop.f32.mrb[0].mxu0
        %2420 = vdwg.mxu0
        %2421 = vmatprep.subr.bf16.mxu0 %v1514
        %2422 = vmatpush1.bf16.msra.mxu0 %v1513
        %2423 = vmatprep.subr.bf16.mxu0 %v1518
        %2424 = vmatpush1.bf16.msra.mxu0 %v1517
        %2425 = vmatprep.subr.bf16.mxu0 %v1522
        %2426 = vmatpush1.bf16.msra.mxu0 %v1521
        %2427 = vmatprep.subr.bf16.mxu0 %v1526
        %2428 = vmatpush1.bf16.msra.mxu0 %v1525
        %2429 = vmatprep.subr.bf16.mxu0 %v1530
        %2430 = vmatpush1.bf16.msra.mxu0 %v1529
        %2431 = vmatprep.subr.bf16.mxu0 %v1534
        %2432 = vmatpush1.bf16.msra.mxu0 %v1533
        %2433 = vmatprep.subr.bf16.mxu0 %v1538
        %2434 = vmatpush1.bf16.msra.mxu0 %v1537
        %2435 = vmatprep.subr.bf16.mxu0 %v1542
        %2436 = vmatpush1.bf16.msra.mxu0 %v1541
        %2437 = vmatprep.subr.bf16.mxu0 0
        %2438 = vmatpush1.bf16.msra.mxu0 0
        %2439 = vmatprep.subr.bf16.mxu0 0
        %2440 = vmatpush1.bf16.msra.mxu0 0
        %2441 = vmatprep.subr.bf16.mxu0 0
        %2442 = vmatpush1.bf16.msra.mxu0 0
        %2443 = vmatprep.subr.bf16.mxu0 0
        %2444 = vmatpush1.bf16.msra.mxu0 0
        %2445 = vmatprep.subr.bf16.mxu0 0
        %2446 = vmatpush1.bf16.msra.mxu0 0
        %2447 = vmatprep.subr.bf16.mxu0 0
        %2448 = vmatpush1.bf16.msra.mxu0 0
        %2449 = vmatprep.subr.bf16.mxu0 0
        %2450 = vmatpush1.bf16.msra.mxu0 0
        %2451 = vmatprep.subr.bf16.mxu0 0
        %2452 = vmatpush1.bf16.msra.mxu0 0
        %2453 = vmatprep.mubr.bf16.mxu0 0
        %2454 = vmatmul.mubr.bf16.gmra.mrb[0].mxu0 %v2379
        %v2455 = vpop.f32.mrb[0].mxu0
        %v2456 = vadd.f32 0.0, %v2455
        %v2457 = vpop.f32.mrb[0].mxu0
        %v2458 = vadd.f32 0.0, %v2457
        %v2459 = vpop.f32.mrb[0].mxu0
        %v2460 = vpop.f32.mrb[0].mxu0
        %2461 = vdwg.mxu0
        %v2462 = vadd.f32 %v2375, %v2415
        %v2463 = vadd.f32 %v2376, %v2417
        %v2464 = vadd.f32 %v2377, %v2456
        %v2465 = vadd.f32 %v2378, %v2458
        %v2466 = vxor.u32 %v2462, 2147483648
        %v2467 = vxor.u32 %v2463, 2147483648
        %v2468 = vxor.u32 %v2464, 2147483648
        %v2469 = vmul.f32 %v2466, 1.442695
        %v2470 = vpow.pop %v2469
        %v2471 = vmul.f32 %v2467, 1.442695
        %v2472 = vpow.pop %v2471
        %v2473 = vmul.f32 %v2468, 1.442695
        %v2474 = vpow.pop %v2473
        %v2475 = vadd.f32 %v2470, 1.0
        %v2476 = vadd.f32 %v2472, 1.0
        %v2477 = vadd.f32 %v2474, 1.0
        %v2478 = vrcp.pop %v2475
        %v2479 = vmul.f32 1.0, %v2478
        %v2480 = vrcp.pop %v2476
        %v2481 = vmul.f32 1.0, %v2480
        %v2482 = vrcp.pop %v2477
        %v2483 = vmul.f32 1.0, %v2482
        %v2484 = vtanh.pop %v2465
        %v2485 = vmul.f32 %v2481, %v2372
        %v2486 = vmul.f32 %v2479, %v2484
        %v2487 = vadd.f32 %v2485, %v2486
        %v2488 = vtanh.pop %v2487
        %v2489 = vmul.f32 %v2483, %v2488
        %v2490 = vxor.u32 %v1333, 2147483648
        %v2491 = vxor.u32 %v1373, 2147483648
        %v2492 = vmul.f32 %v2490, 1.442695
        %v2493 = vpow.pop %v2492
        %v2494 = vmul.f32 %v2491, 1.442695
        %v2495 = vpow.pop %v2494
        %v2496 = vadd.f32 %v2493, 1.0
        %v2497 = vadd.f32 %v2495, 1.0
        %v2498 = vrcp.pop %v2496
        %v2499 = vmul.f32 1.0, %v2498
        %v2500 = vrcp.pop %v2497
        %v2501 = vmul.f32 1.0, %v2500
        %v2502 = vtanh.pop %v1375
        %v2503 = vmul.f32 %v2499, %v2502
        %v2504 = vtanh.pop %v2503
        %v2505 = vmul.f32 %v2501, %v2504
        %v2506 = vpack.c.bf16 %v2489, %v2489
        %v2507 = vpack.c.bf16 %v2505, %v2505
        %v2508 = vld [vmem:[#allocation9] sm:$0xf]
        %v2509 = vld [vmem:[#allocation9 + $0x4] sm:$0xf]
        %v2510 = vld [vmem:[#allocation9 + $0x8] sm:$0xf]
        %v2511 = vld [vmem:[#allocation9 + $0xc] sm:$0xf]
        %v2512 = vld [vmem:[#allocation9 + $0x10] sm:$0xf]
        %v2513 = vld [vmem:[#allocation9 + $0x14] sm:$0xf]
        %v2514 = vld [vmem:[#allocation9 + $0x18] sm:$0xf]
        %v2515 = vld [vmem:[#allocation9 + $0x1c] sm:$0xf]
        %v2516 = vld [vmem:[#allocation9 + $0x20] sm:$0xf]
        %v2517 = vld [vmem:[#allocation9 + $0x24] sm:$0xf]
        %v2518 = vld [vmem:[#allocation9 + $0x28] sm:$0xf]
        %v2519 = vld [vmem:[#allocation9 + $0x2c] sm:$0xf]
        %v2520 = vld [vmem:[#allocation9 + $0x30] sm:$0xf]
        %v2521 = vld [vmem:[#allocation9 + $0x34] sm:$0xf]
        %v2522 = vld [vmem:[#allocation9 + $0x38] sm:$0xf]
        %v2523 = vld [vmem:[#allocation9 + $0x3c] sm:$0xf]
        %v2524 = vld [vmem:[#allocation9 + $0x40] sm:$0xf]
        %v2525 = vld [vmem:[#allocation9 + $0x44] sm:$0xf]
        %v2526 = vld [vmem:[#allocation9 + $0x48] sm:$0xf]
        %v2527 = vld [vmem:[#allocation9 + $0x4c] sm:$0xf]
        %v2528 = vld [vmem:[#allocation9 + $0x50] sm:$0xf]
        %v2529 = vld [vmem:[#allocation9 + $0x54] sm:$0xf]
        %v2530 = vld [vmem:[#allocation9 + $0x58] sm:$0xf]
        %v2531 = vld [vmem:[#allocation9 + $0x5c] sm:$0xf]
        %v2532 = vld [vmem:[#allocation9 + $0x60] sm:$0xf]
        %v2533 = vld [vmem:[#allocation9 + $0x64] sm:$0xf]
        %v2534 = vld [vmem:[#allocation9 + $0x68] sm:$0xf]
        %v2535 = vld [vmem:[#allocation9 + $0x6c] sm:$0xf]
        %v2536 = vld [vmem:[#allocation9 + $0x70] sm:$0xf]
        %v2537 = vld [vmem:[#allocation9 + $0x74] sm:$0xf]
        %v2538 = vld [vmem:[#allocation9 + $0x78] sm:$0xf]
        %v2539 = vld [vmem:[#allocation9 + $0x7c] sm:$0xf]
        %v2540 = vld [vmem:[%s9] sm:$0x1]
        %v2542 = vlaneseq
        %v2543 = vshrl.u32 %v2542, 7
        %v2544 = vsub.s32 0, %v2543
        %v2545 = vrot.slane %v2540, %v2544
        %v2579 = vunpack.c.l.b16 %v2508
        %v2580 = vunpack.c.l.b16 %v2509
        %v2581 = vunpack.c.l.b16 %v2510
        %v2582 = vunpack.c.l.b16 %v2511
        %v2583 = vunpack.c.l.b16 %v2512
        %v2584 = vunpack.c.l.b16 %v2513
        %v2585 = vunpack.c.l.b16 %v2514
        %v2586 = vunpack.c.l.b16 %v2515
        %v2587 = vunpack.c.l.b16 %v2516
        %v2588 = vunpack.c.l.b16 %v2517
        %v2589 = vunpack.c.l.b16 %v2518
        %v2590 = vunpack.c.l.b16 %v2519
        %v2591 = vunpack.c.l.b16 %v2520
        %v2592 = vunpack.c.l.b16 %v2521
        %v2593 = vunpack.c.l.b16 %v2522
        %v2594 = vunpack.c.l.b16 %v2523
        %v2595 = vunpack.c.l.b16 %v2524
        %v2596 = vunpack.c.l.b16 %v2525
        %v2597 = vunpack.c.l.b16 %v2526
        %v2598 = vunpack.c.l.b16 %v2527
        %v2599 = vunpack.c.l.b16 %v2528
        %v2600 = vunpack.c.l.b16 %v2529
        %v2601 = vunpack.c.l.b16 %v2530
        %v2602 = vunpack.c.l.b16 %v2531
        %v2603 = vunpack.c.l.b16 %v2532
        %v2604 = vunpack.c.l.b16 %v2533
        %v2605 = vunpack.c.l.b16 %v2534
        %v2606 = vunpack.c.l.b16 %v2535
        %v2607 = vunpack.c.l.b16 %v2536
        %v2608 = vunpack.c.l.b16 %v2537
        %v2609 = vunpack.c.l.b16 %v2538
        %v2610 = vunpack.c.l.b16 %v2539
        %v2611 = vpack.c.b16 %v2580, %v2579
        %v2612 = vpack.c.b16 %v2582, %v2581
        %v2613 = vpack.c.b16 %v2584, %v2583
        %v2614 = vpack.c.b16 %v2586, %v2585
        %v2615 = vpack.c.b16 %v2588, %v2587
        %v2616 = vpack.c.b16 %v2590, %v2589
        %v2617 = vpack.c.b16 %v2592, %v2591
        %v2618 = vpack.c.b16 %v2594, %v2593
        %v2619 = vpack.c.b16 %v2596, %v2595
        %v2620 = vpack.c.b16 %v2598, %v2597
        %v2621 = vpack.c.b16 %v2600, %v2599
        %v2622 = vpack.c.b16 %v2602, %v2601
        %v2623 = vpack.c.b16 %v2604, %v2603
        %v2624 = vpack.c.b16 %v2606, %v2605
        %v2625 = vpack.c.b16 %v2608, %v2607
        %v2626 = vpack.c.b16 %v2610, %v2609
        %2643 = vmatprep.subr.bf16.mxu0 0
        %2644 = vmatpush1.bf16.msra.mxu0 %v2611
        %2645 = vmatprep.subr.bf16.mxu0 0
        %2646 = vmatpush1.bf16.msra.mxu0 %v2612
        %2647 = vmatprep.subr.bf16.mxu0 0
        %2648 = vmatpush1.bf16.msra.mxu0 %v2613
        %2649 = vmatprep.subr.bf16.mxu0 0
        %2650 = vmatpush1.bf16.msra.mxu0 %v2614
        %2651 = vmatprep.subr.bf16.mxu0 0
        %2652 = vmatpush1.bf16.msra.mxu0 %v2615
        %2653 = vmatprep.subr.bf16.mxu0 0
        %2654 = vmatpush1.bf16.msra.mxu0 %v2616
        %2655 = vmatprep.subr.bf16.mxu0 0
        %2656 = vmatpush1.bf16.msra.mxu0 %v2617
        %2657 = vmatprep.subr.bf16.mxu0 0
        %2658 = vmatpush1.bf16.msra.mxu0 %v2618
        %2659 = vmatprep.subr.bf16.mxu0 0
        %2660 = vmatpush1.bf16.msra.mxu0 %v2619
        %2661 = vmatprep.subr.bf16.mxu0 0
        %2662 = vmatpush1.bf16.msra.mxu0 %v2620
        %2663 = vmatprep.subr.bf16.mxu0 0
        %2664 = vmatpush1.bf16.msra.mxu0 %v2621
        %2665 = vmatprep.subr.bf16.mxu0 0
        %2666 = vmatpush1.bf16.msra.mxu0 %v2622
        %2667 = vmatprep.subr.bf16.mxu0 0
        %2668 = vmatpush1.bf16.msra.mxu0 %v2623
        %2669 = vmatprep.subr.bf16.mxu0 0
        %2670 = vmatpush1.bf16.msra.mxu0 %v2624
        %2671 = vmatprep.subr.bf16.mxu0 0
        %2672 = vmatpush1.bf16.msra.mxu0 %v2625
        %2673 = vmatprep.subr.bf16.mxu0 0
        %2674 = vmatpush1.bf16.msra.mxu0 %v2626
        %2675 = vmatprep.mubr.bf16.mxu0 %v2507
        %2676 = vmatmul.mubr.bf16.gmra.mrb[0].mxu0 %v2506
        %v2677 = vpop.f32.mrb[0].mxu0
        %v2678 = vadd.f32 %v2545, %v2677
        %v2679 = vpop.f32.mrb[0].mxu0
        %v2680 = vpop.f32.mrb[0].mxu0
        %v2681 = vpop.f32.mrb[0].mxu0
        %2682 = vdwg.mxu0
        %2683 = vst [vmem:[%s411] sm:$0xff] %v2678
        %s2684 = sand.u32 %s250, 1
        %s2685 = scalar_lea.sflag [#allocation5], %s2684
        %s2686 = sand.u32 %s250, 1
        %s2687 = smul.addr %s2686, 8
        %s2688 = scalar_lea.vmem [#allocation11], %s2687
        // Predicated region
        $region77: #{tpu_custom_call.1} parent=59 // pred_check
          %p2689 = pneg %p260
        $region78: #{tpu_custom_call.1} parent=59 // pred_check_branch
          %2691 = sbr.rel (%p2689) target = $region80
        $region79: #{tpu_custom_call.1} parent=59 // pred_region
          %s2693 = ssub.s32 128, 128
          %2694 = vsyncadd %s2685, %s2693
          %s2695 = smul.addr %s27, 128
          %s2696 = scalar_lea.hbm %s10, %s2695
          %s2698 = sshll.u32 %s2688, 4
          %s2699 = int_to_ptr.vmem [resolvable:$true] %s2698
          %2701 = dma.vmem_to_hbm [thread:$0]  %s2699, 128, %s2696, %s2685
        $region80: #{tpu_custom_call.1} parent=59 // pred_fallthru
          _
      $region60: #{tpu_custom_call.1} parent=5 // pred_fallthru
        _
      %p2702 = scmp.le.s32.totalorder 2, %s22
      // Predicated region
      $region81: #{tpu_custom_call.1} parent=5 // pred_check
        %p2703 = pneg %p2702
      $region82: #{tpu_custom_call.1} parent=5 // pred_check_branch
        %2705 = sbr.rel (%p2703) target = $region84
      $region83: #{tpu_custom_call.1} parent=5 // pred_region
        %s2706 = ssub.s32 %s22, 2
        // Predicated region
        $region85: #{tpu_custom_call.1} parent=83 // pred_check
          %p2707 = pneg %p266
        $region86: #{tpu_custom_call.1} parent=83 // pred_check_branch
          %2709 = sbr.rel (%p2707) target = $region88
        $region87: #{tpu_custom_call.1} parent=83 // pred_region
          %s2710 = sand.u32 %s251, 1
          %s2711 = scalar_lea.sflag [#allocation5], %s2710
          %s2712 = sand.u32 %s251, 1
          %s2713 = smul.addr %s2712, 8
          %s2714 = scalar_lea.vmem [#allocation11], %s2713
          %2715 = dma.done %s2711, 128
        $region88: #{tpu_custom_call.1} parent=83 // pred_fallthru
          _
      $region84: #{tpu_custom_call.1} parent=5 // pred_fallthru
        _
    $region6: #{tpu_custom_call.1} parent=1 // loop_footer
      %s26 = sadd.s32 1, %s22
    $region7: #{tpu_custom_call.1} parent=1 // loop_footer_branch
      %21 = sbr.rel target = $region3
    $region8: #{tpu_custom_call.1} parent=1 // loop_exit
      _
    %2716 = vsyncpa [#allocation4], 1
    %s2717 = scalar_lea.sflag [#allocation4], 1
    %2718 = vsyncpa %s2717, 1
    %2719 = vsyncpa [#allocation7], 1
    %2720 = vsyncpa [#allocation10], 1
    %2721 = vsyncpa [#allocation5], 1
    %s2722 = scalar_lea.sflag [#allocation5], 1
    %2723 = vsyncpa %s2722, 1

</llo_original>
